<compile_context>
chip_gen: v7x
topology: tpu7x:2x2x1
jax: 0.10.0
libtpu: 0.0.40
codegen_flags: <defaults>
</compile_context>

<pallas_src>
from functools import partial

import jax
import jax.numpy as jnp
from jax.experimental import pallas as pl
from jax.experimental.pallas import tpu as pltpu


_SMALL_K = 8  # contractions this small run as VPU broadcast-FMAs, not MXU


def _activation(name):
    """Mirror of the PyTorch _get_activation helper."""
    if name == "tanh":
        return jnp.tanh
    if name == "sigmoid":
        return jax.nn.sigmoid
    if name == "relu":
        return lambda x: jnp.maximum(x, 0.0)
    if name == "swish":
        return lambda x: x * jax.nn.sigmoid(x)
    raise ValueError(f"Unknown activation function: {name}")


def _affine(w, b, h):
    """W @ h + b with W:(out,k), b:(out,1), h:(k,n) -> (out,n), full f32."""
    k = h.shape[0]
    if k <= _SMALL_K:
        # K is tiny (e.g. input_dim=3): do K broadcast multiply-adds on the
        # VPU and keep the MXU idle rather than padding the contraction to
        # the 128/256 systolic dimension.
        acc = b + w[:, 0:1] * h[0:1, :]
        for kk in range(1, k):
            acc = acc + w[:, kk:kk + 1] * h[kk:kk + 1, :]
        return acc
    # K = hidden_dim: MXU contraction; HIGHEST keeps f32 accuracy (matches
    # the PyTorch f32 semantics) at negligible cost since the MXU is
    # otherwise idle in this EUP/VPU-bound kernel.
    return jnp.dot(w, h, preferred_element_type=jnp.float32,
                   precision=jax.lax.Precision.HIGHEST) + b


def mdnn_kernel(num_layers, act_name, x_ref, *refs):
    """Whole MDNN forward for one batch tile (batch on lanes).

    refs = [wu, bu, wv, bv, (w_i, b_i) * num_layers, wo, bo, out_ref]
    """
    act = _activation(act_name)
    out_ref = refs[-1]
    wu = refs[0][...]
    bu = refs[1][...]
    wv = refs[2][...]
    bv = refs[3][...]

    x = x_ref[...]                        # (input_dim, block_n), f32

    # Gating branches.
    u = act(_affine(wu, bu, x))           # (hidden, block_n)
    v = act(_affine(wv, bv, x))
    d = u - v                             # hoisted: h*u + (1-h)*v == v + h*d

    h = x
    for i in range(num_layers):
        w = refs[4 + 2 * i][...]
        b = refs[5 + 2 * i][...]
        h = act(_affine(w, b, h))
        h = v + h * d

    wo = refs[4 + 2 * num_layers][...]    # (out_dim, hidden)
    bo = refs[5 + 2 * num_layers][...]    # (out_dim, 1)
    y = _affine(wo, bo, h)                # (out_dim, block_n)
    out_ref[...] = y.astype(out_ref.dtype)


def _round_up(a, b):
    return int(pl.cdiv(a, b)) * b


def mdnn_forward(x, params, *, num_layers, activation="tanh", block_n=2048):
    """Pallas wrapper.  x: (N, input_dim) -> (N, out_dim)."""
    N, D = x.shape
    hidden = params["wu"].shape[0]
    out_dim = params["wo"].shape[0]

    # Large lane-dense batch tiles (multiple of 128 lanes per tile).
    block_n = _round_up(min(block_n, _round_up(N, 128)), 128)
    n_pad = _round_up(N, block_n)

    # Batch on the lane axis; zero-pad to a whole number of tiles.
    xt = jnp.zeros((D, n_pad), x.dtype).at[:, :N].set(x.T)

    flat = [params["wu"], params["bu"], params["wv"], params["bv"]]
    for i in range(num_layers):
        flat += [params[f"w{i}"], params[f"b{i}"]]
    flat += [params["wo"], params["bo"]]

    def full_spec(a):
        # Whole (tiny) parameter array as one block with a constant index_map:
        # stays resident in VMEM, no re-DMA per grid step.
        return pl.BlockSpec(a.shape, lambda i, _nd=a.ndim: (0,) * _nd)

    # Advisory cost hint for the XLA scheduler around the custom call.
    mm_flops = 2 * N * (2 * hidden * D                      # u, v layers
                        + hidden * D                        # hidden layer 0
                        + max(num_layers - 1, 0) * hidden * hidden
                        + out_dim * hidden)
    gate_flops = 3 * N * hidden * num_layers
    transc = (N * hidden * (2 + num_layers)
              if activation in ("tanh", "sigmoid", "swish") else 0)
    param_bytes = sum(int(a.size) * a.dtype.itemsize for a in flat)
    cost = pl.CostEstimate(
        flops=int(mm_flops + gate_flops),
        transcendentals=int(transc),
        bytes_accessed=int(4 * N * (D + out_dim) + param_bytes),
    )

    grid = (n_pad // block_n,)
    out_t = pl.pallas_call(
        partial(mdnn_kernel, num_layers, activation),
        out_shape=jax.ShapeDtypeStruct((out_dim, n_pad), x.dtype),
        grid=grid,
        in_specs=[pl.BlockSpec((D, block_n), lambda i: (0, i))]
        + [full_spec(a) for a in flat],
        out_specs=pl.BlockSpec((out_dim, block_n), lambda i: (0, i)),
        compiler_params=pltpu.CompilerParams(
            dimension_semantics=("parallel",)),
        cost_estimate=cost,
    )(xt, *flat)

    return out_t[:, :N].T


def init_mdnn_params(key, *, input_dim, hidden_dim, out_dim, num_layers):
    """PyTorch nn.Linear default init (uniform +-1/sqrt(fan_in)), torch layout.

    Weights are (out_features, in_features); biases are (out_features, 1).
    """
    params = {}

    def linear(key, fan_in, fan_out):
        kw, kb = jax.random.split(key)
        bound = 1.0 / float(fan_in) ** 0.5
        w = jax.random.uniform(kw, (fan_out, fan_in), jnp.float32, -bound, bound)
        b = jax.random.uniform(kb, (fan_out, 1), jnp.float32, -bound, bound)
        return w, b

    keys = jax.random.split(key, 3 + num_layers)
    params["wu"], params["bu"] = linear(keys[0], input_dim, hidden_dim)
    params["wv"], params["bv"] = linear(keys[1], input_dim, hidden_dim)
    for i in range(num_layers):
        fan_in = input_dim if i == 0 else hidden_dim
        params[f"w{i}"], params[f"b{i}"] = linear(keys[2 + i], fan_in, hidden_dim)
    params["wo"], params["bo"] = linear(keys[2 + num_layers], hidden_dim, out_dim)
    return params


def mdnn_reference(x, params, *, num_layers, activation="tanh"):
    """Pure-JAX reference of the PyTorch MDNN.forward (full f32 precision)."""
    act = _activation(activation)
    hp = jax.lax.Precision.HIGHEST
    u = act(jnp.dot(x, params["wu"].T, precision=hp) + params["bu"].T)
    v = act(jnp.dot(x, params["wv"].T, precision=hp) + params["bv"].T)
    h = x
    for i in range(num_layers):
        h = act(jnp.dot(h, params[f"w{i}"].T, precision=hp) + params[f"b{i}"].T)
        h = h * u + (1.0 - h) * v
    return jnp.dot(h, params["wo"].T, precision=hp) + params["bo"].T


if __name__ == "__main__":
    # Small shapes consistent with the module defaults (PINN point batch).
    N, INPUT_DIM, HIDDEN_DIM, OUT_DIM, NUM_LAYERS = 1000, 3, 20, 1, 2
    ACTIVATION = "tanh"

    key = jax.random.PRNGKey(0)
    kx, kp = jax.random.split(key)
    x = jax.random.normal(kx, (N, INPUT_DIM), dtype=jnp.float32)
    params = init_mdnn_params(
        kp,
        input_dim=INPUT_DIM,
        hidden_dim=HIDDEN_DIM,
        out_dim=OUT_DIM,
        num_layers=NUM_LAYERS,
    )

    out = mdnn_forward(x, params, num_layers=NUM_LAYERS, activation=ACTIVATION)
    out = jax.block_until_ready(out)

    ref = mdnn_reference(x, params, num_layers=NUM_LAYERS, activation=ACTIVATION)
    assert out.shape == (N, OUT_DIM)
    assert jnp.allclose(out, ref, atol=1e-5, rtol=1e-5), (out, ref)

    print("KERNEL_OK")
</pallas_src>

<mosaic_0001>
module attributes {stable_mosaic.version = 11 : i64} {
  func.func @mdnn_kernel(%arg0: i32, %arg1: memref<3x1024xf32, #tpu.memory_space<vmem>>, %arg2: memref<20x3xf32, #tpu.memory_space<vmem>>, %arg3: memref<20x1xf32, #tpu.memory_space<vmem>>, %arg4: memref<20x3xf32, #tpu.memory_space<vmem>>, %arg5: memref<20x1xf32, #tpu.memory_space<vmem>>, %arg6: memref<20x3xf32, #tpu.memory_space<vmem>>, %arg7: memref<20x1xf32, #tpu.memory_space<vmem>>, %arg8: memref<20x20xf32, #tpu.memory_space<vmem>>, %arg9: memref<20x1xf32, #tpu.memory_space<vmem>>, %arg10: memref<1x20xf32, #tpu.memory_space<vmem>>, %arg11: memref<1x1xf32, #tpu.memory_space<vmem>>, %arg12: memref<1x1024xf32, #tpu.memory_space<vmem>>) attributes {dimension_semantics = [#tpu.dimension_semantics<parallel>], iteration_bounds = array<i64: 1>, scalar_prefetch = 0 : i64, scratch_operands = 0 : i64, tpu.core_type = #tpu.core_type<tc>, window_params = [{transform_indices = @transform_0, window_bounds = array<i64: 3, 1024>}, {pipeline_mode = #tpu.pipeline_mode<synchronous>, transform_indices = @transform_1, window_bounds = array<i64: 20, 3>}, {pipeline_mode = #tpu.pipeline_mode<synchronous>, transform_indices = @transform_2, window_bounds = array<i64: 20, 1>}, {pipeline_mode = #tpu.pipeline_mode<synchronous>, transform_indices = @transform_3, window_bounds = array<i64: 20, 3>}, {pipeline_mode = #tpu.pipeline_mode<synchronous>, transform_indices = @transform_4, window_bounds = array<i64: 20, 1>}, {pipeline_mode = #tpu.pipeline_mode<synchronous>, transform_indices = @transform_5, window_bounds = array<i64: 20, 3>}, {pipeline_mode = #tpu.pipeline_mode<synchronous>, transform_indices = @transform_6, window_bounds = array<i64: 20, 1>}, {pipeline_mode = #tpu.pipeline_mode<synchronous>, transform_indices = @transform_7, window_bounds = array<i64: 20, 20>}, {pipeline_mode = #tpu.pipeline_mode<synchronous>, transform_indices = @transform_8, window_bounds = array<i64: 20, 1>}, {pipeline_mode = #tpu.pipeline_mode<synchronous>, transform_indices = @transform_9, window_bounds = array<i64: 1, 20>}, {pipeline_mode = #tpu.pipeline_mode<synchronous>, transform_indices = @transform_10, window_bounds = array<i64: 1, 1>}, {transform_indices = @transform_11, window_bounds = array<i64: 1, 1024>}]} {
    %c0 = arith.constant 0 : index
    %c0_0 = arith.constant 0 : index
    %0 = vector.load %arg2[%c0, %c0_0] : memref<20x3xf32, #tpu.memory_space<vmem>>, vector<20x3xf32>
    %c0_1 = arith.constant 0 : index
    %c0_2 = arith.constant 0 : index
    %1 = vector.load %arg3[%c0_1, %c0_2] : memref<20x1xf32, #tpu.memory_space<vmem>>, vector<20x1xf32>
    %c0_3 = arith.constant 0 : index
    %c0_4 = arith.constant 0 : index
    %2 = vector.load %arg4[%c0_3, %c0_4] : memref<20x3xf32, #tpu.memory_space<vmem>>, vector<20x3xf32>
    %c0_5 = arith.constant 0 : index
    %c0_6 = arith.constant 0 : index
    %3 = vector.load %arg5[%c0_5, %c0_6] : memref<20x1xf32, #tpu.memory_space<vmem>>, vector<20x1xf32>
    %c0_7 = arith.constant 0 : index
    %c0_8 = arith.constant 0 : index
    %4 = vector.load %arg1[%c0_7, %c0_8] : memref<3x1024xf32, #tpu.memory_space<vmem>>, vector<3x1024xf32>
    %5 = vector.extract_strided_slice %0 {offsets = [0, 0], sizes = [20, 1], strides = [1, 1]} : vector<20x3xf32> to vector<20x1xf32>
    %6 = vector.extract_strided_slice %4 {offsets = [0, 0], sizes = [1, 1024], strides = [1, 1]} : vector<3x1024xf32> to vector<1x1024xf32>
    %7 = vector.broadcast %5 : vector<20x1xf32> to vector<20x1024xf32>
    %8 = vector.broadcast %6 : vector<1x1024xf32> to vector<20x1024xf32>
    %9 = arith.mulf %7, %8 : vector<20x1024xf32>
    %10 = vector.broadcast %1 : vector<20x1xf32> to vector<20x1024xf32>
    %11 = arith.addf %10, %9 : vector<20x1024xf32>
    %12 = vector.extract_strided_slice %0 {offsets = [0, 1], sizes = [20, 1], strides = [1, 1]} : vector<20x3xf32> to vector<20x1xf32>
    %13 = vector.extract_strided_slice %4 {offsets = [1, 0], sizes = [1, 1024], strides = [1, 1]} : vector<3x1024xf32> to vector<1x1024xf32>
    %14 = vector.broadcast %12 : vector<20x1xf32> to vector<20x1024xf32>
    %15 = vector.broadcast %13 : vector<1x1024xf32> to vector<20x1024xf32>
    %16 = arith.mulf %14, %15 : vector<20x1024xf32>
    %17 = arith.addf %11, %16 : vector<20x1024xf32>
    %18 = vector.extract_strided_slice %0 {offsets = [0, 2], sizes = [20, 1], strides = [1, 1]} : vector<20x3xf32> to vector<20x1xf32>
    %19 = vector.extract_strided_slice %4 {offsets = [2, 0], sizes = [1, 1024], strides = [1, 1]} : vector<3x1024xf32> to vector<1x1024xf32>
    %20 = vector.broadcast %18 : vector<20x1xf32> to vector<20x1024xf32>
    %21 = vector.broadcast %19 : vector<1x1024xf32> to vector<20x1024xf32>
    %22 = arith.mulf %20, %21 : vector<20x1024xf32>
    %23 = arith.addf %17, %22 : vector<20x1024xf32>
    %24 = math.tanh %23 : vector<20x1024xf32>
    %25 = vector.extract_strided_slice %2 {offsets = [0, 0], sizes = [20, 1], strides = [1, 1]} : vector<20x3xf32> to vector<20x1xf32>
    %26 = vector.extract_strided_slice %4 {offsets = [0, 0], sizes = [1, 1024], strides = [1, 1]} : vector<3x1024xf32> to vector<1x1024xf32>
    %27 = vector.broadcast %25 : vector<20x1xf32> to vector<20x1024xf32>
    %28 = vector.broadcast %26 : vector<1x1024xf32> to vector<20x1024xf32>
    %29 = arith.mulf %27, %28 : vector<20x1024xf32>
    %30 = vector.broadcast %3 : vector<20x1xf32> to vector<20x1024xf32>
    %31 = arith.addf %30, %29 : vector<20x1024xf32>
    %32 = vector.extract_strided_slice %2 {offsets = [0, 1], sizes = [20, 1], strides = [1, 1]} : vector<20x3xf32> to vector<20x1xf32>
    %33 = vector.extract_strided_slice %4 {offsets = [1, 0], sizes = [1, 1024], strides = [1, 1]} : vector<3x1024xf32> to vector<1x1024xf32>
    %34 = vector.broadcast %32 : vector<20x1xf32> to vector<20x1024xf32>
    %35 = vector.broadcast %33 : vector<1x1024xf32> to vector<20x1024xf32>
    %36 = arith.mulf %34, %35 : vector<20x1024xf32>
    %37 = arith.addf %31, %36 : vector<20x1024xf32>
    %38 = vector.extract_strided_slice %2 {offsets = [0, 2], sizes = [20, 1], strides = [1, 1]} : vector<20x3xf32> to vector<20x1xf32>
    %39 = vector.extract_strided_slice %4 {offsets = [2, 0], sizes = [1, 1024], strides = [1, 1]} : vector<3x1024xf32> to vector<1x1024xf32>
    %40 = vector.broadcast %38 : vector<20x1xf32> to vector<20x1024xf32>
    %41 = vector.broadcast %39 : vector<1x1024xf32> to vector<20x1024xf32>
    %42 = arith.mulf %40, %41 : vector<20x1024xf32>
    %43 = arith.addf %37, %42 : vector<20x1024xf32>
    %44 = math.tanh %43 : vector<20x1024xf32>
    %45 = arith.subf %24, %44 : vector<20x1024xf32>
    %c0_9 = arith.constant 0 : index
    %c0_10 = arith.constant 0 : index
    %46 = vector.load %arg6[%c0_9, %c0_10] : memref<20x3xf32, #tpu.memory_space<vmem>>, vector<20x3xf32>
    %c0_11 = arith.constant 0 : index
    %c0_12 = arith.constant 0 : index
    %47 = vector.load %arg7[%c0_11, %c0_12] : memref<20x1xf32, #tpu.memory_space<vmem>>, vector<20x1xf32>
    %48 = vector.extract_strided_slice %46 {offsets = [0, 0], sizes = [20, 1], strides = [1, 1]} : vector<20x3xf32> to vector<20x1xf32>
    %49 = vector.extract_strided_slice %4 {offsets = [0, 0], sizes = [1, 1024], strides = [1, 1]} : vector<3x1024xf32> to vector<1x1024xf32>
    %50 = vector.broadcast %48 : vector<20x1xf32> to vector<20x1024xf32>
    %51 = vector.broadcast %49 : vector<1x1024xf32> to vector<20x1024xf32>
    %52 = arith.mulf %50, %51 : vector<20x1024xf32>
    %53 = vector.broadcast %47 : vector<20x1xf32> to vector<20x1024xf32>
    %54 = arith.addf %53, %52 : vector<20x1024xf32>
    %55 = vector.extract_strided_slice %46 {offsets = [0, 1], sizes = [20, 1], strides = [1, 1]} : vector<20x3xf32> to vector<20x1xf32>
    %56 = vector.extract_strided_slice %4 {offsets = [1, 0], sizes = [1, 1024], strides = [1, 1]} : vector<3x1024xf32> to vector<1x1024xf32>
    %57 = vector.broadcast %55 : vector<20x1xf32> to vector<20x1024xf32>
    %58 = vector.broadcast %56 : vector<1x1024xf32> to vector<20x1024xf32>
    %59 = arith.mulf %57, %58 : vector<20x1024xf32>
    %60 = arith.addf %54, %59 : vector<20x1024xf32>
    %61 = vector.extract_strided_slice %46 {offsets = [0, 2], sizes = [20, 1], strides = [1, 1]} : vector<20x3xf32> to vector<20x1xf32>
    %62 = vector.extract_strided_slice %4 {offsets = [2, 0], sizes = [1, 1024], strides = [1, 1]} : vector<3x1024xf32> to vector<1x1024xf32>
    %63 = vector.broadcast %61 : vector<20x1xf32> to vector<20x1024xf32>
    %64 = vector.broadcast %62 : vector<1x1024xf32> to vector<20x1024xf32>
    %65 = arith.mulf %63, %64 : vector<20x1024xf32>
    %66 = arith.addf %60, %65 : vector<20x1024xf32>
    %67 = math.tanh %66 : vector<20x1024xf32>
    %68 = arith.mulf %67, %45 : vector<20x1024xf32>
    %69 = arith.addf %44, %68 : vector<20x1024xf32>
    %c0_13 = arith.constant 0 : index
    %c0_14 = arith.constant 0 : index
    %70 = vector.load %arg8[%c0_13, %c0_14] : memref<20x20xf32, #tpu.memory_space<vmem>>, vector<20x20xf32>
    %c0_15 = arith.constant 0 : index
    %c0_16 = arith.constant 0 : index
    %71 = vector.load %arg9[%c0_15, %c0_16] : memref<20x1xf32, #tpu.memory_space<vmem>>, vector<20x1xf32>
    %cst = arith.constant dense<0.000000e+00> : vector<20x1024xf32>
    %72 = tpu.matmul %70, %69, %cst {dimension_numbers = #tpu.dot_dimension_numbers<[1], [0], [0], [1], [0, 0, 1, 1], [], []>, precision = #tpu.contract_precision<fp32>} : vector<20x20xf32>, vector<20x1024xf32>, vector<20x1024xf32> -> vector<20x1024xf32>
    %73 = vector.broadcast %71 : vector<20x1xf32> to vector<20x1024xf32>
    %74 = arith.addf %72, %73 : vector<20x1024xf32>
    %75 = math.tanh %74 : vector<20x1024xf32>
    %76 = arith.mulf %75, %45 : vector<20x1024xf32>
    %77 = arith.addf %44, %76 : vector<20x1024xf32>
    %c0_17 = arith.constant 0 : index
    %c0_18 = arith.constant 0 : index
    %78 = vector.load %arg10[%c0_17, %c0_18] : memref<1x20xf32, #tpu.memory_space<vmem>>, vector<1x20xf32>
    %c0_19 = arith.constant 0 : index
    %c0_20 = arith.constant 0 : index
    %79 = vector.load %arg11[%c0_19, %c0_20] : memref<1x1xf32, #tpu.memory_space<vmem>>, vector<1x1xf32>
    %cst_21 = arith.constant dense<0.000000e+00> : vector<1x1024xf32>
    %80 = tpu.matmul %78, %77, %cst_21 {dimension_numbers = #tpu.dot_dimension_numbers<[1], [0], [0], [1], [0, 0, 1, 1], [], []>, precision = #tpu.contract_precision<fp32>} : vector<1x20xf32>, vector<20x1024xf32>, vector<1x1024xf32> -> vector<1x1024xf32>
    %81 = vector.broadcast %79 : vector<1x1xf32> to vector<1x1024xf32>
    %82 = arith.addf %80, %81 : vector<1x1024xf32>
    %c0_22 = arith.constant 0 : index
    %c0_23 = arith.constant 0 : index
    %83 = vector.load %arg12[%c0_22, %c0_23] : memref<1x1024xf32, #tpu.memory_space<vmem>>, vector<1x1024xf32>
    tpu.vector_store %arg12[%c0_22, %c0_23], %82 {strides = array<i32>} : memref<1x1024xf32, #tpu.memory_space<vmem>>, vector<1x1024xf32>,
    return
  }
  func.func @transform_0(%arg0: i32) -> (i32, i32) {
    %c0_i32 = arith.constant 0 : i32
    %c0_i32_0 = arith.constant 0 : i32
    return %c0_i32, %arg0 : i32, i32
  }
  func.func @transform_1(%arg0: i32) -> (i32, i32) {
    %c0_i32 = arith.constant 0 : i32
    %c0_i32_0 = arith.constant 0 : i32
    %c0_i32_1 = arith.constant 0 : i32
    return %c0_i32, %c0_i32_0 : i32, i32
  }
  func.func @transform_2(%arg0: i32) -> (i32, i32) {
    %c0_i32 = arith.constant 0 : i32
    %c0_i32_0 = arith.constant 0 : i32
    %c0_i32_1 = arith.constant 0 : i32
    return %c0_i32, %c0_i32_0 : i32, i32
  }
  func.func @transform_3(%arg0: i32) -> (i32, i32) {
    %c0_i32 = arith.constant 0 : i32
    %c0_i32_0 = arith.constant 0 : i32
    %c0_i32_1 = arith.constant 0 : i32
    return %c0_i32, %c0_i32_0 : i32, i32
  }
  func.func @transform_4(%arg0: i32) -> (i32, i32) {
    %c0_i32 = arith.constant 0 : i32
    %c0_i32_0 = arith.constant 0 : i32
    %c0_i32_1 = arith.constant 0 : i32
    return %c0_i32, %c0_i32_0 : i32, i32
  }
  func.func @transform_5(%arg0: i32) -> (i32, i32) {
    %c0_i32 = arith.constant 0 : i32
    %c0_i32_0 = arith.constant 0 : i32
    %c0_i32_1 = arith.constant 0 : i32
    return %c0_i32, %c0_i32_0 : i32, i32
  }
  func.func @transform_6(%arg0: i32) -> (i32, i32) {
    %c0_i32 = arith.constant 0 : i32
    %c0_i32_0 = arith.constant 0 : i32
    %c0_i32_1 = arith.constant 0 : i32
    return %c0_i32, %c0_i32_0 : i32, i32
  }
  func.func @transform_7(%arg0: i32) -> (i32, i32) {
    %c0_i32 = arith.constant 0 : i32
    %c0_i32_0 = arith.constant 0 : i32
    %c0_i32_1 = arith.constant 0 : i32
    return %c0_i32, %c0_i32_0 : i32, i32
  }
  func.func @transform_8(%arg0: i32) -> (i32, i32) {
    %c0_i32 = arith.constant 0 : i32
    %c0_i32_0 = arith.constant 0 : i32
    %c0_i32_1 = arith.constant 0 : i32
    return %c0_i32, %c0_i32_0 : i32, i32
  }
  func.func @transform_9(%arg0: i32) -> (i32, i32) {
    %c0_i32 = arith.constant 0 : i32
    %c0_i32_0 = arith.constant 0 : i32
    %c0_i32_1 = arith.constant 0 : i32
    return %c0_i32, %c0_i32_0 : i32, i32
  }
  func.func @transform_10(%arg0: i32) -> (i32, i32) {
    %c0_i32 = arith.constant 0 : i32
    %c0_i32_0 = arith.constant 0 : i32
    %c0_i32_1 = arith.constant 0 : i32
    return %c0_i32, %c0_i32_0 : i32, i32
  }
  func.func @transform_11(%arg0: i32) -> (i32, i32) {
    %c0_i32 = arith.constant 0 : i32
    %c0_i32_0 = arith.constant 0 : i32
    return %c0_i32, %arg0 : i32, i32
  }
}

</mosaic_0001>

<llo_original>
// kernel: tpu_custom_call.1
$region0: #{tpu_custom_call.1}
  #allocation0 [shape = 'u32[]', space=smem, size = 0x4, offset = 0x4, fixed_abs, tag = 'smem constant byte address 0x4 - core index']
  #allocation1 [shape = 'u32[144,128]{1,0:T(1,128)}', space=vmem, size = 0x12000, scoped, tag = 'internal scratch']
  #allocation2 [shape = 'f32[1,1]{1,0:T(1,128)S(1)}', space=vmem, size = 0x200, scoped, tag = 'scoped memory for tpu_custom_call.1']
  %s0 = inlined_call_operand.vmem [shape: f32[3,1024], index: 0, kind: input, shape index: {}]
  %s1 = inlined_call_operand.vmem [shape: f32[20,3], index: 1, kind: input, shape index: {}]
  %s2 = inlined_call_operand.vmem [shape: f32[20,1], index: 2, kind: input, shape index: {}]
  %s3 = inlined_call_operand.vmem [shape: f32[20,3], index: 3, kind: input, shape index: {}]
  %s4 = inlined_call_operand.vmem [shape: f32[20,1], index: 4, kind: input, shape index: {}]
  %s5 = inlined_call_operand.vmem [shape: f32[20,3], index: 5, kind: input, shape index: {}]
  %s6 = inlined_call_operand.vmem [shape: f32[20,1], index: 6, kind: input, shape index: {}]
  %s7 = inlined_call_operand.vmem [shape: f32[20,20], index: 7, kind: input, shape index: {}]
  %s8 = inlined_call_operand.vmem [shape: f32[20,1], index: 8, kind: input, shape index: {}]
  %s9 = inlined_call_operand.vmem [shape: f32[1,20], index: 9, kind: input, shape index: {}]
  %s10 = inlined_call_operand.<no memory space> [shape: f32[1,1], index: 10, kind: input, shape index: {}]
  %s11 = inlined_call_operand.hbm [shape: f32[1,1024], index: 11, kind: output, shape index: {}]
  %s12 = sld [smem:[#allocation0]]
  $region54: #{tpu_custom_call.1} parent=0
    _
  %s14 = ssub.s32 1, %s12
  %s15 = scalar_select 0, %s14, %s12
  %v16 = vstv %s10
  %17 = vst [vmem:[#allocation2] sm:$0x1] %v16
  $region1: #{tpu_custom_call.1} parent=0
    #allocation3 [shape = 'u8[4096]{0}', space=vmem, size = 0x1000, scoped, tag = 'output window, operand 0, single buffered']
    #allocation4 [shape = 's32[1]{0}', space=sflag, size = 0x4, scoped, tag = 'scoped memory for tpu_custom_call.1']
    %18 = vsyncpa [#allocation4], 0
    // Predicated region
    $region2: #{tpu_custom_call.1} parent=1 // pred_check
      _
    $region3: #{tpu_custom_call.1} parent=1 // pred_check_branch
      %20 = sbr.rel (0) target = $region5
    $region4: #{tpu_custom_call.1} parent=1 // pred_region
      _
    $region5: #{tpu_custom_call.1} parent=1 // pred_fallthru
      _
    // Predicated region
    $region6: #{tpu_custom_call.1} parent=1 // pred_check
      _
    $region7: #{tpu_custom_call.1} parent=1 // pred_check_branch
      %22 = sbr.rel (0) target = $region9
    $region8: #{tpu_custom_call.1} parent=1 // pred_region
      _
    $region9: #{tpu_custom_call.1} parent=1 // pred_fallthru
      _
    // Predicated region
    $region10: #{tpu_custom_call.1} parent=1 // pred_check
      _
    $region11: #{tpu_custom_call.1} parent=1 // pred_check_branch
      %24 = sbr.rel (0) target = $region13
    $region12: #{tpu_custom_call.1} parent=1 // pred_region
      _
    $region13: #{tpu_custom_call.1} parent=1 // pred_fallthru
      _
    // Predicated region
    $region14: #{tpu_custom_call.1} parent=1 // pred_check
      _
    $region15: #{tpu_custom_call.1} parent=1 // pred_check_branch
      %26 = sbr.rel (0) target = $region17
    $region16: #{tpu_custom_call.1} parent=1 // pred_region
      _
    $region17: #{tpu_custom_call.1} parent=1 // pred_fallthru
      _
    // Predicated region
    $region18: #{tpu_custom_call.1} parent=1 // pred_check
      _
    $region19: #{tpu_custom_call.1} parent=1 // pred_check_branch
      %28 = sbr.rel (0) target = $region21
    $region20: #{tpu_custom_call.1} parent=1 // pred_region
      _
    $region21: #{tpu_custom_call.1} parent=1 // pred_fallthru
      _
    // Predicated region
    $region22: #{tpu_custom_call.1} parent=1 // pred_check
      _
    $region23: #{tpu_custom_call.1} parent=1 // pred_check_branch
      %30 = sbr.rel (0) target = $region25
    $region24: #{tpu_custom_call.1} parent=1 // pred_region
      _
    $region25: #{tpu_custom_call.1} parent=1 // pred_fallthru
      _
    // Predicated region
    $region26: #{tpu_custom_call.1} parent=1 // pred_check
      _
    $region27: #{tpu_custom_call.1} parent=1 // pred_check_branch
      %32 = sbr.rel (0) target = $region29
    $region28: #{tpu_custom_call.1} parent=1 // pred_region
      _
    $region29: #{tpu_custom_call.1} parent=1 // pred_fallthru
      _
    // Predicated region
    $region30: #{tpu_custom_call.1} parent=1 // pred_check
      _
    $region31: #{tpu_custom_call.1} parent=1 // pred_check_branch
      %34 = sbr.rel (0) target = $region33
    $region32: #{tpu_custom_call.1} parent=1 // pred_region
      _
    $region33: #{tpu_custom_call.1} parent=1 // pred_fallthru
      _
    // Predicated region
    $region34: #{tpu_custom_call.1} parent=1 // pred_check
      _
    $region35: #{tpu_custom_call.1} parent=1 // pred_check_branch
      %36 = sbr.rel (0) target = $region37
    $region36: #{tpu_custom_call.1} parent=1 // pred_region
      _
    $region37: #{tpu_custom_call.1} parent=1 // pred_fallthru
      _
    // Predicated region
    $region38: #{tpu_custom_call.1} parent=1 // pred_check
      _
    $region39: #{tpu_custom_call.1} parent=1 // pred_check_branch
      %38 = sbr.rel (0) target = $region41
    $region40: #{tpu_custom_call.1} parent=1 // pred_region
      _
    $region41: #{tpu_custom_call.1} parent=1 // pred_fallthru
      _
    // Predicated region
    $region42: #{tpu_custom_call.1} parent=1 // pred_check
      _
    $region43: #{tpu_custom_call.1} parent=1 // pred_check_branch
      %40 = sbr.rel (0) target = $region45
    $region44: #{tpu_custom_call.1} parent=1 // pred_region
      _
    $region45: #{tpu_custom_call.1} parent=1 // pred_fallthru
      _
    %v41 = vld [vmem:[%s1] sm:$0xff]
    %v42 = vld [vmem:[%s1 + $0x8] sm:$0xff]
    %v43 = vld [vmem:[%s1 + $0x10] sm:$0xf]
    %v44 = vld [vmem:[%s2] sm:$0xff]
    %v45 = vld [vmem:[%s2 + $0x8] sm:$0xff]
    %v46 = vld [vmem:[%s2 + $0x10] sm:$0xf]
    %v47 = vld [vmem:[%s3] sm:$0xff]
    %v48 = vld [vmem:[%s3 + $0x8] sm:$0xff]
    %v49 = vld [vmem:[%s3 + $0x10] sm:$0xf]
    %v50 = vld [vmem:[%s4] sm:$0xff]
    %v51 = vld [vmem:[%s4 + $0x8] sm:$0xff]
    %v52 = vld [vmem:[%s4 + $0x10] sm:$0xf]
    %v53 = vld [vmem:[%s0] sm:$0x77]
    %v54 = vld [vmem:[%s0 + $0x8] sm:$0x77]
    %v55 = vld [vmem:[%s0 + $0x10] sm:$0x77]
    %v56 = vld [vmem:[%s0 + $0x18] sm:$0x77]
    %58 = vset.pattern.permute.xlu0 0
    %59 = vperm.xlu0 %58, %v41
    %v60 = vpop.permute.xlu0 %59
    %63 = vset.pattern.permute.xlu0 0
    %64 = vperm.xlu0 %63, %v42
    %v65 = vpop.permute.xlu0 %64
    %68 = vset.pattern.permute.xlu0 0
    %69 = vperm.xlu0 %68, %v43
    %v70 = vpop.permute.xlu0 %69
    %v76 = vlaneseq
    %v77 = vshrl.u32 %v76, 7
    %v78 = vsub.s32 0, %v77
    %v79 = vrot.slane %v53, %v78
    %v80 = vlaneseq
    %v81 = vshrl.u32 %v80, 7
    %v82 = vsub.s32 4, %v81
    %v83 = vrot.slane %v53, %v82
    %v84 = vlaneseq
    %v85 = vshrl.u32 %v84, 7
    %v86 = vsub.s32 0, %v85
    %v87 = vrot.slane %v54, %v86
    %v88 = vlaneseq
    %v89 = vshrl.u32 %v88, 7
    %v90 = vsub.s32 4, %v89
    %v91 = vrot.slane %v54, %v90
    %v92 = vlaneseq
    %v93 = vshrl.u32 %v92, 7
    %v94 = vsub.s32 0, %v93
    %v95 = vrot.slane %v55, %v94
    %v96 = vlaneseq
    %v97 = vshrl.u32 %v96, 7
    %v98 = vsub.s32 4, %v97
    %v99 = vrot.slane %v55, %v98
    %v100 = vlaneseq
    %v101 = vshrl.u32 %v100, 7
    %v102 = vsub.s32 0, %v101
    %v103 = vrot.slane %v56, %v102
    %v104 = vlaneseq
    %v105 = vshrl.u32 %v104, 7
    %v106 = vsub.s32 4, %v105
    %v107 = vrot.slane %v56, %v106
    %v116 = vlaneseq
    %v117 = vshrl.u32 %v116, 7
    %v118 = vsub.s32 0, %v117
    %v119 = vrot.slane %v79, %v118
    %v120 = vlaneseq
    %v121 = vshrl.u32 %v120, 7
    %v122 = vsub.s32 0, %v121
    %v123 = vrot.slane %v83, %v122
    %v124 = vlaneseq
    %v125 = vshrl.u32 %v124, 7
    %v126 = vsub.s32 0, %v125
    %v127 = vrot.slane %v87, %v126
    %v128 = vlaneseq
    %v129 = vshrl.u32 %v128, 7
    %v130 = vsub.s32 0, %v129
    %v131 = vrot.slane %v91, %v130
    %v132 = vlaneseq
    %v133 = vshrl.u32 %v132, 7
    %v134 = vsub.s32 0, %v133
    %v135 = vrot.slane %v95, %v134
    %v136 = vlaneseq
    %v137 = vshrl.u32 %v136, 7
    %v138 = vsub.s32 0, %v137
    %v139 = vrot.slane %v99, %v138
    %v140 = vlaneseq
    %v141 = vshrl.u32 %v140, 7
    %v142 = vsub.s32 0, %v141
    %v143 = vrot.slane %v103, %v142
    %v144 = vlaneseq
    %v145 = vshrl.u32 %v144, 7
    %v146 = vsub.s32 0, %v145
    %v147 = vrot.slane %v107, %v146
    %v148 = vmul.f32 %v60, %v119
    %v149 = vmul.f32 %v60, %v123
    %v150 = vmul.f32 %v60, %v127
    %v151 = vmul.f32 %v60, %v131
    %v152 = vmul.f32 %v60, %v135
    %v153 = vmul.f32 %v60, %v139
    %v154 = vmul.f32 %v60, %v143
    %v155 = vmul.f32 %v60, %v147
    %v156 = vmul.f32 %v65, %v119
    %v157 = vmul.f32 %v65, %v123
    %v158 = vmul.f32 %v65, %v127
    %v159 = vmul.f32 %v65, %v131
    %v160 = vmul.f32 %v65, %v135
    %v161 = vmul.f32 %v65, %v139
    %v162 = vmul.f32 %v65, %v143
    %v163 = vmul.f32 %v65, %v147
    %v164 = vmul.f32 %v70, %v119
    %v165 = vmul.f32 %v70, %v123
    %v166 = vmul.f32 %v70, %v127
    %v167 = vmul.f32 %v70, %v131
    %v168 = vmul.f32 %v70, %v135
    %v169 = vmul.f32 %v70, %v139
    %v170 = vmul.f32 %v70, %v143
    %v171 = vmul.f32 %v70, %v147
    %173 = vset.pattern.permute.xlu0 0
    %174 = vperm.xlu0 %173, %v44
    %v175 = vpop.permute.xlu0 %174
    %178 = vset.pattern.permute.xlu0 0
    %179 = vperm.xlu0 %178, %v45
    %v180 = vpop.permute.xlu0 %179
    %183 = vset.pattern.permute.xlu0 0
    %184 = vperm.xlu0 %183, %v46
    %v185 = vpop.permute.xlu0 %184
    %v187 = vadd.f32 %v175, %v148
    %v188 = vadd.f32 %v175, %v149
    %v189 = vadd.f32 %v175, %v150
    %v190 = vadd.f32 %v175, %v151
    %v191 = vadd.f32 %v175, %v152
    %v192 = vadd.f32 %v175, %v153
    %v193 = vadd.f32 %v175, %v154
    %v194 = vadd.f32 %v175, %v155
    %v195 = vadd.f32 %v180, %v156
    %v196 = vadd.f32 %v180, %v157
    %v197 = vadd.f32 %v180, %v158
    %v198 = vadd.f32 %v180, %v159
    %v199 = vadd.f32 %v180, %v160
    %v200 = vadd.f32 %v180, %v161
    %v201 = vadd.f32 %v180, %v162
    %v202 = vadd.f32 %v180, %v163
    %v203 = vadd.f32 %v185, %v164
    %v204 = vadd.f32 %v185, %v165
    %v205 = vadd.f32 %v185, %v166
    %v206 = vadd.f32 %v185, %v167
    %v207 = vadd.f32 %v185, %v168
    %v208 = vadd.f32 %v185, %v169
    %v209 = vadd.f32 %v185, %v170
    %v210 = vadd.f32 %v185, %v171
    %211 = vset.pattern.permute.xlu0 1
    %212 = vperm.xlu0 %211, %v41
    %v213 = vpop.permute.xlu0 %212
    %215 = vset.pattern.permute.xlu0 1
    %216 = vperm.xlu0 %215, %v42
    %v217 = vpop.permute.xlu0 %216
    %219 = vset.pattern.permute.xlu0 1
    %220 = vperm.xlu0 %219, %v43
    %v221 = vpop.permute.xlu0 %220
    %v223 = vlaneseq
    %v224 = vshrl.u32 %v223, 7
    %v225 = vsub.s32 1, %v224
    %v226 = vrot.slane %v53, %v225
    %v227 = vlaneseq
    %v228 = vshrl.u32 %v227, 7
    %v229 = vsub.s32 5, %v228
    %v230 = vrot.slane %v53, %v229
    %v231 = vlaneseq
    %v232 = vshrl.u32 %v231, 7
    %v233 = vsub.s32 1, %v232
    %v234 = vrot.slane %v54, %v233
    %v235 = vlaneseq
    %v236 = vshrl.u32 %v235, 7
    %v237 = vsub.s32 5, %v236
    %v238 = vrot.slane %v54, %v237
    %v239 = vlaneseq
    %v240 = vshrl.u32 %v239, 7
    %v241 = vsub.s32 1, %v240
    %v242 = vrot.slane %v55, %v241
    %v243 = vlaneseq
    %v244 = vshrl.u32 %v243, 7
    %v245 = vsub.s32 5, %v244
    %v246 = vrot.slane %v55, %v245
    %v247 = vlaneseq
    %v248 = vshrl.u32 %v247, 7
    %v249 = vsub.s32 1, %v248
    %v250 = vrot.slane %v56, %v249
    %v251 = vlaneseq
    %v252 = vshrl.u32 %v251, 7
    %v253 = vsub.s32 5, %v252
    %v254 = vrot.slane %v56, %v253
    %v263 = vlaneseq
    %v264 = vshrl.u32 %v263, 7
    %v265 = vsub.s32 1, %v264
    %v266 = vrot.slane %v226, %v265
    %v267 = vlaneseq
    %v268 = vshrl.u32 %v267, 7
    %v269 = vsub.s32 1, %v268
    %v270 = vrot.slane %v230, %v269
    %v271 = vlaneseq
    %v272 = vshrl.u32 %v271, 7
    %v273 = vsub.s32 1, %v272
    %v274 = vrot.slane %v234, %v273
    %v275 = vlaneseq
    %v276 = vshrl.u32 %v275, 7
    %v277 = vsub.s32 1, %v276
    %v278 = vrot.slane %v238, %v277
    %v279 = vlaneseq
    %v280 = vshrl.u32 %v279, 7
    %v281 = vsub.s32 1, %v280
    %v282 = vrot.slane %v242, %v281
    %v283 = vlaneseq
    %v284 = vshrl.u32 %v283, 7
    %v285 = vsub.s32 1, %v284
    %v286 = vrot.slane %v246, %v285
    %v287 = vlaneseq
    %v288 = vshrl.u32 %v287, 7
    %v289 = vsub.s32 1, %v288
    %v290 = vrot.slane %v250, %v289
    %v291 = vlaneseq
    %v292 = vshrl.u32 %v291, 7
    %v293 = vsub.s32 1, %v292
    %v294 = vrot.slane %v254, %v293
    %v295 = vmul.f32 %v213, %v266
    %v296 = vmul.f32 %v213, %v270
    %v297 = vmul.f32 %v213, %v274
    %v298 = vmul.f32 %v213, %v278
    %v299 = vmul.f32 %v213, %v282
    %v300 = vmul.f32 %v213, %v286
    %v301 = vmul.f32 %v213, %v290
    %v302 = vmul.f32 %v213, %v294
    %v303 = vmul.f32 %v217, %v266
    %v304 = vmul.f32 %v217, %v270
    %v305 = vmul.f32 %v217, %v274
    %v306 = vmul.f32 %v217, %v278
    %v307 = vmul.f32 %v217, %v282
    %v308 = vmul.f32 %v217, %v286
    %v309 = vmul.f32 %v217, %v290
    %v310 = vmul.f32 %v217, %v294
    %v311 = vmul.f32 %v221, %v266
    %v312 = vmul.f32 %v221, %v270
    %v313 = vmul.f32 %v221, %v274
    %v314 = vmul.f32 %v221, %v278
    %v315 = vmul.f32 %v221, %v282
    %v316 = vmul.f32 %v221, %v286
    %v317 = vmul.f32 %v221, %v290
    %v318 = vmul.f32 %v221, %v294
    %v319 = vadd.f32 %v187, %v295
    %v320 = vadd.f32 %v188, %v296
    %v321 = vadd.f32 %v189, %v297
    %v322 = vadd.f32 %v190, %v298
    %v323 = vadd.f32 %v191, %v299
    %v324 = vadd.f32 %v192, %v300
    %v325 = vadd.f32 %v193, %v301
    %v326 = vadd.f32 %v194, %v302
    %v327 = vadd.f32 %v195, %v303
    %v328 = vadd.f32 %v196, %v304
    %v329 = vadd.f32 %v197, %v305
    %v330 = vadd.f32 %v198, %v306
    %v331 = vadd.f32 %v199, %v307
    %v332 = vadd.f32 %v200, %v308
    %v333 = vadd.f32 %v201, %v309
    %v334 = vadd.f32 %v202, %v310
    %v335 = vadd.f32 %v203, %v311
    %v336 = vadd.f32 %v204, %v312
    %v337 = vadd.f32 %v205, %v313
    %v338 = vadd.f32 %v206, %v314
    %v339 = vadd.f32 %v207, %v315
    %v340 = vadd.f32 %v208, %v316
    %v341 = vadd.f32 %v209, %v317
    %v342 = vadd.f32 %v210, %v318
    %343 = vset.pattern.permute.xlu0 2
    %344 = vperm.xlu0 %343, %v41
    %v345 = vpop.permute.xlu0 %344
    %347 = vset.pattern.permute.xlu0 2
    %348 = vperm.xlu0 %347, %v42
    %v349 = vpop.permute.xlu0 %348
    %351 = vset.pattern.permute.xlu0 2
    %352 = vperm.xlu0 %351, %v43
    %v353 = vpop.permute.xlu0 %352
    %v355 = vlaneseq
    %v356 = vshrl.u32 %v355, 7
    %v357 = vsub.s32 2, %v356
    %v358 = vrot.slane %v53, %v357
    %v359 = vlaneseq
    %v360 = vshrl.u32 %v359, 7
    %v361 = vsub.s32 6, %v360
    %v362 = vrot.slane %v53, %v361
    %v363 = vlaneseq
    %v364 = vshrl.u32 %v363, 7
    %v365 = vsub.s32 2, %v364
    %v366 = vrot.slane %v54, %v365
    %v367 = vlaneseq
    %v368 = vshrl.u32 %v367, 7
    %v369 = vsub.s32 6, %v368
    %v370 = vrot.slane %v54, %v369
    %v371 = vlaneseq
    %v372 = vshrl.u32 %v371, 7
    %v373 = vsub.s32 2, %v372
    %v374 = vrot.slane %v55, %v373
    %v375 = vlaneseq
    %v376 = vshrl.u32 %v375, 7
    %v377 = vsub.s32 6, %v376
    %v378 = vrot.slane %v55, %v377
    %v379 = vlaneseq
    %v380 = vshrl.u32 %v379, 7
    %v381 = vsub.s32 2, %v380
    %v382 = vrot.slane %v56, %v381
    %v383 = vlaneseq
    %v384 = vshrl.u32 %v383, 7
    %v385 = vsub.s32 6, %v384
    %v386 = vrot.slane %v56, %v385
    %v395 = vlaneseq
    %v396 = vshrl.u32 %v395, 7
    %v397 = vsub.s32 2, %v396
    %v398 = vrot.slane %v358, %v397
    %v399 = vlaneseq
    %v400 = vshrl.u32 %v399, 7
    %v401 = vsub.s32 2, %v400
    %v402 = vrot.slane %v362, %v401
    %v403 = vlaneseq
    %v404 = vshrl.u32 %v403, 7
    %v405 = vsub.s32 2, %v404
    %v406 = vrot.slane %v366, %v405
    %v407 = vlaneseq
    %v408 = vshrl.u32 %v407, 7
    %v409 = vsub.s32 2, %v408
    %v410 = vrot.slane %v370, %v409
    %v411 = vlaneseq
    %v412 = vshrl.u32 %v411, 7
    %v413 = vsub.s32 2, %v412
    %v414 = vrot.slane %v374, %v413
    %v415 = vlaneseq
    %v416 = vshrl.u32 %v415, 7
    %v417 = vsub.s32 2, %v416
    %v418 = vrot.slane %v378, %v417
    %v419 = vlaneseq
    %v420 = vshrl.u32 %v419, 7
    %v421 = vsub.s32 2, %v420
    %v422 = vrot.slane %v382, %v421
    %v423 = vlaneseq
    %v424 = vshrl.u32 %v423, 7
    %v425 = vsub.s32 2, %v424
    %v426 = vrot.slane %v386, %v425
    %v427 = vmul.f32 %v345, %v398
    %v428 = vmul.f32 %v345, %v402
    %v429 = vmul.f32 %v345, %v406
    %v430 = vmul.f32 %v345, %v410
    %v431 = vmul.f32 %v345, %v414
    %v432 = vmul.f32 %v345, %v418
    %v433 = vmul.f32 %v345, %v422
    %v434 = vmul.f32 %v345, %v426
    %v435 = vmul.f32 %v349, %v398
    %v436 = vmul.f32 %v349, %v402
    %v437 = vmul.f32 %v349, %v406
    %v438 = vmul.f32 %v349, %v410
    %v439 = vmul.f32 %v349, %v414
    %v440 = vmul.f32 %v349, %v418
    %v441 = vmul.f32 %v349, %v422
    %v442 = vmul.f32 %v349, %v426
    %v443 = vmul.f32 %v353, %v398
    %v444 = vmul.f32 %v353, %v402
    %v445 = vmul.f32 %v353, %v406
    %v446 = vmul.f32 %v353, %v410
    %v447 = vmul.f32 %v353, %v414
    %v448 = vmul.f32 %v353, %v418
    %v449 = vmul.f32 %v353, %v422
    %v450 = vmul.f32 %v353, %v426
    %v451 = vadd.f32 %v319, %v427
    %v452 = vadd.f32 %v320, %v428
    %v453 = vadd.f32 %v321, %v429
    %v454 = vadd.f32 %v322, %v430
    %v455 = vadd.f32 %v323, %v431
    %v456 = vadd.f32 %v324, %v432
    %v457 = vadd.f32 %v325, %v433
    %v458 = vadd.f32 %v326, %v434
    %v459 = vadd.f32 %v327, %v435
    %v460 = vadd.f32 %v328, %v436
    %v461 = vadd.f32 %v329, %v437
    %v462 = vadd.f32 %v330, %v438
    %v463 = vadd.f32 %v331, %v439
    %v464 = vadd.f32 %v332, %v440
    %v465 = vadd.f32 %v333, %v441
    %v466 = vadd.f32 %v334, %v442
    %v467 = vadd.f32 %v335, %v443
    %v468 = vadd.f32 %v336, %v444
    %v469 = vadd.f32 %v337, %v445
    %v470 = vadd.f32 %v338, %v446
    %v471 = vadd.f32 %v339, %v447
    %v472 = vadd.f32 %v340, %v448
    %v473 = vadd.f32 %v341, %v449
    %v474 = vadd.f32 %v342, %v450
    %v475 = vtanh.pop %v451
    %v476 = vtanh.pop %v452
    %v477 = vtanh.pop %v453
    %v478 = vtanh.pop %v454
    %v479 = vtanh.pop %v455
    %v480 = vtanh.pop %v456
    %v481 = vtanh.pop %v457
    %v482 = vtanh.pop %v458
    %v483 = vtanh.pop %v459
    %v484 = vtanh.pop %v460
    %v485 = vtanh.pop %v461
    %v486 = vtanh.pop %v462
    %v487 = vtanh.pop %v463
    %v488 = vtanh.pop %v464
    %v489 = vtanh.pop %v465
    %v490 = vtanh.pop %v466
    %v491 = vtanh.pop %v467
    %v492 = vtanh.pop %v468
    %v493 = vtanh.pop %v469
    %v494 = vtanh.pop %v470
    %v495 = vtanh.pop %v471
    %v496 = vtanh.pop %v472
    %v497 = vtanh.pop %v473
    %v498 = vtanh.pop %v474
    %500 = vset.pattern.permute.xlu0 0
    %501 = vperm.xlu0 %500, %v47
    %v502 = vpop.permute.xlu0 %501
    %505 = vset.pattern.permute.xlu0 0
    %506 = vperm.xlu0 %505, %v48
    %v507 = vpop.permute.xlu0 %506
    %510 = vset.pattern.permute.xlu0 0
    %511 = vperm.xlu0 %510, %v49
    %v512 = vpop.permute.xlu0 %511
    %v514 = vmul.f32 %v502, %v119
    %v515 = vmul.f32 %v502, %v123
    %v516 = vmul.f32 %v502, %v127
    %v517 = vmul.f32 %v502, %v131
    %v518 = vmul.f32 %v502, %v135
    %v519 = vmul.f32 %v502, %v139
    %v520 = vmul.f32 %v502, %v143
    %v521 = vmul.f32 %v502, %v147
    %v522 = vmul.f32 %v507, %v119
    %v523 = vmul.f32 %v507, %v123
    %v524 = vmul.f32 %v507, %v127
    %v525 = vmul.f32 %v507, %v131
    %v526 = vmul.f32 %v507, %v135
    %v527 = vmul.f32 %v507, %v139
    %v528 = vmul.f32 %v507, %v143
    %v529 = vmul.f32 %v507, %v147
    %v530 = vmul.f32 %v512, %v119
    %v531 = vmul.f32 %v512, %v123
    %v532 = vmul.f32 %v512, %v127
    %v533 = vmul.f32 %v512, %v131
    %v534 = vmul.f32 %v512, %v135
    %v535 = vmul.f32 %v512, %v139
    %v536 = vmul.f32 %v512, %v143
    %v537 = vmul.f32 %v512, %v147
    %539 = vset.pattern.permute.xlu0 0
    %540 = vperm.xlu0 %539, %v50
    %v541 = vpop.permute.xlu0 %540
    %544 = vset.pattern.permute.xlu0 0
    %545 = vperm.xlu0 %544, %v51
    %v546 = vpop.permute.xlu0 %545
    %549 = vset.pattern.permute.xlu0 0
    %550 = vperm.xlu0 %549, %v52
    %v551 = vpop.permute.xlu0 %550
    %v553 = vadd.f32 %v541, %v514
    %v554 = vadd.f32 %v541, %v515
    %v555 = vadd.f32 %v541, %v516
    %v556 = vadd.f32 %v541, %v517
    %v557 = vadd.f32 %v541, %v518
    %v558 = vadd.f32 %v541, %v519
    %v559 = vadd.f32 %v541, %v520
    %v560 = vadd.f32 %v541, %v521
    %v561 = vadd.f32 %v546, %v522
    %v562 = vadd.f32 %v546, %v523
    %v563 = vadd.f32 %v546, %v524
    %v564 = vadd.f32 %v546, %v525
    %v565 = vadd.f32 %v546, %v526
    %v566 = vadd.f32 %v546, %v527
    %v567 = vadd.f32 %v546, %v528
    %v568 = vadd.f32 %v546, %v529
    %v569 = vadd.f32 %v551, %v530
    %v570 = vadd.f32 %v551, %v531
    %v571 = vadd.f32 %v551, %v532
    %v572 = vadd.f32 %v551, %v533
    %v573 = vadd.f32 %v551, %v534
    %v574 = vadd.f32 %v551, %v535
    %v575 = vadd.f32 %v551, %v536
    %v576 = vadd.f32 %v551, %v537
    %577 = vset.pattern.permute.xlu0 1
    %578 = vperm.xlu0 %577, %v47
    %v579 = vpop.permute.xlu0 %578
    %581 = vset.pattern.permute.xlu0 1
    %582 = vperm.xlu0 %581, %v48
    %v583 = vpop.permute.xlu0 %582
    %585 = vset.pattern.permute.xlu0 1
    %586 = vperm.xlu0 %585, %v49
    %v587 = vpop.permute.xlu0 %586
    %v589 = vmul.f32 %v579, %v266
    %v590 = vmul.f32 %v579, %v270
    %v591 = vmul.f32 %v579, %v274
    %v592 = vmul.f32 %v579, %v278
    %v593 = vmul.f32 %v579, %v282
    %v594 = vmul.f32 %v579, %v286
    %v595 = vmul.f32 %v579, %v290
    %v596 = vmul.f32 %v579, %v294
    %v597 = vmul.f32 %v583, %v266
    %v598 = vmul.f32 %v583, %v270
    %v599 = vmul.f32 %v583, %v274
    %v600 = vmul.f32 %v583, %v278
    %v601 = vmul.f32 %v583, %v282
    %v602 = vmul.f32 %v583, %v286
    %v603 = vmul.f32 %v583, %v290
    %v604 = vmul.f32 %v583, %v294
    %v605 = vmul.f32 %v587, %v266
    %v606 = vmul.f32 %v587, %v270
    %v607 = vmul.f32 %v587, %v274
    %v608 = vmul.f32 %v587, %v278
    %v609 = vmul.f32 %v587, %v282
    %v610 = vmul.f32 %v587, %v286
    %v611 = vmul.f32 %v587, %v290
    %v612 = vmul.f32 %v587, %v294
    %v613 = vadd.f32 %v553, %v589
    %v614 = vadd.f32 %v554, %v590
    %v615 = vadd.f32 %v555, %v591
    %v616 = vadd.f32 %v556, %v592
    %v617 = vadd.f32 %v557, %v593
    %v618 = vadd.f32 %v558, %v594
    %v619 = vadd.f32 %v559, %v595
    %v620 = vadd.f32 %v560, %v596
    %v621 = vadd.f32 %v561, %v597
    %v622 = vadd.f32 %v562, %v598
    %v623 = vadd.f32 %v563, %v599
    %v624 = vadd.f32 %v564, %v600
    %v625 = vadd.f32 %v565, %v601
    %v626 = vadd.f32 %v566, %v602
    %v627 = vadd.f32 %v567, %v603
    %v628 = vadd.f32 %v568, %v604
    %v629 = vadd.f32 %v569, %v605
    %v630 = vadd.f32 %v570, %v606
    %v631 = vadd.f32 %v571, %v607
    %v632 = vadd.f32 %v572, %v608
    %v633 = vadd.f32 %v573, %v609
    %v634 = vadd.f32 %v574, %v610
    %v635 = vadd.f32 %v575, %v611
    %v636 = vadd.f32 %v576, %v612
    %637 = vset.pattern.permute.xlu0 2
    %638 = vperm.xlu0 %637, %v47
    %v639 = vpop.permute.xlu0 %638
    %641 = vset.pattern.permute.xlu0 2
    %642 = vperm.xlu0 %641, %v48
    %v643 = vpop.permute.xlu0 %642
    %645 = vset.pattern.permute.xlu0 2
    %646 = vperm.xlu0 %645, %v49
    %v647 = vpop.permute.xlu0 %646
    %v649 = vmul.f32 %v639, %v398
    %v650 = vmul.f32 %v639, %v402
    %v651 = vmul.f32 %v639, %v406
    %v652 = vmul.f32 %v639, %v410
    %v653 = vmul.f32 %v639, %v414
    %v654 = vmul.f32 %v639, %v418
    %v655 = vmul.f32 %v639, %v422
    %v656 = vmul.f32 %v639, %v426
    %v657 = vmul.f32 %v643, %v398
    %v658 = vmul.f32 %v643, %v402
    %v659 = vmul.f32 %v643, %v406
    %v660 = vmul.f32 %v643, %v410
    %v661 = vmul.f32 %v643, %v414
    %v662 = vmul.f32 %v643, %v418
    %v663 = vmul.f32 %v643, %v422
    %v664 = vmul.f32 %v643, %v426
    %v665 = vmul.f32 %v647, %v398
    %v666 = vmul.f32 %v647, %v402
    %v667 = vmul.f32 %v647, %v406
    %v668 = vmul.f32 %v647, %v410
    %v669 = vmul.f32 %v647, %v414
    %v670 = vmul.f32 %v647, %v418
    %v671 = vmul.f32 %v647, %v422
    %v672 = vmul.f32 %v647, %v426
    %v673 = vadd.f32 %v613, %v649
    %v674 = vadd.f32 %v614, %v650
    %v675 = vadd.f32 %v615, %v651
    %v676 = vadd.f32 %v616, %v652
    %v677 = vadd.f32 %v617, %v653
    %v678 = vadd.f32 %v618, %v654
    %v679 = vadd.f32 %v619, %v655
    %v680 = vadd.f32 %v620, %v656
    %v681 = vadd.f32 %v621, %v657
    %v682 = vadd.f32 %v622, %v658
    %v683 = vadd.f32 %v623, %v659
    %v684 = vadd.f32 %v624, %v660
    %v685 = vadd.f32 %v625, %v661
    %v686 = vadd.f32 %v626, %v662
    %v687 = vadd.f32 %v627, %v663
    %v688 = vadd.f32 %v628, %v664
    %v689 = vadd.f32 %v629, %v665
    %v690 = vadd.f32 %v630, %v666
    %v691 = vadd.f32 %v631, %v667
    %v692 = vadd.f32 %v632, %v668
    %v693 = vadd.f32 %v633, %v669
    %v694 = vadd.f32 %v634, %v670
    %v695 = vadd.f32 %v635, %v671
    %v696 = vadd.f32 %v636, %v672
    %v697 = vtanh.pop %v673
    %v698 = vtanh.pop %v674
    %v699 = vtanh.pop %v675
    %v700 = vtanh.pop %v676
    %v701 = vtanh.pop %v677
    %v702 = vtanh.pop %v678
    %v703 = vtanh.pop %v679
    %v704 = vtanh.pop %v680
    %v705 = vtanh.pop %v681
    %v706 = vtanh.pop %v682
    %v707 = vtanh.pop %v683
    %v708 = vtanh.pop %v684
    %v709 = vtanh.pop %v685
    %v710 = vtanh.pop %v686
    %v711 = vtanh.pop %v687
    %v712 = vtanh.pop %v688
    %v713 = vtanh.pop %v689
    %v714 = vtanh.pop %v690
    %v715 = vtanh.pop %v691
    %v716 = vtanh.pop %v692
    %v717 = vtanh.pop %v693
    %v718 = vtanh.pop %v694
    %v719 = vtanh.pop %v695
    %v720 = vtanh.pop %v696
    %v721 = vsub.f32 %v475, %v697
    %v722 = vsub.f32 %v476, %v698
    %v723 = vsub.f32 %v477, %v699
    %v724 = vsub.f32 %v478, %v700
    %v725 = vsub.f32 %v479, %v701
    %v726 = vsub.f32 %v480, %v702
    %v727 = vsub.f32 %v481, %v703
    %v728 = vsub.f32 %v482, %v704
    %v729 = vsub.f32 %v483, %v705
    %v730 = vsub.f32 %v484, %v706
    %v731 = vsub.f32 %v485, %v707
    %v732 = vsub.f32 %v486, %v708
    %v733 = vsub.f32 %v487, %v709
    %v734 = vsub.f32 %v488, %v710
    %v735 = vsub.f32 %v489, %v711
    %v736 = vsub.f32 %v490, %v712
    %v737 = vsub.f32 %v491, %v713
    %v738 = vsub.f32 %v492, %v714
    %v739 = vsub.f32 %v493, %v715
    %v740 = vsub.f32 %v494, %v716
    %v741 = vsub.f32 %v495, %v717
    %v742 = vsub.f32 %v496, %v718
    %v743 = vsub.f32 %v497, %v719
    %v744 = vsub.f32 %v498, %v720
    %v745 = vld [vmem:[%s5] sm:$0xff]
    %v746 = vld [vmem:[%s5 + $0x8] sm:$0xff]
    %v747 = vld [vmem:[%s5 + $0x10] sm:$0xf]
    %v748 = vld [vmem:[%s6] sm:$0xff]
    %v749 = vld [vmem:[%s6 + $0x8] sm:$0xff]
    %v750 = vld [vmem:[%s6 + $0x10] sm:$0xf]
    %752 = vset.pattern.permute.xlu0 0
    %753 = vperm.xlu0 %752, %v745
    %v754 = vpop.permute.xlu0 %753
    %757 = vset.pattern.permute.xlu0 0
    %758 = vperm.xlu0 %757, %v746
    %v759 = vpop.permute.xlu0 %758
    %762 = vset.pattern.permute.xlu0 0
    %763 = vperm.xlu0 %762, %v747
    %v764 = vpop.permute.xlu0 %763
    %v766 = vmul.f32 %v754, %v119
    %v767 = vmul.f32 %v754, %v123
    %v768 = vmul.f32 %v754, %v127
    %v769 = vmul.f32 %v754, %v131
    %v770 = vmul.f32 %v754, %v135
    %v771 = vmul.f32 %v754, %v139
    %v772 = vmul.f32 %v754, %v143
    %v773 = vmul.f32 %v754, %v147
    %v774 = vmul.f32 %v759, %v119
    %v775 = vmul.f32 %v759, %v123
    %v776 = vmul.f32 %v759, %v127
    %v777 = vmul.f32 %v759, %v131
    %v778 = vmul.f32 %v759, %v135
    %v779 = vmul.f32 %v759, %v139
    %v780 = vmul.f32 %v759, %v143
    %v781 = vmul.f32 %v759, %v147
    %v782 = vmul.f32 %v764, %v119
    %v783 = vmul.f32 %v764, %v123
    %v784 = vmul.f32 %v764, %v127
    %v785 = vmul.f32 %v764, %v131
    %v786 = vmul.f32 %v764, %v135
    %v787 = vmul.f32 %v764, %v139
    %v788 = vmul.f32 %v764, %v143
    %v789 = vmul.f32 %v764, %v147
    %791 = vset.pattern.permute.xlu0 0
    %792 = vperm.xlu0 %791, %v748
    %v793 = vpop.permute.xlu0 %792
    %796 = vset.pattern.permute.xlu0 0
    %797 = vperm.xlu0 %796, %v749
    %v798 = vpop.permute.xlu0 %797
    %801 = vset.pattern.permute.xlu0 0
    %802 = vperm.xlu0 %801, %v750
    %v803 = vpop.permute.xlu0 %802
    %v805 = vadd.f32 %v793, %v766
    %v806 = vadd.f32 %v793, %v767
    %v807 = vadd.f32 %v793, %v768
    %v808 = vadd.f32 %v793, %v769
    %v809 = vadd.f32 %v793, %v770
    %v810 = vadd.f32 %v793, %v771
    %v811 = vadd.f32 %v793, %v772
    %v812 = vadd.f32 %v793, %v773
    %v813 = vadd.f32 %v798, %v774
    %v814 = vadd.f32 %v798, %v775
    %v815 = vadd.f32 %v798, %v776
    %v816 = vadd.f32 %v798, %v777
    %v817 = vadd.f32 %v798, %v778
    %v818 = vadd.f32 %v798, %v779
    %v819 = vadd.f32 %v798, %v780
    %v820 = vadd.f32 %v798, %v781
    %v821 = vadd.f32 %v803, %v782
    %v822 = vadd.f32 %v803, %v783
    %v823 = vadd.f32 %v803, %v784
    %v824 = vadd.f32 %v803, %v785
    %v825 = vadd.f32 %v803, %v786
    %v826 = vadd.f32 %v803, %v787
    %v827 = vadd.f32 %v803, %v788
    %v828 = vadd.f32 %v803, %v789
    %829 = vset.pattern.permute.xlu0 1
    %830 = vperm.xlu0 %829, %v745
    %v831 = vpop.permute.xlu0 %830
    %833 = vset.pattern.permute.xlu0 1
    %834 = vperm.xlu0 %833, %v746
    %v835 = vpop.permute.xlu0 %834
    %837 = vset.pattern.permute.xlu0 1
    %838 = vperm.xlu0 %837, %v747
    %v839 = vpop.permute.xlu0 %838
    %v841 = vmul.f32 %v831, %v266
    %v842 = vmul.f32 %v831, %v270
    %v843 = vmul.f32 %v831, %v274
    %v844 = vmul.f32 %v831, %v278
    %v845 = vmul.f32 %v831, %v282
    %v846 = vmul.f32 %v831, %v286
    %v847 = vmul.f32 %v831, %v290
    %v848 = vmul.f32 %v831, %v294
    %v849 = vmul.f32 %v835, %v266
    %v850 = vmul.f32 %v835, %v270
    %v851 = vmul.f32 %v835, %v274
    %v852 = vmul.f32 %v835, %v278
    %v853 = vmul.f32 %v835, %v282
    %v854 = vmul.f32 %v835, %v286
    %v855 = vmul.f32 %v835, %v290
    %v856 = vmul.f32 %v835, %v294
    %v857 = vmul.f32 %v839, %v266
    %v858 = vmul.f32 %v839, %v270
    %v859 = vmul.f32 %v839, %v274
    %v860 = vmul.f32 %v839, %v278
    %v861 = vmul.f32 %v839, %v282
    %v862 = vmul.f32 %v839, %v286
    %v863 = vmul.f32 %v839, %v290
    %v864 = vmul.f32 %v839, %v294
    %v865 = vadd.f32 %v805, %v841
    %v866 = vadd.f32 %v806, %v842
    %v867 = vadd.f32 %v807, %v843
    %v868 = vadd.f32 %v808, %v844
    %v869 = vadd.f32 %v809, %v845
    %v870 = vadd.f32 %v810, %v846
    %v871 = vadd.f32 %v811, %v847
    %v872 = vadd.f32 %v812, %v848
    %v873 = vadd.f32 %v813, %v849
    %v874 = vadd.f32 %v814, %v850
    %v875 = vadd.f32 %v815, %v851
    %v876 = vadd.f32 %v816, %v852
    %v877 = vadd.f32 %v817, %v853
    %v878 = vadd.f32 %v818, %v854
    %v879 = vadd.f32 %v819, %v855
    %v880 = vadd.f32 %v820, %v856
    %v881 = vadd.f32 %v821, %v857
    %v882 = vadd.f32 %v822, %v858
    %v883 = vadd.f32 %v823, %v859
    %v884 = vadd.f32 %v824, %v860
    %v885 = vadd.f32 %v825, %v861
    %v886 = vadd.f32 %v826, %v862
    %v887 = vadd.f32 %v827, %v863
    %v888 = vadd.f32 %v828, %v864
    %889 = vset.pattern.permute.xlu0 2
    %890 = vperm.xlu0 %889, %v745
    %v891 = vpop.permute.xlu0 %890
    %893 = vset.pattern.permute.xlu0 2
    %894 = vperm.xlu0 %893, %v746
    %v895 = vpop.permute.xlu0 %894
    %897 = vset.pattern.permute.xlu0 2
    %898 = vperm.xlu0 %897, %v747
    %v899 = vpop.permute.xlu0 %898
    %v901 = vmul.f32 %v891, %v398
    %v902 = vmul.f32 %v891, %v402
    %v903 = vmul.f32 %v891, %v406
    %v904 = vmul.f32 %v891, %v410
    %v905 = vmul.f32 %v891, %v414
    %v906 = vmul.f32 %v891, %v418
    %v907 = vmul.f32 %v891, %v422
    %v908 = vmul.f32 %v891, %v426
    %v909 = vmul.f32 %v895, %v398
    %v910 = vmul.f32 %v895, %v402
    %v911 = vmul.f32 %v895, %v406
    %v912 = vmul.f32 %v895, %v410
    %v913 = vmul.f32 %v895, %v414
    %v914 = vmul.f32 %v895, %v418
    %v915 = vmul.f32 %v895, %v422
    %v916 = vmul.f32 %v895, %v426
    %v917 = vmul.f32 %v899, %v398
    %v918 = vmul.f32 %v899, %v402
    %v919 = vmul.f32 %v899, %v406
    %v920 = vmul.f32 %v899, %v410
    %v921 = vmul.f32 %v899, %v414
    %v922 = vmul.f32 %v899, %v418
    %v923 = vmul.f32 %v899, %v422
    %v924 = vmul.f32 %v899, %v426
    %v925 = vadd.f32 %v865, %v901
    %v926 = vadd.f32 %v866, %v902
    %v927 = vadd.f32 %v867, %v903
    %v928 = vadd.f32 %v868, %v904
    %v929 = vadd.f32 %v869, %v905
    %v930 = vadd.f32 %v870, %v906
    %v931 = vadd.f32 %v871, %v907
    %v932 = vadd.f32 %v872, %v908
    %v933 = vadd.f32 %v873, %v909
    %v934 = vadd.f32 %v874, %v910
    %v935 = vadd.f32 %v875, %v911
    %v936 = vadd.f32 %v876, %v912
    %v937 = vadd.f32 %v877, %v913
    %v938 = vadd.f32 %v878, %v914
    %v939 = vadd.f32 %v879, %v915
    %v940 = vadd.f32 %v880, %v916
    %v941 = vadd.f32 %v881, %v917
    %v942 = vadd.f32 %v882, %v918
    %v943 = vadd.f32 %v883, %v919
    %v944 = vadd.f32 %v884, %v920
    %v945 = vadd.f32 %v885, %v921
    %v946 = vadd.f32 %v886, %v922
    %v947 = vadd.f32 %v887, %v923
    %v948 = vadd.f32 %v888, %v924
    %v949 = vtanh.pop %v925
    %v950 = vtanh.pop %v926
    %v951 = vtanh.pop %v927
    %v952 = vtanh.pop %v928
    %v953 = vtanh.pop %v929
    %v954 = vtanh.pop %v930
    %v955 = vtanh.pop %v931
    %v956 = vtanh.pop %v932
    %v957 = vtanh.pop %v933
    %v958 = vtanh.pop %v934
    %v959 = vtanh.pop %v935
    %v960 = vtanh.pop %v936
    %v961 = vtanh.pop %v937
    %v962 = vtanh.pop %v938
    %v963 = vtanh.pop %v939
    %v964 = vtanh.pop %v940
    %v965 = vtanh.pop %v941
    %v966 = vtanh.pop %v942
    %v967 = vtanh.pop %v943
    %v968 = vtanh.pop %v944
    %v969 = vtanh.pop %v945
    %v970 = vtanh.pop %v946
    %v971 = vtanh.pop %v947
    %v972 = vtanh.pop %v948
    %v973 = vmul.f32 %v949, %v721
    %v974 = vmul.f32 %v950, %v722
    %v975 = vmul.f32 %v951, %v723
    %v976 = vmul.f32 %v952, %v724
    %v977 = vmul.f32 %v953, %v725
    %v978 = vmul.f32 %v954, %v726
    %v979 = vmul.f32 %v955, %v727
    %v980 = vmul.f32 %v956, %v728
    %v981 = vmul.f32 %v957, %v729
    %v982 = vmul.f32 %v958, %v730
    %v983 = vmul.f32 %v959, %v731
    %v984 = vmul.f32 %v960, %v732
    %v985 = vmul.f32 %v961, %v733
    %v986 = vmul.f32 %v962, %v734
    %v987 = vmul.f32 %v963, %v735
    %v988 = vmul.f32 %v964, %v736
    %v989 = vmul.f32 %v965, %v737
    %v990 = vmul.f32 %v966, %v738
    %v991 = vmul.f32 %v967, %v739
    %v992 = vmul.f32 %v968, %v740
    %v993 = vmul.f32 %v969, %v741
    %v994 = vmul.f32 %v970, %v742
    %v995 = vmul.f32 %v971, %v743
    %v996 = vmul.f32 %v972, %v744
    %v997 = vadd.f32 %v697, %v973
    %v998 = vadd.f32 %v698, %v974
    %v999 = vadd.f32 %v699, %v975
    %v1000 = vadd.f32 %v700, %v976
    %v1001 = vadd.f32 %v701, %v977
    %v1002 = vadd.f32 %v702, %v978
    %v1003 = vadd.f32 %v703, %v979
    %v1004 = vadd.f32 %v704, %v980
    %v1005 = vadd.f32 %v705, %v981
    %v1006 = vadd.f32 %v706, %v982
    %v1007 = vadd.f32 %v707, %v983
    %v1008 = vadd.f32 %v708, %v984
    %v1009 = vadd.f32 %v709, %v985
    %v1010 = vadd.f32 %v710, %v986
    %v1011 = vadd.f32 %v711, %v987
    %v1012 = vadd.f32 %v712, %v988
    %v1013 = vadd.f32 %v713, %v989
    %v1014 = vadd.f32 %v714, %v990
    %v1015 = vadd.f32 %v715, %v991
    %v1016 = vadd.f32 %v716, %v992
    %v1017 = vadd.f32 %v717, %v993
    %v1018 = vadd.f32 %v718, %v994
    %v1019 = vadd.f32 %v719, %v995
    %v1020 = vadd.f32 %v720, %v996
    %v1021 = vld [vmem:[%s7] sm:$0xff]
    %v1022 = vld [vmem:[%s7 + $0x8] sm:$0xff]
    %v1023 = vld [vmem:[%s7 + $0x10] sm:$0xf]
    %v1024 = vld [vmem:[%s8] sm:$0xff]
    %v1025 = vld [vmem:[%s8 + $0x8] sm:$0xff]
    %v1026 = vld [vmem:[%s8 + $0x10] sm:$0xf]
    %1028 = vset.pattern.permute.xlu0 0
    %1029 = vperm.xlu0 %1028, %v1024
    %v1030 = vpop.permute.xlu0 %1029
    %1033 = vset.pattern.permute.xlu0 0
    %1034 = vperm.xlu0 %1033, %v1025
    %v1035 = vpop.permute.xlu0 %1034
    %1038 = vset.pattern.permute.xlu0 0
    %1039 = vperm.xlu0 %1038, %v1026
    %v1040 = vpop.permute.xlu0 %1039
    %vm1042 = vcmask 162816
    %v1044 = vsel %vm1042, %v1021, 0
    %v1047 = vsel %vm1042, %v1022, 0
    %v1050 = vsel %vm1042, %v1023, 0
    %vm1052 = vcmask 1043456
    %v1054 = vsel %vm1052, %v1013, 0
    %v1057 = vsel %vm1052, %v1014, 0
    %v1060 = vsel %vm1052, %v1015, 0
    %v1063 = vsel %vm1052, %v1016, 0
    %v1066 = vsel %vm1052, %v1017, 0
    %v1069 = vsel %vm1052, %v1018, 0
    %v1072 = vsel %vm1052, %v1019, 0
    %v1075 = vsel %vm1052, %v1020, 0
    %v1077 = vand.u32 %v998, 4294901760
    %1078 = vmatprep.subr.mxu0 %v1077
    %v1079 = vand.u32 %v997, 4294901760
    %1080 = vmatpush1.msra.mxu0 %v1079
    %v1081 = vand.u32 %v1006, 4294901760
    %1082 = vmatprep.subr.mxu0 %v1081
    %v1083 = vand.u32 %v1005, 4294901760
    %1084 = vmatpush1.msra.mxu0 %v1083
    %v1085 = vand.u32 %v1057, 4294901760
    %1086 = vmatprep.subr.mxu0 %v1085
    %v1087 = vand.u32 %v1054, 4294901760
    %1088 = vmatpush1.msra.mxu0 %v1087
    %1089 = vmatprep.subr.mxu0 0.0
    %1090 = vmatpush1.msra.mxu0 0.0
    %1091 = vmatprep.subr.mxu0 0.0
    %1092 = vmatpush1.msra.mxu0 0.0
    %1093 = vmatprep.subr.mxu0 0.0
    %1094 = vmatpush1.msra.mxu0 0.0
    %1095 = vmatprep.subr.mxu0 0.0
    %1096 = vmatpush1.msra.mxu0 0.0
    %1097 = vmatprep.subr.mxu0 0.0
    %1098 = vmatpush1.msra.mxu0 0.0
    %1099 = vmatprep.subr.mxu0 0.0
    %1100 = vmatpush1.msra.mxu0 0.0
    %1101 = vmatprep.subr.mxu0 0.0
    %1102 = vmatpush1.msra.mxu0 0.0
    %1103 = vmatprep.subr.mxu0 0.0
    %1104 = vmatpush1.msra.mxu0 0.0
    %1105 = vmatprep.subr.mxu0 0.0
    %1106 = vmatpush1.msra.mxu0 0.0
    %1107 = vmatprep.subr.mxu0 0.0
    %1108 = vmatpush1.msra.mxu0 0.0
    %1109 = vmatprep.subr.mxu0 0.0
    %1110 = vmatpush1.msra.mxu0 0.0
    %1111 = vmatprep.subr.mxu0 0.0
    %1112 = vmatpush1.msra.mxu0 0.0
    %1113 = vmatprep.subr.mxu0 0.0
    %1114 = vmatpush1.msra.mxu0 0.0
    %1115 = vmatprep.subr.mxu0 0.0
    %1116 = vmatpush1.msra.mxu0 0.0
    %1117 = vmatprep.subr.mxu0 0.0
    %1118 = vmatpush1.msra.mxu0 0.0
    %1119 = vmatprep.subr.mxu0 0.0
    %1120 = vmatpush1.msra.mxu0 0.0
    %1121 = vmatprep.subr.mxu0 0.0
    %1122 = vmatpush1.msra.mxu0 0.0
    %1123 = vmatprep.subr.mxu0 0.0
    %1124 = vmatpush1.msra.mxu0 0.0
    %1125 = vmatprep.subr.mxu0 0.0
    %1126 = vmatpush1.msra.mxu0 0.0
    %1127 = vmatprep.subr.mxu0 0.0
    %1128 = vmatpush1.msra.mxu0 0.0
    %1129 = vmatprep.subr.mxu0 0.0
    %1130 = vmatpush1.msra.mxu0 0.0
    %1131 = vmatprep.subr.mxu0 0.0
    %1132 = vmatpush1.msra.mxu0 0.0
    %1133 = vmatprep.subr.mxu0 0.0
    %1134 = vmatpush1.msra.mxu0 0.0
    %1135 = vmatprep.subr.mxu0 0.0
    %1136 = vmatpush1.msra.mxu0 0.0
    %1137 = vmatprep.subr.mxu0 0.0
    %1138 = vmatpush1.msra.mxu0 0.0
    %1139 = vmatprep.subr.mxu0 0.0
    %1140 = vmatpush1.msra.mxu0 0.0
    %1141 = vmatprep.subr.mxu0 0.0
    %1142 = vmatpush1.msra.mxu0 0.0
    %1143 = vmatprep.subr.mxu0 0.0
    %1144 = vmatpush1.msra.mxu0 0.0
    %1145 = vmatprep.subr.mxu0 0.0
    %1146 = vmatpush1.msra.mxu0 0.0
    %1147 = vmatprep.mubr.f32.mxu0 0.0
    %v1148 = vand.u32 %v1044, 4294901760
    %v1149 = vsub.f32 %v1044, %v1148
    %v1150 = vand.u32 %v1149, 4294901760
    %v1151 = vsub.f32 %v1149, %v1150
    %v1152 = vand.u32 %v1151, 4294901760
    %1153 = vmatmul.mubr.f32.gmra.mrb[0].mxu0 %v1152
    %v1154 = vpop.f32.mrb[0].mxu0
    %v1155 = vadd.f32 %v1030, %v1154
    %v1156 = vpop.f32.mrb[0].mxu0
    %v1157 = vadd.f32 %v1030, %v1156
    %1158 = vmatprep.mubr.f32.mxu0 0.0
    %v1159 = vand.u32 %v1047, 4294901760
    %v1160 = vsub.f32 %v1047, %v1159
    %v1161 = vand.u32 %v1160, 4294901760
    %v1162 = vsub.f32 %v1160, %v1161
    %v1163 = vand.u32 %v1162, 4294901760
    %1164 = vmatmul.mubr.f32.gmra.mrb[0].mxu0 %v1163
    %v1165 = vpop.f32.mrb[0].mxu0
    %v1166 = vadd.f32 %v1035, %v1165
    %v1167 = vpop.f32.mrb[0].mxu0
    %v1168 = vadd.f32 %v1035, %v1167
    %1169 = vmatprep.mubr.f32.mxu0 0.0
    %v1170 = vand.u32 %v1050, 4294901760
    %v1171 = vsub.f32 %v1050, %v1170
    %v1172 = vand.u32 %v1171, 4294901760
    %v1173 = vsub.f32 %v1171, %v1172
    %v1174 = vand.u32 %v1173, 4294901760
    %1175 = vmatmul.mubr.f32.gmra.mrb[0].mxu0 %v1174
    %v1176 = vpop.f32.mrb[0].mxu0
    %v1177 = vadd.f32 %v1040, %v1176
    %v1178 = vpop.f32.mrb[0].mxu0
    %v1179 = vadd.f32 %v1040, %v1178
    %1180 = vdwg.mxu0
    %v1181 = vand.u32 %v998, 4294901760
    %v1182 = vsub.f32 %v998, %v1181
    %v1183 = vand.u32 %v1182, 4294901760
    %v1184 = vsub.f32 %v1182, %v1183
    %v1185 = vand.u32 %v1184, 4294901760
    %1186 = vmatprep.subr.mxu0 %v1185
    %v1187 = vand.u32 %v997, 4294901760
    %v1188 = vsub.f32 %v997, %v1187
    %v1189 = vand.u32 %v1188, 4294901760
    %v1190 = vsub.f32 %v1188, %v1189
    %v1191 = vand.u32 %v1190, 4294901760
    %1192 = vmatpush1.msra.mxu0 %v1191
    %v1193 = vand.u32 %v1006, 4294901760
    %v1194 = vsub.f32 %v1006, %v1193
    %v1195 = vand.u32 %v1194, 4294901760
    %v1196 = vsub.f32 %v1194, %v1195
    %v1197 = vand.u32 %v1196, 4294901760
    %1198 = vmatprep.subr.mxu0 %v1197
    %v1199 = vand.u32 %v1005, 4294901760
    %v1200 = vsub.f32 %v1005, %v1199
    %v1201 = vand.u32 %v1200, 4294901760
    %v1202 = vsub.f32 %v1200, %v1201
    %v1203 = vand.u32 %v1202, 4294901760
    %1204 = vmatpush1.msra.mxu0 %v1203
    %v1205 = vand.u32 %v1057, 4294901760
    %v1206 = vsub.f32 %v1057, %v1205
    %v1207 = vand.u32 %v1206, 4294901760
    %v1208 = vsub.f32 %v1206, %v1207
    %v1209 = vand.u32 %v1208, 4294901760
    %1210 = vmatprep.subr.mxu0 %v1209
    %v1211 = vand.u32 %v1054, 4294901760
    %v1212 = vsub.f32 %v1054, %v1211
    %v1213 = vand.u32 %v1212, 4294901760
    %v1214 = vsub.f32 %v1212, %v1213
    %v1215 = vand.u32 %v1214, 4294901760
    %1216 = vmatpush1.msra.mxu0 %v1215
    %1217 = vmatprep.subr.mxu0 0.0
    %1218 = vmatpush1.msra.mxu0 0.0
    %1219 = vmatprep.subr.mxu0 0.0
    %1220 = vmatpush1.msra.mxu0 0.0
    %1221 = vmatprep.subr.mxu0 0.0
    %1222 = vmatpush1.msra.mxu0 0.0
    %1223 = vmatprep.subr.mxu0 0.0
    %1224 = vmatpush1.msra.mxu0 0.0
    %1225 = vmatprep.subr.mxu0 0.0
    %1226 = vmatpush1.msra.mxu0 0.0
    %1227 = vmatprep.subr.mxu0 0.0
    %1228 = vmatpush1.msra.mxu0 0.0
    %1229 = vmatprep.subr.mxu0 0.0
    %1230 = vmatpush1.msra.mxu0 0.0
    %1231 = vmatprep.subr.mxu0 0.0
    %1232 = vmatpush1.msra.mxu0 0.0
    %1233 = vmatprep.subr.mxu0 0.0
    %1234 = vmatpush1.msra.mxu0 0.0
    %1235 = vmatprep.subr.mxu0 0.0
    %1236 = vmatpush1.msra.mxu0 0.0
    %1237 = vmatprep.subr.mxu0 0.0
    %1238 = vmatpush1.msra.mxu0 0.0
    %1239 = vmatprep.subr.mxu0 0.0
    %1240 = vmatpush1.msra.mxu0 0.0
    %1241 = vmatprep.subr.mxu0 0.0
    %1242 = vmatpush1.msra.mxu0 0.0
    %1243 = vmatprep.subr.mxu0 0.0
    %1244 = vmatpush1.msra.mxu0 0.0
    %1245 = vmatprep.subr.mxu0 0.0
    %1246 = vmatpush1.msra.mxu0 0.0
    %1247 = vmatprep.subr.mxu0 0.0
    %1248 = vmatpush1.msra.mxu0 0.0
    %1249 = vmatprep.subr.mxu0 0.0
    %1250 = vmatpush1.msra.mxu0 0.0
    %1251 = vmatprep.subr.mxu0 0.0
    %1252 = vmatpush1.msra.mxu0 0.0
    %1253 = vmatprep.subr.mxu0 0.0
    %1254 = vmatpush1.msra.mxu0 0.0
    %1255 = vmatprep.subr.mxu0 0.0
    %1256 = vmatpush1.msra.mxu0 0.0
    %1257 = vmatprep.subr.mxu0 0.0
    %1258 = vmatpush1.msra.mxu0 0.0
    %1259 = vmatprep.subr.mxu0 0.0
    %1260 = vmatpush1.msra.mxu0 0.0
    %1261 = vmatprep.subr.mxu0 0.0
    %1262 = vmatpush1.msra.mxu0 0.0
    %1263 = vmatprep.subr.mxu0 0.0
    %1264 = vmatpush1.msra.mxu0 0.0
    %1265 = vmatprep.subr.mxu0 0.0
    %1266 = vmatpush1.msra.mxu0 0.0
    %1267 = vmatprep.subr.mxu0 0.0
    %1268 = vmatpush1.msra.mxu0 0.0
    %1269 = vmatprep.subr.mxu0 0.0
    %1270 = vmatpush1.msra.mxu0 0.0
    %1271 = vmatprep.subr.mxu0 0.0
    %1272 = vmatpush1.msra.mxu0 0.0
    %1273 = vmatprep.subr.mxu0 0.0
    %1274 = vmatpush1.msra.mxu0 0.0
    %1275 = vmatprep.mubr.f32.mxu0 0.0
    %v1276 = vand.u32 %v1044, 4294901760
    %1277 = vmatmul.mubr.f32.gmra.mrb[0].mxu0 %v1276
    %v1278 = vpop.f32.mrb[0].mxu0
    %v1279 = vadd.f32 %v1155, %v1278
    %v1280 = vpop.f32.mrb[0].mxu0
    %v1281 = vadd.f32 %v1157, %v1280
    %1282 = vmatprep.mubr.f32.mxu0 0.0
    %v1283 = vand.u32 %v1047, 4294901760
    %1284 = vmatmul.mubr.f32.gmra.mrb[0].mxu0 %v1283
    %v1285 = vpop.f32.mrb[0].mxu0
    %v1286 = vadd.f32 %v1166, %v1285
    %v1287 = vpop.f32.mrb[0].mxu0
    %v1288 = vadd.f32 %v1168, %v1287
    %1289 = vmatprep.mubr.f32.mxu0 0.0
    %v1290 = vand.u32 %v1050, 4294901760
    %1291 = vmatmul.mubr.f32.gmra.mrb[0].mxu0 %v1290
    %v1292 = vpop.f32.mrb[0].mxu0
    %v1293 = vadd.f32 %v1177, %v1292
    %v1294 = vpop.f32.mrb[0].mxu0
    %v1295 = vadd.f32 %v1179, %v1294
    %1296 = vdwg.mxu0
    %v1297 = vand.u32 %v998, 4294901760
    %v1298 = vsub.f32 %v998, %v1297
    %1299 = vmatprep.subr.mxu0 %v1298
    %v1300 = vand.u32 %v997, 4294901760
    %v1301 = vsub.f32 %v997, %v1300
    %1302 = vmatpush1.msra.mxu0 %v1301
    %v1303 = vand.u32 %v1006, 4294901760
    %v1304 = vsub.f32 %v1006, %v1303
    %1305 = vmatprep.subr.mxu0 %v1304
    %v1306 = vand.u32 %v1005, 4294901760
    %v1307 = vsub.f32 %v1005, %v1306
    %1308 = vmatpush1.msra.mxu0 %v1307
    %v1309 = vand.u32 %v1057, 4294901760
    %v1310 = vsub.f32 %v1057, %v1309
    %1311 = vmatprep.subr.mxu0 %v1310
    %v1312 = vand.u32 %v1054, 4294901760
    %v1313 = vsub.f32 %v1054, %v1312
    %1314 = vmatpush1.msra.mxu0 %v1313
    %1315 = vmatprep.subr.mxu0 0.0
    %1316 = vmatpush1.msra.mxu0 0.0
    %1317 = vmatprep.subr.mxu0 0.0
    %1318 = vmatpush1.msra.mxu0 0.0
    %1319 = vmatprep.subr.mxu0 0.0
    %1320 = vmatpush1.msra.mxu0 0.0
    %1321 = vmatprep.subr.mxu0 0.0
    %1322 = vmatpush1.msra.mxu0 0.0
    %1323 = vmatprep.subr.mxu0 0.0
    %1324 = vmatpush1.msra.mxu0 0.0
    %1325 = vmatprep.subr.mxu0 0.0
    %1326 = vmatpush1.msra.mxu0 0.0
    %1327 = vmatprep.subr.mxu0 0.0
    %1328 = vmatpush1.msra.mxu0 0.0
    %1329 = vmatprep.subr.mxu0 0.0
    %1330 = vmatpush1.msra.mxu0 0.0
    %1331 = vmatprep.subr.mxu0 0.0
    %1332 = vmatpush1.msra.mxu0 0.0
    %1333 = vmatprep.subr.mxu0 0.0
    %1334 = vmatpush1.msra.mxu0 0.0
    %1335 = vmatprep.subr.mxu0 0.0
    %1336 = vmatpush1.msra.mxu0 0.0
    %1337 = vmatprep.subr.mxu0 0.0
    %1338 = vmatpush1.msra.mxu0 0.0
    %1339 = vmatprep.subr.mxu0 0.0
    %1340 = vmatpush1.msra.mxu0 0.0
    %1341 = vmatprep.subr.mxu0 0.0
    %1342 = vmatpush1.msra.mxu0 0.0
    %1343 = vmatprep.subr.mxu0 0.0
    %1344 = vmatpush1.msra.mxu0 0.0
    %1345 = vmatprep.subr.mxu0 0.0
    %1346 = vmatpush1.msra.mxu0 0.0
    %1347 = vmatprep.subr.mxu0 0.0
    %1348 = vmatpush1.msra.mxu0 0.0
    %1349 = vmatprep.subr.mxu0 0.0
    %1350 = vmatpush1.msra.mxu0 0.0
    %1351 = vmatprep.subr.mxu0 0.0
    %1352 = vmatpush1.msra.mxu0 0.0
    %1353 = vmatprep.subr.mxu0 0.0
    %1354 = vmatpush1.msra.mxu0 0.0
    %1355 = vmatprep.subr.mxu0 0.0
    %1356 = vmatpush1.msra.mxu0 0.0
    %1357 = vmatprep.subr.mxu0 0.0
    %1358 = vmatpush1.msra.mxu0 0.0
    %1359 = vmatprep.subr.mxu0 0.0
    %1360 = vmatpush1.msra.mxu0 0.0
    %1361 = vmatprep.subr.mxu0 0.0
    %1362 = vmatpush1.msra.mxu0 0.0
    %1363 = vmatprep.subr.mxu0 0.0
    %1364 = vmatpush1.msra.mxu0 0.0
    %1365 = vmatprep.subr.mxu0 0.0
    %1366 = vmatpush1.msra.mxu0 0.0
    %1367 = vmatprep.subr.mxu0 0.0
    %1368 = vmatpush1.msra.mxu0 0.0
    %1369 = vmatprep.subr.mxu0 0.0
    %1370 = vmatpush1.msra.mxu0 0.0
    %1371 = vmatprep.subr.mxu0 0.0
    %1372 = vmatpush1.msra.mxu0 0.0
    %1373 = vmatprep.mubr.f32.mxu0 0.0
    %v1374 = vand.u32 %v1044, 4294901760
    %v1375 = vsub.f32 %v1044, %v1374
    %1376 = vmatmul.mubr.f32.gmra.mrb[0].mxu0 %v1375
    %v1377 = vpop.f32.mrb[0].mxu0
    %v1378 = vadd.f32 %v1279, %v1377
    %v1379 = vpop.f32.mrb[0].mxu0
    %v1380 = vadd.f32 %v1281, %v1379
    %1381 = vmatprep.mubr.f32.mxu0 0.0
    %v1382 = vand.u32 %v1047, 4294901760
    %v1383 = vsub.f32 %v1047, %v1382
    %1384 = vmatmul.mubr.f32.gmra.mrb[0].mxu0 %v1383
    %v1385 = vpop.f32.mrb[0].mxu0
    %v1386 = vadd.f32 %v1286, %v1385
    %v1387 = vpop.f32.mrb[0].mxu0
    %v1388 = vadd.f32 %v1288, %v1387
    %1389 = vmatprep.mubr.f32.mxu0 0.0
    %v1390 = vand.u32 %v1050, 4294901760
    %v1391 = vsub.f32 %v1050, %v1390
    %1392 = vmatmul.mubr.f32.gmra.mrb[0].mxu0 %v1391
    %v1393 = vpop.f32.mrb[0].mxu0
    %v1394 = vadd.f32 %v1293, %v1393
    %v1395 = vpop.f32.mrb[0].mxu0
    %v1396 = vadd.f32 %v1295, %v1395
    %1397 = vdwg.mxu0
    %v1398 = vand.u32 %v998, 4294901760
    %1399 = vmatprep.subr.mxu0 %v1398
    %v1400 = vand.u32 %v997, 4294901760
    %1401 = vmatpush1.msra.mxu0 %v1400
    %v1402 = vand.u32 %v1006, 4294901760
    %1403 = vmatprep.subr.mxu0 %v1402
    %v1404 = vand.u32 %v1005, 4294901760
    %1405 = vmatpush1.msra.mxu0 %v1404
    %v1406 = vand.u32 %v1057, 4294901760
    %1407 = vmatprep.subr.mxu0 %v1406
    %v1408 = vand.u32 %v1054, 4294901760
    %1409 = vmatpush1.msra.mxu0 %v1408
    %1410 = vmatprep.subr.mxu0 0.0
    %1411 = vmatpush1.msra.mxu0 0.0
    %1412 = vmatprep.subr.mxu0 0.0
    %1413 = vmatpush1.msra.mxu0 0.0
    %1414 = vmatprep.subr.mxu0 0.0
    %1415 = vmatpush1.msra.mxu0 0.0
    %1416 = vmatprep.subr.mxu0 0.0
    %1417 = vmatpush1.msra.mxu0 0.0
    %1418 = vmatprep.subr.mxu0 0.0
    %1419 = vmatpush1.msra.mxu0 0.0
    %1420 = vmatprep.subr.mxu0 0.0
    %1421 = vmatpush1.msra.mxu0 0.0
    %1422 = vmatprep.subr.mxu0 0.0
    %1423 = vmatpush1.msra.mxu0 0.0
    %1424 = vmatprep.subr.mxu0 0.0
    %1425 = vmatpush1.msra.mxu0 0.0
    %1426 = vmatprep.subr.mxu0 0.0
    %1427 = vmatpush1.msra.mxu0 0.0
    %1428 = vmatprep.subr.mxu0 0.0
    %1429 = vmatpush1.msra.mxu0 0.0
    %1430 = vmatprep.subr.mxu0 0.0
    %1431 = vmatpush1.msra.mxu0 0.0
    %1432 = vmatprep.subr.mxu0 0.0
    %1433 = vmatpush1.msra.mxu0 0.0
    %1434 = vmatprep.subr.mxu0 0.0
    %1435 = vmatpush1.msra.mxu0 0.0
    %1436 = vmatprep.subr.mxu0 0.0
    %1437 = vmatpush1.msra.mxu0 0.0
    %1438 = vmatprep.subr.mxu0 0.0
    %1439 = vmatpush1.msra.mxu0 0.0
    %1440 = vmatprep.subr.mxu0 0.0
    %1441 = vmatpush1.msra.mxu0 0.0
    %1442 = vmatprep.subr.mxu0 0.0
    %1443 = vmatpush1.msra.mxu0 0.0
    %1444 = vmatprep.subr.mxu0 0.0
    %1445 = vmatpush1.msra.mxu0 0.0
    %1446 = vmatprep.subr.mxu0 0.0
    %1447 = vmatpush1.msra.mxu0 0.0
    %1448 = vmatprep.subr.mxu0 0.0
    %1449 = vmatpush1.msra.mxu0 0.0
    %1450 = vmatprep.subr.mxu0 0.0
    %1451 = vmatpush1.msra.mxu0 0.0
    %1452 = vmatprep.subr.mxu0 0.0
    %1453 = vmatpush1.msra.mxu0 0.0
    %1454 = vmatprep.subr.mxu0 0.0
    %1455 = vmatpush1.msra.mxu0 0.0
    %1456 = vmatprep.subr.mxu0 0.0
    %1457 = vmatpush1.msra.mxu0 0.0
    %1458 = vmatprep.subr.mxu0 0.0
    %1459 = vmatpush1.msra.mxu0 0.0
    %1460 = vmatprep.subr.mxu0 0.0
    %1461 = vmatpush1.msra.mxu0 0.0
    %1462 = vmatprep.subr.mxu0 0.0
    %1463 = vmatpush1.msra.mxu0 0.0
    %1464 = vmatprep.subr.mxu0 0.0
    %1465 = vmatpush1.msra.mxu0 0.0
    %1466 = vmatprep.subr.mxu0 0.0
    %1467 = vmatpush1.msra.mxu0 0.0
    %1468 = vmatprep.mubr.f32.mxu0 0.0
    %v1469 = vand.u32 %v1044, 4294901760
    %v1470 = vsub.f32 %v1044, %v1469
    %v1471 = vand.u32 %v1470, 4294901760
    %1472 = vmatmul.mubr.f32.gmra.mrb[0].mxu0 %v1471
    %v1473 = vpop.f32.mrb[0].mxu0
    %v1474 = vadd.f32 %v1378, %v1473
    %v1475 = vpop.f32.mrb[0].mxu0
    %v1476 = vadd.f32 %v1380, %v1475
    %1477 = vmatprep.mubr.f32.mxu0 0.0
    %v1478 = vand.u32 %v1047, 4294901760
    %v1479 = vsub.f32 %v1047, %v1478
    %v1480 = vand.u32 %v1479, 4294901760
    %1481 = vmatmul.mubr.f32.gmra.mrb[0].mxu0 %v1480
    %v1482 = vpop.f32.mrb[0].mxu0
    %v1483 = vadd.f32 %v1386, %v1482
    %v1484 = vpop.f32.mrb[0].mxu0
    %v1485 = vadd.f32 %v1388, %v1484
    %1486 = vmatprep.mubr.f32.mxu0 0.0
    %v1487 = vand.u32 %v1050, 4294901760
    %v1488 = vsub.f32 %v1050, %v1487
    %v1489 = vand.u32 %v1488, 4294901760
    %1490 = vmatmul.mubr.f32.gmra.mrb[0].mxu0 %v1489
    %v1491 = vpop.f32.mrb[0].mxu0
    %v1492 = vadd.f32 %v1394, %v1491
    %v1493 = vpop.f32.mrb[0].mxu0
    %v1494 = vadd.f32 %v1396, %v1493
    %1495 = vdwg.mxu0
    %v1496 = vand.u32 %v998, 4294901760
    %v1497 = vsub.f32 %v998, %v1496
    %v1498 = vand.u32 %v1497, 4294901760
    %1499 = vmatprep.subr.mxu0 %v1498
    %v1500 = vand.u32 %v997, 4294901760
    %v1501 = vsub.f32 %v997, %v1500
    %v1502 = vand.u32 %v1501, 4294901760
    %1503 = vmatpush1.msra.mxu0 %v1502
    %v1504 = vand.u32 %v1006, 4294901760
    %v1505 = vsub.f32 %v1006, %v1504
    %v1506 = vand.u32 %v1505, 4294901760
    %1507 = vmatprep.subr.mxu0 %v1506
    %v1508 = vand.u32 %v1005, 4294901760
    %v1509 = vsub.f32 %v1005, %v1508
    %v1510 = vand.u32 %v1509, 4294901760
    %1511 = vmatpush1.msra.mxu0 %v1510
    %v1512 = vand.u32 %v1057, 4294901760
    %v1513 = vsub.f32 %v1057, %v1512
    %v1514 = vand.u32 %v1513, 4294901760
    %1515 = vmatprep.subr.mxu0 %v1514
    %v1516 = vand.u32 %v1054, 4294901760
    %v1517 = vsub.f32 %v1054, %v1516
    %v1518 = vand.u32 %v1517, 4294901760
    %1519 = vmatpush1.msra.mxu0 %v1518
    %1520 = vmatprep.subr.mxu0 0.0
    %1521 = vmatpush1.msra.mxu0 0.0
    %1522 = vmatprep.subr.mxu0 0.0
    %1523 = vmatpush1.msra.mxu0 0.0
    %1524 = vmatprep.subr.mxu0 0.0
    %1525 = vmatpush1.msra.mxu0 0.0
    %1526 = vmatprep.subr.mxu0 0.0
    %1527 = vmatpush1.msra.mxu0 0.0
    %1528 = vmatprep.subr.mxu0 0.0
    %1529 = vmatpush1.msra.mxu0 0.0
    %1530 = vmatprep.subr.mxu0 0.0
    %1531 = vmatpush1.msra.mxu0 0.0
    %1532 = vmatprep.subr.mxu0 0.0
    %1533 = vmatpush1.msra.mxu0 0.0
    %1534 = vmatprep.subr.mxu0 0.0
    %1535 = vmatpush1.msra.mxu0 0.0
    %1536 = vmatprep.subr.mxu0 0.0
    %1537 = vmatpush1.msra.mxu0 0.0
    %1538 = vmatprep.subr.mxu0 0.0
    %1539 = vmatpush1.msra.mxu0 0.0
    %1540 = vmatprep.subr.mxu0 0.0
    %1541 = vmatpush1.msra.mxu0 0.0
    %1542 = vmatprep.subr.mxu0 0.0
    %1543 = vmatpush1.msra.mxu0 0.0
    %1544 = vmatprep.subr.mxu0 0.0
    %1545 = vmatpush1.msra.mxu0 0.0
    %1546 = vmatprep.subr.mxu0 0.0
    %1547 = vmatpush1.msra.mxu0 0.0
    %1548 = vmatprep.subr.mxu0 0.0
    %1549 = vmatpush1.msra.mxu0 0.0
    %1550 = vmatprep.subr.mxu0 0.0
    %1551 = vmatpush1.msra.mxu0 0.0
    %1552 = vmatprep.subr.mxu0 0.0
    %1553 = vmatpush1.msra.mxu0 0.0
    %1554 = vmatprep.subr.mxu0 0.0
    %1555 = vmatpush1.msra.mxu0 0.0
    %1556 = vmatprep.subr.mxu0 0.0
    %1557 = vmatpush1.msra.mxu0 0.0
    %1558 = vmatprep.subr.mxu0 0.0
    %1559 = vmatpush1.msra.mxu0 0.0
    %1560 = vmatprep.subr.mxu0 0.0
    %1561 = vmatpush1.msra.mxu0 0.0
    %1562 = vmatprep.subr.mxu0 0.0
    %1563 = vmatpush1.msra.mxu0 0.0
    %1564 = vmatprep.subr.mxu0 0.0
    %1565 = vmatpush1.msra.mxu0 0.0
    %1566 = vmatprep.subr.mxu0 0.0
    %1567 = vmatpush1.msra.mxu0 0.0
    %1568 = vmatprep.subr.mxu0 0.0
    %1569 = vmatpush1.msra.mxu0 0.0
    %1570 = vmatprep.subr.mxu0 0.0
    %1571 = vmatpush1.msra.mxu0 0.0
    %1572 = vmatprep.subr.mxu0 0.0
    %1573 = vmatpush1.msra.mxu0 0.0
    %1574 = vmatprep.subr.mxu0 0.0
    %1575 = vmatpush1.msra.mxu0 0.0
    %1576 = vmatprep.subr.mxu0 0.0
    %1577 = vmatpush1.msra.mxu0 0.0
    %1578 = vmatprep.mubr.f32.mxu0 0.0
    %v1579 = vand.u32 %v1044, 4294901760
    %1580 = vmatmul.mubr.f32.gmra.mrb[0].mxu0 %v1579
    %v1581 = vpop.f32.mrb[0].mxu0
    %v1582 = vadd.f32 %v1474, %v1581
    %v1583 = vpop.f32.mrb[0].mxu0
    %v1584 = vadd.f32 %v1476, %v1583
    %1585 = vmatprep.mubr.f32.mxu0 0.0
    %v1586 = vand.u32 %v1047, 4294901760
    %1587 = vmatmul.mubr.f32.gmra.mrb[0].mxu0 %v1586
    %v1588 = vpop.f32.mrb[0].mxu0
    %v1589 = vadd.f32 %v1483, %v1588
    %v1590 = vpop.f32.mrb[0].mxu0
    %v1591 = vadd.f32 %v1485, %v1590
    %1592 = vmatprep.mubr.f32.mxu0 0.0
    %v1593 = vand.u32 %v1050, 4294901760
    %1594 = vmatmul.mubr.f32.gmra.mrb[0].mxu0 %v1593
    %v1595 = vpop.f32.mrb[0].mxu0
    %v1596 = vadd.f32 %v1492, %v1595
    %v1597 = vpop.f32.mrb[0].mxu0
    %v1598 = vadd.f32 %v1494, %v1597
    %1599 = vdwg.mxu0
    %v1600 = vand.u32 %v998, 4294901760
    %1601 = vmatprep.subr.mxu0 %v1600
    %v1602 = vand.u32 %v997, 4294901760
    %1603 = vmatpush1.msra.mxu0 %v1602
    %v1604 = vand.u32 %v1006, 4294901760
    %1605 = vmatprep.subr.mxu0 %v1604
    %v1606 = vand.u32 %v1005, 4294901760
    %1607 = vmatpush1.msra.mxu0 %v1606
    %v1608 = vand.u32 %v1057, 4294901760
    %1609 = vmatprep.subr.mxu0 %v1608
    %v1610 = vand.u32 %v1054, 4294901760
    %1611 = vmatpush1.msra.mxu0 %v1610
    %1612 = vmatprep.subr.mxu0 0.0
    %1613 = vmatpush1.msra.mxu0 0.0
    %1614 = vmatprep.subr.mxu0 0.0
    %1615 = vmatpush1.msra.mxu0 0.0
    %1616 = vmatprep.subr.mxu0 0.0
    %1617 = vmatpush1.msra.mxu0 0.0
    %1618 = vmatprep.subr.mxu0 0.0
    %1619 = vmatpush1.msra.mxu0 0.0
    %1620 = vmatprep.subr.mxu0 0.0
    %1621 = vmatpush1.msra.mxu0 0.0
    %1622 = vmatprep.subr.mxu0 0.0
    %1623 = vmatpush1.msra.mxu0 0.0
    %1624 = vmatprep.subr.mxu0 0.0
    %1625 = vmatpush1.msra.mxu0 0.0
    %1626 = vmatprep.subr.mxu0 0.0
    %1627 = vmatpush1.msra.mxu0 0.0
    %1628 = vmatprep.subr.mxu0 0.0
    %1629 = vmatpush1.msra.mxu0 0.0
    %1630 = vmatprep.subr.mxu0 0.0
    %1631 = vmatpush1.msra.mxu0 0.0
    %1632 = vmatprep.subr.mxu0 0.0
    %1633 = vmatpush1.msra.mxu0 0.0
    %1634 = vmatprep.subr.mxu0 0.0
    %1635 = vmatpush1.msra.mxu0 0.0
    %1636 = vmatprep.subr.mxu0 0.0
    %1637 = vmatpush1.msra.mxu0 0.0
    %1638 = vmatprep.subr.mxu0 0.0
    %1639 = vmatpush1.msra.mxu0 0.0
    %1640 = vmatprep.subr.mxu0 0.0
    %1641 = vmatpush1.msra.mxu0 0.0
    %1642 = vmatprep.subr.mxu0 0.0
    %1643 = vmatpush1.msra.mxu0 0.0
    %1644 = vmatprep.subr.mxu0 0.0
    %1645 = vmatpush1.msra.mxu0 0.0
    %1646 = vmatprep.subr.mxu0 0.0
    %1647 = vmatpush1.msra.mxu0 0.0
    %1648 = vmatprep.subr.mxu0 0.0
    %1649 = vmatpush1.msra.mxu0 0.0
    %1650 = vmatprep.subr.mxu0 0.0
    %1651 = vmatpush1.msra.mxu0 0.0
    %1652 = vmatprep.subr.mxu0 0.0
    %1653 = vmatpush1.msra.mxu0 0.0
    %1654 = vmatprep.subr.mxu0 0.0
    %1655 = vmatpush1.msra.mxu0 0.0
    %1656 = vmatprep.subr.mxu0 0.0
    %1657 = vmatpush1.msra.mxu0 0.0
    %1658 = vmatprep.subr.mxu0 0.0
    %1659 = vmatpush1.msra.mxu0 0.0
    %1660 = vmatprep.subr.mxu0 0.0
    %1661 = vmatpush1.msra.mxu0 0.0
    %1662 = vmatprep.subr.mxu0 0.0
    %1663 = vmatpush1.msra.mxu0 0.0
    %1664 = vmatprep.subr.mxu0 0.0
    %1665 = vmatpush1.msra.mxu0 0.0
    %1666 = vmatprep.subr.mxu0 0.0
    %1667 = vmatpush1.msra.mxu0 0.0
    %1668 = vmatprep.subr.mxu0 0.0
    %1669 = vmatpush1.msra.mxu0 0.0
    %1670 = vmatprep.mubr.f32.mxu0 0.0
    %v1671 = vand.u32 %v1044, 4294901760
    %1672 = vmatmul.mubr.f32.gmra.mrb[0].mxu0 %v1671
    %v1673 = vpop.f32.mrb[0].mxu0
    %v1674 = vadd.f32 %v1582, %v1673
    %v1675 = vpop.f32.mrb[0].mxu0
    %v1676 = vadd.f32 %v1584, %v1675
    %1677 = vmatprep.mubr.f32.mxu0 0.0
    %v1678 = vand.u32 %v1047, 4294901760
    %1679 = vmatmul.mubr.f32.gmra.mrb[0].mxu0 %v1678
    %v1680 = vpop.f32.mrb[0].mxu0
    %v1681 = vadd.f32 %v1589, %v1680
    %v1682 = vpop.f32.mrb[0].mxu0
    %v1683 = vadd.f32 %v1591, %v1682
    %1684 = vmatprep.mubr.f32.mxu0 0.0
    %v1685 = vand.u32 %v1050, 4294901760
    %1686 = vmatmul.mubr.f32.gmra.mrb[0].mxu0 %v1685
    %v1687 = vpop.f32.mrb[0].mxu0
    %v1688 = vadd.f32 %v1596, %v1687
    %v1689 = vpop.f32.mrb[0].mxu0
    %v1690 = vadd.f32 %v1598, %v1689
    %1691 = vdwg.mxu0
    %v1692 = vand.u32 %v1000, 4294901760
    %1693 = vmatprep.subr.mxu0 %v1692
    %v1694 = vand.u32 %v999, 4294901760
    %1695 = vmatpush1.msra.mxu0 %v1694
    %v1696 = vand.u32 %v1008, 4294901760
    %1697 = vmatprep.subr.mxu0 %v1696
    %v1698 = vand.u32 %v1007, 4294901760
    %1699 = vmatpush1.msra.mxu0 %v1698
    %v1700 = vand.u32 %v1063, 4294901760
    %1701 = vmatprep.subr.mxu0 %v1700
    %v1702 = vand.u32 %v1060, 4294901760
    %1703 = vmatpush1.msra.mxu0 %v1702
    %1704 = vmatprep.subr.mxu0 0.0
    %1705 = vmatpush1.msra.mxu0 0.0
    %1706 = vmatprep.subr.mxu0 0.0
    %1707 = vmatpush1.msra.mxu0 0.0
    %1708 = vmatprep.subr.mxu0 0.0
    %1709 = vmatpush1.msra.mxu0 0.0
    %1710 = vmatprep.subr.mxu0 0.0
    %1711 = vmatpush1.msra.mxu0 0.0
    %1712 = vmatprep.subr.mxu0 0.0
    %1713 = vmatpush1.msra.mxu0 0.0
    %1714 = vmatprep.subr.mxu0 0.0
    %1715 = vmatpush1.msra.mxu0 0.0
    %1716 = vmatprep.subr.mxu0 0.0
    %1717 = vmatpush1.msra.mxu0 0.0
    %1718 = vmatprep.subr.mxu0 0.0
    %1719 = vmatpush1.msra.mxu0 0.0
    %1720 = vmatprep.subr.mxu0 0.0
    %1721 = vmatpush1.msra.mxu0 0.0
    %1722 = vmatprep.subr.mxu0 0.0
    %1723 = vmatpush1.msra.mxu0 0.0
    %1724 = vmatprep.subr.mxu0 0.0
    %1725 = vmatpush1.msra.mxu0 0.0
    %1726 = vmatprep.subr.mxu0 0.0
    %1727 = vmatpush1.msra.mxu0 0.0
    %1728 = vmatprep.subr.mxu0 0.0
    %1729 = vmatpush1.msra.mxu0 0.0
    %1730 = vmatprep.subr.mxu0 0.0
    %1731 = vmatpush1.msra.mxu0 0.0
    %1732 = vmatprep.subr.mxu0 0.0
    %1733 = vmatpush1.msra.mxu0 0.0
    %1734 = vmatprep.subr.mxu0 0.0
    %1735 = vmatpush1.msra.mxu0 0.0
    %1736 = vmatprep.subr.mxu0 0.0
    %1737 = vmatpush1.msra.mxu0 0.0
    %1738 = vmatprep.subr.mxu0 0.0
    %1739 = vmatpush1.msra.mxu0 0.0
    %1740 = vmatprep.subr.mxu0 0.0
    %1741 = vmatpush1.msra.mxu0 0.0
    %1742 = vmatprep.subr.mxu0 0.0
    %1743 = vmatpush1.msra.mxu0 0.0
    %1744 = vmatprep.subr.mxu0 0.0
    %1745 = vmatpush1.msra.mxu0 0.0
    %1746 = vmatprep.subr.mxu0 0.0
    %1747 = vmatpush1.msra.mxu0 0.0
    %1748 = vmatprep.subr.mxu0 0.0
    %1749 = vmatpush1.msra.mxu0 0.0
    %1750 = vmatprep.subr.mxu0 0.0
    %1751 = vmatpush1.msra.mxu0 0.0
    %1752 = vmatprep.subr.mxu0 0.0
    %1753 = vmatpush1.msra.mxu0 0.0
    %1754 = vmatprep.subr.mxu0 0.0
    %1755 = vmatpush1.msra.mxu0 0.0
    %1756 = vmatprep.subr.mxu0 0.0
    %1757 = vmatpush1.msra.mxu0 0.0
    %1758 = vmatprep.subr.mxu0 0.0
    %1759 = vmatpush1.msra.mxu0 0.0
    %1760 = vmatprep.subr.mxu0 0.0
    %1761 = vmatpush1.msra.mxu0 0.0
    %1762 = vmatprep.mubr.f32.mxu0 0.0
    %v1763 = vand.u32 %v1044, 4294901760
    %v1764 = vsub.f32 %v1044, %v1763
    %v1765 = vand.u32 %v1764, 4294901760
    %v1766 = vsub.f32 %v1764, %v1765
    %v1767 = vand.u32 %v1766, 4294901760
    %1768 = vmatmul.mubr.f32.gmra.mrb[0].mxu0 %v1767
    %v1769 = vpop.f32.mrb[0].mxu0
    %v1770 = vadd.f32 %v1030, %v1769
    %v1771 = vpop.f32.mrb[0].mxu0
    %v1772 = vadd.f32 %v1030, %v1771
    %1773 = vmatprep.mubr.f32.mxu0 0.0
    %v1774 = vand.u32 %v1047, 4294901760
    %v1775 = vsub.f32 %v1047, %v1774
    %v1776 = vand.u32 %v1775, 4294901760
    %v1777 = vsub.f32 %v1775, %v1776
    %v1778 = vand.u32 %v1777, 4294901760
    %1779 = vmatmul.mubr.f32.gmra.mrb[0].mxu0 %v1778
    %v1780 = vpop.f32.mrb[0].mxu0
    %v1781 = vadd.f32 %v1035, %v1780
    %v1782 = vpop.f32.mrb[0].mxu0
    %v1783 = vadd.f32 %v1035, %v1782
    %1784 = vmatprep.mubr.f32.mxu0 0.0
    %v1785 = vand.u32 %v1050, 4294901760
    %v1786 = vsub.f32 %v1050, %v1785
    %v1787 = vand.u32 %v1786, 4294901760
    %v1788 = vsub.f32 %v1786, %v1787
    %v1789 = vand.u32 %v1788, 4294901760
    %1790 = vmatmul.mubr.f32.gmra.mrb[0].mxu0 %v1789
    %v1791 = vpop.f32.mrb[0].mxu0
    %v1792 = vadd.f32 %v1040, %v1791
    %v1793 = vpop.f32.mrb[0].mxu0
    %v1794 = vadd.f32 %v1040, %v1793
    %1795 = vdwg.mxu0
    %v1796 = vand.u32 %v1000, 4294901760
    %v1797 = vsub.f32 %v1000, %v1796
    %v1798 = vand.u32 %v1797, 4294901760
    %v1799 = vsub.f32 %v1797, %v1798
    %v1800 = vand.u32 %v1799, 4294901760
    %1801 = vmatprep.subr.mxu0 %v1800
    %v1802 = vand.u32 %v999, 4294901760
    %v1803 = vsub.f32 %v999, %v1802
    %v1804 = vand.u32 %v1803, 4294901760
    %v1805 = vsub.f32 %v1803, %v1804
    %v1806 = vand.u32 %v1805, 4294901760
    %1807 = vmatpush1.msra.mxu0 %v1806
    %v1808 = vand.u32 %v1008, 4294901760
    %v1809 = vsub.f32 %v1008, %v1808
    %v1810 = vand.u32 %v1809, 4294901760
    %v1811 = vsub.f32 %v1809, %v1810
    %v1812 = vand.u32 %v1811, 4294901760
    %1813 = vmatprep.subr.mxu0 %v1812
    %v1814 = vand.u32 %v1007, 4294901760
    %v1815 = vsub.f32 %v1007, %v1814
    %v1816 = vand.u32 %v1815, 4294901760
    %v1817 = vsub.f32 %v1815, %v1816
    %v1818 = vand.u32 %v1817, 4294901760
    %1819 = vmatpush1.msra.mxu0 %v1818
    %v1820 = vand.u32 %v1063, 4294901760
    %v1821 = vsub.f32 %v1063, %v1820
    %v1822 = vand.u32 %v1821, 4294901760
    %v1823 = vsub.f32 %v1821, %v1822
    %v1824 = vand.u32 %v1823, 4294901760
    %1825 = vmatprep.subr.mxu0 %v1824
    %v1826 = vand.u32 %v1060, 4294901760
    %v1827 = vsub.f32 %v1060, %v1826
    %v1828 = vand.u32 %v1827, 4294901760
    %v1829 = vsub.f32 %v1827, %v1828
    %v1830 = vand.u32 %v1829, 4294901760
    %1831 = vmatpush1.msra.mxu0 %v1830
    %1832 = vmatprep.subr.mxu0 0.0
    %1833 = vmatpush1.msra.mxu0 0.0
    %1834 = vmatprep.subr.mxu0 0.0
    %1835 = vmatpush1.msra.mxu0 0.0
    %1836 = vmatprep.subr.mxu0 0.0
    %1837 = vmatpush1.msra.mxu0 0.0
    %1838 = vmatprep.subr.mxu0 0.0
    %1839 = vmatpush1.msra.mxu0 0.0
    %1840 = vmatprep.subr.mxu0 0.0
    %1841 = vmatpush1.msra.mxu0 0.0
    %1842 = vmatprep.subr.mxu0 0.0
    %1843 = vmatpush1.msra.mxu0 0.0
    %1844 = vmatprep.subr.mxu0 0.0
    %1845 = vmatpush1.msra.mxu0 0.0
    %1846 = vmatprep.subr.mxu0 0.0
    %1847 = vmatpush1.msra.mxu0 0.0
    %1848 = vmatprep.subr.mxu0 0.0
    %1849 = vmatpush1.msra.mxu0 0.0
    %1850 = vmatprep.subr.mxu0 0.0
    %1851 = vmatpush1.msra.mxu0 0.0
    %1852 = vmatprep.subr.mxu0 0.0
    %1853 = vmatpush1.msra.mxu0 0.0
    %1854 = vmatprep.subr.mxu0 0.0
    %1855 = vmatpush1.msra.mxu0 0.0
    %1856 = vmatprep.subr.mxu0 0.0
    %1857 = vmatpush1.msra.mxu0 0.0
    %1858 = vmatprep.subr.mxu0 0.0
    %1859 = vmatpush1.msra.mxu0 0.0
    %1860 = vmatprep.subr.mxu0 0.0
    %1861 = vmatpush1.msra.mxu0 0.0
    %1862 = vmatprep.subr.mxu0 0.0
    %1863 = vmatpush1.msra.mxu0 0.0
    %1864 = vmatprep.subr.mxu0 0.0
    %1865 = vmatpush1.msra.mxu0 0.0
    %1866 = vmatprep.subr.mxu0 0.0
    %1867 = vmatpush1.msra.mxu0 0.0
    %1868 = vmatprep.subr.mxu0 0.0
    %1869 = vmatpush1.msra.mxu0 0.0
    %1870 = vmatprep.subr.mxu0 0.0
    %1871 = vmatpush1.msra.mxu0 0.0
    %1872 = vmatprep.subr.mxu0 0.0
    %1873 = vmatpush1.msra.mxu0 0.0
    %1874 = vmatprep.subr.mxu0 0.0
    %1875 = vmatpush1.msra.mxu0 0.0
    %1876 = vmatprep.subr.mxu0 0.0
    %1877 = vmatpush1.msra.mxu0 0.0
    %1878 = vmatprep.subr.mxu0 0.0
    %1879 = vmatpush1.msra.mxu0 0.0
    %1880 = vmatprep.subr.mxu0 0.0
    %1881 = vmatpush1.msra.mxu0 0.0
    %1882 = vmatprep.subr.mxu0 0.0
    %1883 = vmatpush1.msra.mxu0 0.0
    %1884 = vmatprep.subr.mxu0 0.0
    %1885 = vmatpush1.msra.mxu0 0.0
    %1886 = vmatprep.subr.mxu0 0.0
    %1887 = vmatpush1.msra.mxu0 0.0
    %1888 = vmatprep.subr.mxu0 0.0
    %1889 = vmatpush1.msra.mxu0 0.0
    %1890 = vmatprep.mubr.f32.mxu0 0.0
    %v1891 = vand.u32 %v1044, 4294901760
    %1892 = vmatmul.mubr.f32.gmra.mrb[0].mxu0 %v1891
    %v1893 = vpop.f32.mrb[0].mxu0
    %v1894 = vadd.f32 %v1770, %v1893
    %v1895 = vpop.f32.mrb[0].mxu0
    %v1896 = vadd.f32 %v1772, %v1895
    %1897 = vmatprep.mubr.f32.mxu0 0.0
    %v1898 = vand.u32 %v1047, 4294901760
    %1899 = vmatmul.mubr.f32.gmra.mrb[0].mxu0 %v1898
    %v1900 = vpop.f32.mrb[0].mxu0
    %v1901 = vadd.f32 %v1781, %v1900
    %v1902 = vpop.f32.mrb[0].mxu0
    %v1903 = vadd.f32 %v1783, %v1902
    %1904 = vmatprep.mubr.f32.mxu0 0.0
    %v1905 = vand.u32 %v1050, 4294901760
    %1906 = vmatmul.mubr.f32.gmra.mrb[0].mxu0 %v1905
    %v1907 = vpop.f32.mrb[0].mxu0
    %v1908 = vadd.f32 %v1792, %v1907
    %v1909 = vpop.f32.mrb[0].mxu0
    %v1910 = vadd.f32 %v1794, %v1909
    %1911 = vdwg.mxu0
    %v1912 = vand.u32 %v1000, 4294901760
    %v1913 = vsub.f32 %v1000, %v1912
    %1914 = vmatprep.subr.mxu0 %v1913
    %v1915 = vand.u32 %v999, 4294901760
    %v1916 = vsub.f32 %v999, %v1915
    %1917 = vmatpush1.msra.mxu0 %v1916
    %v1918 = vand.u32 %v1008, 4294901760
    %v1919 = vsub.f32 %v1008, %v1918
    %1920 = vmatprep.subr.mxu0 %v1919
    %v1921 = vand.u32 %v1007, 4294901760
    %v1922 = vsub.f32 %v1007, %v1921
    %1923 = vmatpush1.msra.mxu0 %v1922
    %v1924 = vand.u32 %v1063, 4294901760
    %v1925 = vsub.f32 %v1063, %v1924
    %1926 = vmatprep.subr.mxu0 %v1925
    %v1927 = vand.u32 %v1060, 4294901760
    %v1928 = vsub.f32 %v1060, %v1927
    %1929 = vmatpush1.msra.mxu0 %v1928
    %1930 = vmatprep.subr.mxu0 0.0
    %1931 = vmatpush1.msra.mxu0 0.0
    %1932 = vmatprep.subr.mxu0 0.0
    %1933 = vmatpush1.msra.mxu0 0.0
    %1934 = vmatprep.subr.mxu0 0.0
    %1935 = vmatpush1.msra.mxu0 0.0
    %1936 = vmatprep.subr.mxu0 0.0
    %1937 = vmatpush1.msra.mxu0 0.0
    %1938 = vmatprep.subr.mxu0 0.0
    %1939 = vmatpush1.msra.mxu0 0.0
    %1940 = vmatprep.subr.mxu0 0.0
    %1941 = vmatpush1.msra.mxu0 0.0
    %1942 = vmatprep.subr.mxu0 0.0
    %1943 = vmatpush1.msra.mxu0 0.0
    %1944 = vmatprep.subr.mxu0 0.0
    %1945 = vmatpush1.msra.mxu0 0.0
    %1946 = vmatprep.subr.mxu0 0.0
    %1947 = vmatpush1.msra.mxu0 0.0
    %1948 = vmatprep.subr.mxu0 0.0
    %1949 = vmatpush1.msra.mxu0 0.0
    %1950 = vmatprep.subr.mxu0 0.0
    %1951 = vmatpush1.msra.mxu0 0.0
    %1952 = vmatprep.subr.mxu0 0.0
    %1953 = vmatpush1.msra.mxu0 0.0
    %1954 = vmatprep.subr.mxu0 0.0
    %1955 = vmatpush1.msra.mxu0 0.0
    %1956 = vmatprep.subr.mxu0 0.0
    %1957 = vmatpush1.msra.mxu0 0.0
    %1958 = vmatprep.subr.mxu0 0.0
    %1959 = vmatpush1.msra.mxu0 0.0
    %1960 = vmatprep.subr.mxu0 0.0
    %1961 = vmatpush1.msra.mxu0 0.0
    %1962 = vmatprep.subr.mxu0 0.0
    %1963 = vmatpush1.msra.mxu0 0.0
    %1964 = vmatprep.subr.mxu0 0.0
    %1965 = vmatpush1.msra.mxu0 0.0
    %1966 = vmatprep.subr.mxu0 0.0
    %1967 = vmatpush1.msra.mxu0 0.0
    %1968 = vmatprep.subr.mxu0 0.0
    %1969 = vmatpush1.msra.mxu0 0.0
    %1970 = vmatprep.subr.mxu0 0.0
    %1971 = vmatpush1.msra.mxu0 0.0
    %1972 = vmatprep.subr.mxu0 0.0
    %1973 = vmatpush1.msra.mxu0 0.0
    %1974 = vmatprep.subr.mxu0 0.0
    %1975 = vmatpush1.msra.mxu0 0.0
    %1976 = vmatprep.subr.mxu0 0.0
    %1977 = vmatpush1.msra.mxu0 0.0
    %1978 = vmatprep.subr.mxu0 0.0
    %1979 = vmatpush1.msra.mxu0 0.0
    %1980 = vmatprep.subr.mxu0 0.0
    %1981 = vmatpush1.msra.mxu0 0.0
    %1982 = vmatprep.subr.mxu0 0.0
    %1983 = vmatpush1.msra.mxu0 0.0
    %1984 = vmatprep.subr.mxu0 0.0
    %1985 = vmatpush1.msra.mxu0 0.0
    %1986 = vmatprep.subr.mxu0 0.0
    %1987 = vmatpush1.msra.mxu0 0.0
    %1988 = vmatprep.mubr.f32.mxu0 0.0
    %v1989 = vand.u32 %v1044, 4294901760
    %v1990 = vsub.f32 %v1044, %v1989
    %1991 = vmatmul.mubr.f32.gmra.mrb[0].mxu0 %v1990
    %v1992 = vpop.f32.mrb[0].mxu0
    %v1993 = vadd.f32 %v1894, %v1992
    %v1994 = vpop.f32.mrb[0].mxu0
    %v1995 = vadd.f32 %v1896, %v1994
    %1996 = vmatprep.mubr.f32.mxu0 0.0
    %v1997 = vand.u32 %v1047, 4294901760
    %v1998 = vsub.f32 %v1047, %v1997
    %1999 = vmatmul.mubr.f32.gmra.mrb[0].mxu0 %v1998
    %v2000 = vpop.f32.mrb[0].mxu0
    %v2001 = vadd.f32 %v1901, %v2000
    %v2002 = vpop.f32.mrb[0].mxu0
    %v2003 = vadd.f32 %v1903, %v2002
    %2004 = vmatprep.mubr.f32.mxu0 0.0
    %v2005 = vand.u32 %v1050, 4294901760
    %v2006 = vsub.f32 %v1050, %v2005
    %2007 = vmatmul.mubr.f32.gmra.mrb[0].mxu0 %v2006
    %v2008 = vpop.f32.mrb[0].mxu0
    %v2009 = vadd.f32 %v1908, %v2008
    %v2010 = vpop.f32.mrb[0].mxu0
    %v2011 = vadd.f32 %v1910, %v2010
    %2012 = vdwg.mxu0
    %v2013 = vand.u32 %v1000, 4294901760
    %2014 = vmatprep.subr.mxu0 %v2013
    %v2015 = vand.u32 %v999, 4294901760
    %2016 = vmatpush1.msra.mxu0 %v2015
    %v2017 = vand.u32 %v1008, 4294901760
    %2018 = vmatprep.subr.mxu0 %v2017
    %v2019 = vand.u32 %v1007, 4294901760
    %2020 = vmatpush1.msra.mxu0 %v2019
    %v2021 = vand.u32 %v1063, 4294901760
    %2022 = vmatprep.subr.mxu0 %v2021
    %v2023 = vand.u32 %v1060, 4294901760
    %2024 = vmatpush1.msra.mxu0 %v2023
    %2025 = vmatprep.subr.mxu0 0.0
    %2026 = vmatpush1.msra.mxu0 0.0
    %2027 = vmatprep.subr.mxu0 0.0
    %2028 = vmatpush1.msra.mxu0 0.0
    %2029 = vmatprep.subr.mxu0 0.0
    %2030 = vmatpush1.msra.mxu0 0.0
    %2031 = vmatprep.subr.mxu0 0.0
    %2032 = vmatpush1.msra.mxu0 0.0
    %2033 = vmatprep.subr.mxu0 0.0
    %2034 = vmatpush1.msra.mxu0 0.0
    %2035 = vmatprep.subr.mxu0 0.0
    %2036 = vmatpush1.msra.mxu0 0.0
    %2037 = vmatprep.subr.mxu0 0.0
    %2038 = vmatpush1.msra.mxu0 0.0
    %2039 = vmatprep.subr.mxu0 0.0
    %2040 = vmatpush1.msra.mxu0 0.0
    %2041 = vmatprep.subr.mxu0 0.0
    %2042 = vmatpush1.msra.mxu0 0.0
    %2043 = vmatprep.subr.mxu0 0.0
    %2044 = vmatpush1.msra.mxu0 0.0
    %2045 = vmatprep.subr.mxu0 0.0
    %2046 = vmatpush1.msra.mxu0 0.0
    %2047 = vmatprep.subr.mxu0 0.0
    %2048 = vmatpush1.msra.mxu0 0.0
    %2049 = vmatprep.subr.mxu0 0.0
    %2050 = vmatpush1.msra.mxu0 0.0
    %2051 = vmatprep.subr.mxu0 0.0
    %2052 = vmatpush1.msra.mxu0 0.0
    %2053 = vmatprep.subr.mxu0 0.0
    %2054 = vmatpush1.msra.mxu0 0.0
    %2055 = vmatprep.subr.mxu0 0.0
    %2056 = vmatpush1.msra.mxu0 0.0
    %2057 = vmatprep.subr.mxu0 0.0
    %2058 = vmatpush1.msra.mxu0 0.0
    %2059 = vmatprep.subr.mxu0 0.0
    %2060 = vmatpush1.msra.mxu0 0.0
    %2061 = vmatprep.subr.mxu0 0.0
    %2062 = vmatpush1.msra.mxu0 0.0
    %2063 = vmatprep.subr.mxu0 0.0
    %2064 = vmatpush1.msra.mxu0 0.0
    %2065 = vmatprep.subr.mxu0 0.0
    %2066 = vmatpush1.msra.mxu0 0.0
    %2067 = vmatprep.subr.mxu0 0.0
    %2068 = vmatpush1.msra.mxu0 0.0
    %2069 = vmatprep.subr.mxu0 0.0
    %2070 = vmatpush1.msra.mxu0 0.0
    %2071 = vmatprep.subr.mxu0 0.0
    %2072 = vmatpush1.msra.mxu0 0.0
    %2073 = vmatprep.subr.mxu0 0.0
    %2074 = vmatpush1.msra.mxu0 0.0
    %2075 = vmatprep.subr.mxu0 0.0
    %2076 = vmatpush1.msra.mxu0 0.0
    %2077 = vmatprep.subr.mxu0 0.0
    %2078 = vmatpush1.msra.mxu0 0.0
    %2079 = vmatprep.subr.mxu0 0.0
    %2080 = vmatpush1.msra.mxu0 0.0
    %2081 = vmatprep.subr.mxu0 0.0
    %2082 = vmatpush1.msra.mxu0 0.0
    %2083 = vmatprep.mubr.f32.mxu0 0.0
    %v2084 = vand.u32 %v1044, 4294901760
    %v2085 = vsub.f32 %v1044, %v2084
    %v2086 = vand.u32 %v2085, 4294901760
    %2087 = vmatmul.mubr.f32.gmra.mrb[0].mxu0 %v2086
    %v2088 = vpop.f32.mrb[0].mxu0
    %v2089 = vadd.f32 %v1993, %v2088
    %v2090 = vpop.f32.mrb[0].mxu0
    %v2091 = vadd.f32 %v1995, %v2090
    %2092 = vmatprep.mubr.f32.mxu0 0.0
    %v2093 = vand.u32 %v1047, 4294901760
    %v2094 = vsub.f32 %v1047, %v2093
    %v2095 = vand.u32 %v2094, 4294901760
    %2096 = vmatmul.mubr.f32.gmra.mrb[0].mxu0 %v2095
    %v2097 = vpop.f32.mrb[0].mxu0
    %v2098 = vadd.f32 %v2001, %v2097
    %v2099 = vpop.f32.mrb[0].mxu0
    %v2100 = vadd.f32 %v2003, %v2099
    %2101 = vmatprep.mubr.f32.mxu0 0.0
    %v2102 = vand.u32 %v1050, 4294901760
    %v2103 = vsub.f32 %v1050, %v2102
    %v2104 = vand.u32 %v2103, 4294901760
    %2105 = vmatmul.mubr.f32.gmra.mrb[0].mxu0 %v2104
    %v2106 = vpop.f32.mrb[0].mxu0
    %v2107 = vadd.f32 %v2009, %v2106
    %v2108 = vpop.f32.mrb[0].mxu0
    %v2109 = vadd.f32 %v2011, %v2108
    %2110 = vdwg.mxu0
    %v2111 = vand.u32 %v1000, 4294901760
    %v2112 = vsub.f32 %v1000, %v2111
    %v2113 = vand.u32 %v2112, 4294901760
    %2114 = vmatprep.subr.mxu0 %v2113
    %v2115 = vand.u32 %v999, 4294901760
    %v2116 = vsub.f32 %v999, %v2115
    %v2117 = vand.u32 %v2116, 4294901760
    %2118 = vmatpush1.msra.mxu0 %v2117
    %v2119 = vand.u32 %v1008, 4294901760
    %v2120 = vsub.f32 %v1008, %v2119
    %v2121 = vand.u32 %v2120, 4294901760
    %2122 = vmatprep.subr.mxu0 %v2121
    %v2123 = vand.u32 %v1007, 4294901760
    %v2124 = vsub.f32 %v1007, %v2123
    %v2125 = vand.u32 %v2124, 4294901760
    %2126 = vmatpush1.msra.mxu0 %v2125
    %v2127 = vand.u32 %v1063, 4294901760
    %v2128 = vsub.f32 %v1063, %v2127
    %v2129 = vand.u32 %v2128, 4294901760
    %2130 = vmatprep.subr.mxu0 %v2129
    %v2131 = vand.u32 %v1060, 4294901760
    %v2132 = vsub.f32 %v1060, %v2131
    %v2133 = vand.u32 %v2132, 4294901760
    %2134 = vmatpush1.msra.mxu0 %v2133
    %2135 = vmatprep.subr.mxu0 0.0
    %2136 = vmatpush1.msra.mxu0 0.0
    %2137 = vmatprep.subr.mxu0 0.0
    %2138 = vmatpush1.msra.mxu0 0.0
    %2139 = vmatprep.subr.mxu0 0.0
    %2140 = vmatpush1.msra.mxu0 0.0
    %2141 = vmatprep.subr.mxu0 0.0
    %2142 = vmatpush1.msra.mxu0 0.0
    %2143 = vmatprep.subr.mxu0 0.0
    %2144 = vmatpush1.msra.mxu0 0.0
    %2145 = vmatprep.subr.mxu0 0.0
    %2146 = vmatpush1.msra.mxu0 0.0
    %2147 = vmatprep.subr.mxu0 0.0
    %2148 = vmatpush1.msra.mxu0 0.0
    %2149 = vmatprep.subr.mxu0 0.0
    %2150 = vmatpush1.msra.mxu0 0.0
    %2151 = vmatprep.subr.mxu0 0.0
    %2152 = vmatpush1.msra.mxu0 0.0
    %2153 = vmatprep.subr.mxu0 0.0
    %2154 = vmatpush1.msra.mxu0 0.0
    %2155 = vmatprep.subr.mxu0 0.0
    %2156 = vmatpush1.msra.mxu0 0.0
    %2157 = vmatprep.subr.mxu0 0.0
    %2158 = vmatpush1.msra.mxu0 0.0
    %2159 = vmatprep.subr.mxu0 0.0
    %2160 = vmatpush1.msra.mxu0 0.0
    %2161 = vmatprep.subr.mxu0 0.0
    %2162 = vmatpush1.msra.mxu0 0.0
    %2163 = vmatprep.subr.mxu0 0.0
    %2164 = vmatpush1.msra.mxu0 0.0
    %2165 = vmatprep.subr.mxu0 0.0
    %2166 = vmatpush1.msra.mxu0 0.0
    %2167 = vmatprep.subr.mxu0 0.0
    %2168 = vmatpush1.msra.mxu0 0.0
    %2169 = vmatprep.subr.mxu0 0.0
    %2170 = vmatpush1.msra.mxu0 0.0
    %2171 = vmatprep.subr.mxu0 0.0
    %2172 = vmatpush1.msra.mxu0 0.0
    %2173 = vmatprep.subr.mxu0 0.0
    %2174 = vmatpush1.msra.mxu0 0.0
    %2175 = vmatprep.subr.mxu0 0.0
    %2176 = vmatpush1.msra.mxu0 0.0
    %2177 = vmatprep.subr.mxu0 0.0
    %2178 = vmatpush1.msra.mxu0 0.0
    %2179 = vmatprep.subr.mxu0 0.0
    %2180 = vmatpush1.msra.mxu0 0.0
    %2181 = vmatprep.subr.mxu0 0.0
    %2182 = vmatpush1.msra.mxu0 0.0
    %2183 = vmatprep.subr.mxu0 0.0
    %2184 = vmatpush1.msra.mxu0 0.0
    %2185 = vmatprep.subr.mxu0 0.0
    %2186 = vmatpush1.msra.mxu0 0.0
    %2187 = vmatprep.subr.mxu0 0.0
    %2188 = vmatpush1.msra.mxu0 0.0
    %2189 = vmatprep.subr.mxu0 0.0
    %2190 = vmatpush1.msra.mxu0 0.0
    %2191 = vmatprep.subr.mxu0 0.0
    %2192 = vmatpush1.msra.mxu0 0.0
    %2193 = vmatprep.mubr.f32.mxu0 0.0
    %v2194 = vand.u32 %v1044, 4294901760
    %2195 = vmatmul.mubr.f32.gmra.mrb[0].mxu0 %v2194
    %v2196 = vpop.f32.mrb[0].mxu0
    %v2197 = vadd.f32 %v2089, %v2196
    %v2198 = vpop.f32.mrb[0].mxu0
    %v2199 = vadd.f32 %v2091, %v2198
    %2200 = vmatprep.mubr.f32.mxu0 0.0
    %v2201 = vand.u32 %v1047, 4294901760
    %2202 = vmatmul.mubr.f32.gmra.mrb[0].mxu0 %v2201
    %v2203 = vpop.f32.mrb[0].mxu0
    %v2204 = vadd.f32 %v2098, %v2203
    %v2205 = vpop.f32.mrb[0].mxu0
    %v2206 = vadd.f32 %v2100, %v2205
    %2207 = vmatprep.mubr.f32.mxu0 0.0
    %v2208 = vand.u32 %v1050, 4294901760
    %2209 = vmatmul.mubr.f32.gmra.mrb[0].mxu0 %v2208
    %v2210 = vpop.f32.mrb[0].mxu0
    %v2211 = vadd.f32 %v2107, %v2210
    %v2212 = vpop.f32.mrb[0].mxu0
    %v2213 = vadd.f32 %v2109, %v2212
    %2214 = vdwg.mxu0
    %v2215 = vand.u32 %v1000, 4294901760
    %2216 = vmatprep.subr.mxu0 %v2215
    %v2217 = vand.u32 %v999, 4294901760
    %2218 = vmatpush1.msra.mxu0 %v2217
    %v2219 = vand.u32 %v1008, 4294901760
    %2220 = vmatprep.subr.mxu0 %v2219
    %v2221 = vand.u32 %v1007, 4294901760
    %2222 = vmatpush1.msra.mxu0 %v2221
    %v2223 = vand.u32 %v1063, 4294901760
    %2224 = vmatprep.subr.mxu0 %v2223
    %v2225 = vand.u32 %v1060, 4294901760
    %2226 = vmatpush1.msra.mxu0 %v2225
    %2227 = vmatprep.subr.mxu0 0.0
    %2228 = vmatpush1.msra.mxu0 0.0
    %2229 = vmatprep.subr.mxu0 0.0
    %2230 = vmatpush1.msra.mxu0 0.0
    %2231 = vmatprep.subr.mxu0 0.0
    %2232 = vmatpush1.msra.mxu0 0.0
    %2233 = vmatprep.subr.mxu0 0.0
    %2234 = vmatpush1.msra.mxu0 0.0
    %2235 = vmatprep.subr.mxu0 0.0
    %2236 = vmatpush1.msra.mxu0 0.0
    %2237 = vmatprep.subr.mxu0 0.0
    %2238 = vmatpush1.msra.mxu0 0.0
    %2239 = vmatprep.subr.mxu0 0.0
    %2240 = vmatpush1.msra.mxu0 0.0
    %2241 = vmatprep.subr.mxu0 0.0
    %2242 = vmatpush1.msra.mxu0 0.0
    %2243 = vmatprep.subr.mxu0 0.0
    %2244 = vmatpush1.msra.mxu0 0.0
    %2245 = vmatprep.subr.mxu0 0.0
    %2246 = vmatpush1.msra.mxu0 0.0
    %2247 = vmatprep.subr.mxu0 0.0
    %2248 = vmatpush1.msra.mxu0 0.0
    %2249 = vmatprep.subr.mxu0 0.0
    %2250 = vmatpush1.msra.mxu0 0.0
    %2251 = vmatprep.subr.mxu0 0.0
    %2252 = vmatpush1.msra.mxu0 0.0
    %2253 = vmatprep.subr.mxu0 0.0
    %2254 = vmatpush1.msra.mxu0 0.0
    %2255 = vmatprep.subr.mxu0 0.0
    %2256 = vmatpush1.msra.mxu0 0.0
    %2257 = vmatprep.subr.mxu0 0.0
    %2258 = vmatpush1.msra.mxu0 0.0
    %2259 = vmatprep.subr.mxu0 0.0
    %2260 = vmatpush1.msra.mxu0 0.0
    %2261 = vmatprep.subr.mxu0 0.0
    %2262 = vmatpush1.msra.mxu0 0.0
    %2263 = vmatprep.subr.mxu0 0.0
    %2264 = vmatpush1.msra.mxu0 0.0
    %2265 = vmatprep.subr.mxu0 0.0
    %2266 = vmatpush1.msra.mxu0 0.0
    %2267 = vmatprep.subr.mxu0 0.0
    %2268 = vmatpush1.msra.mxu0 0.0
    %2269 = vmatprep.subr.mxu0 0.0
    %2270 = vmatpush1.msra.mxu0 0.0
    %2271 = vmatprep.subr.mxu0 0.0
    %2272 = vmatpush1.msra.mxu0 0.0
    %2273 = vmatprep.subr.mxu0 0.0
    %2274 = vmatpush1.msra.mxu0 0.0
    %2275 = vmatprep.subr.mxu0 0.0
    %2276 = vmatpush1.msra.mxu0 0.0
    %2277 = vmatprep.subr.mxu0 0.0
    %2278 = vmatpush1.msra.mxu0 0.0
    %2279 = vmatprep.subr.mxu0 0.0
    %2280 = vmatpush1.msra.mxu0 0.0
    %2281 = vmatprep.subr.mxu0 0.0
    %2282 = vmatpush1.msra.mxu0 0.0
    %2283 = vmatprep.subr.mxu0 0.0
    %2284 = vmatpush1.msra.mxu0 0.0
    %2285 = vmatprep.mubr.f32.mxu0 0.0
    %v2286 = vand.u32 %v1044, 4294901760
    %2287 = vmatmul.mubr.f32.gmra.mrb[0].mxu0 %v2286
    %v2288 = vpop.f32.mrb[0].mxu0
    %v2289 = vadd.f32 %v2197, %v2288
    %v2290 = vpop.f32.mrb[0].mxu0
    %v2291 = vadd.f32 %v2199, %v2290
    %2292 = vmatprep.mubr.f32.mxu0 0.0
    %v2293 = vand.u32 %v1047, 4294901760
    %2294 = vmatmul.mubr.f32.gmra.mrb[0].mxu0 %v2293
    %v2295 = vpop.f32.mrb[0].mxu0
    %v2296 = vadd.f32 %v2204, %v2295
    %v2297 = vpop.f32.mrb[0].mxu0
    %v2298 = vadd.f32 %v2206, %v2297
    %2299 = vmatprep.mubr.f32.mxu0 0.0
    %v2300 = vand.u32 %v1050, 4294901760
    %2301 = vmatmul.mubr.f32.gmra.mrb[0].mxu0 %v2300
    %v2302 = vpop.f32.mrb[0].mxu0
    %v2303 = vadd.f32 %v2211, %v2302
    %v2304 = vpop.f32.mrb[0].mxu0
    %v2305 = vadd.f32 %v2213, %v2304
    %2306 = vdwg.mxu0
    %v2307 = vand.u32 %v1002, 4294901760
    %2308 = vmatprep.subr.mxu0 %v2307
    %v2309 = vand.u32 %v1001, 4294901760
    %2310 = vmatpush1.msra.mxu0 %v2309
    %v2311 = vand.u32 %v1010, 4294901760
    %2312 = vmatprep.subr.mxu0 %v2311
    %v2313 = vand.u32 %v1009, 4294901760
    %2314 = vmatpush1.msra.mxu0 %v2313
    %v2315 = vand.u32 %v1069, 4294901760
    %2316 = vmatprep.subr.mxu0 %v2315
    %v2317 = vand.u32 %v1066, 4294901760
    %2318 = vmatpush1.msra.mxu0 %v2317
    %2319 = vmatprep.subr.mxu0 0.0
    %2320 = vmatpush1.msra.mxu0 0.0
    %2321 = vmatprep.subr.mxu0 0.0
    %2322 = vmatpush1.msra.mxu0 0.0
    %2323 = vmatprep.subr.mxu0 0.0
    %2324 = vmatpush1.msra.mxu0 0.0
    %2325 = vmatprep.subr.mxu0 0.0
    %2326 = vmatpush1.msra.mxu0 0.0
    %2327 = vmatprep.subr.mxu0 0.0
    %2328 = vmatpush1.msra.mxu0 0.0
    %2329 = vmatprep.subr.mxu0 0.0
    %2330 = vmatpush1.msra.mxu0 0.0
    %2331 = vmatprep.subr.mxu0 0.0
    %2332 = vmatpush1.msra.mxu0 0.0
    %2333 = vmatprep.subr.mxu0 0.0
    %2334 = vmatpush1.msra.mxu0 0.0
    %2335 = vmatprep.subr.mxu0 0.0
    %2336 = vmatpush1.msra.mxu0 0.0
    %2337 = vmatprep.subr.mxu0 0.0
    %2338 = vmatpush1.msra.mxu0 0.0
    %2339 = vmatprep.subr.mxu0 0.0
    %2340 = vmatpush1.msra.mxu0 0.0
    %2341 = vmatprep.subr.mxu0 0.0
    %2342 = vmatpush1.msra.mxu0 0.0
    %2343 = vmatprep.subr.mxu0 0.0
    %2344 = vmatpush1.msra.mxu0 0.0
    %2345 = vmatprep.subr.mxu0 0.0
    %2346 = vmatpush1.msra.mxu0 0.0
    %2347 = vmatprep.subr.mxu0 0.0
    %2348 = vmatpush1.msra.mxu0 0.0
    %2349 = vmatprep.subr.mxu0 0.0
    %2350 = vmatpush1.msra.mxu0 0.0
    %2351 = vmatprep.subr.mxu0 0.0
    %2352 = vmatpush1.msra.mxu0 0.0
    %2353 = vmatprep.subr.mxu0 0.0
    %2354 = vmatpush1.msra.mxu0 0.0
    %2355 = vmatprep.subr.mxu0 0.0
    %2356 = vmatpush1.msra.mxu0 0.0
    %2357 = vmatprep.subr.mxu0 0.0
    %2358 = vmatpush1.msra.mxu0 0.0
    %2359 = vmatprep.subr.mxu0 0.0
    %2360 = vmatpush1.msra.mxu0 0.0
    %2361 = vmatprep.subr.mxu0 0.0
    %2362 = vmatpush1.msra.mxu0 0.0
    %2363 = vmatprep.subr.mxu0 0.0
    %2364 = vmatpush1.msra.mxu0 0.0
    %2365 = vmatprep.subr.mxu0 0.0
    %2366 = vmatpush1.msra.mxu0 0.0
    %2367 = vmatprep.subr.mxu0 0.0
    %2368 = vmatpush1.msra.mxu0 0.0
    %2369 = vmatprep.subr.mxu0 0.0
    %2370 = vmatpush1.msra.mxu0 0.0
    %2371 = vmatprep.subr.mxu0 0.0
    %2372 = vmatpush1.msra.mxu0 0.0
    %2373 = vmatprep.subr.mxu0 0.0
    %2374 = vmatpush1.msra.mxu0 0.0
    %2375 = vmatprep.subr.mxu0 0.0
    %2376 = vmatpush1.msra.mxu0 0.0
    %2377 = vmatprep.mubr.f32.mxu0 0.0
    %v2378 = vand.u32 %v1044, 4294901760
    %v2379 = vsub.f32 %v1044, %v2378
    %v2380 = vand.u32 %v2379, 4294901760
    %v2381 = vsub.f32 %v2379, %v2380
    %v2382 = vand.u32 %v2381, 4294901760
    %2383 = vmatmul.mubr.f32.gmra.mrb[0].mxu0 %v2382
    %v2384 = vpop.f32.mrb[0].mxu0
    %v2385 = vadd.f32 %v1030, %v2384
    %v2386 = vpop.f32.mrb[0].mxu0
    %v2387 = vadd.f32 %v1030, %v2386
    %2388 = vmatprep.mubr.f32.mxu0 0.0
    %v2389 = vand.u32 %v1047, 4294901760
    %v2390 = vsub.f32 %v1047, %v2389
    %v2391 = vand.u32 %v2390, 4294901760
    %v2392 = vsub.f32 %v2390, %v2391
    %v2393 = vand.u32 %v2392, 4294901760
    %2394 = vmatmul.mubr.f32.gmra.mrb[0].mxu0 %v2393
    %v2395 = vpop.f32.mrb[0].mxu0
    %v2396 = vadd.f32 %v1035, %v2395
    %v2397 = vpop.f32.mrb[0].mxu0
    %v2398 = vadd.f32 %v1035, %v2397
    %2399 = vmatprep.mubr.f32.mxu0 0.0
    %v2400 = vand.u32 %v1050, 4294901760
    %v2401 = vsub.f32 %v1050, %v2400
    %v2402 = vand.u32 %v2401, 4294901760
    %v2403 = vsub.f32 %v2401, %v2402
    %v2404 = vand.u32 %v2403, 4294901760
    %2405 = vmatmul.mubr.f32.gmra.mrb[0].mxu0 %v2404
    %v2406 = vpop.f32.mrb[0].mxu0
    %v2407 = vadd.f32 %v1040, %v2406
    %v2408 = vpop.f32.mrb[0].mxu0
    %v2409 = vadd.f32 %v1040, %v2408
    %2410 = vdwg.mxu0
    %v2411 = vand.u32 %v1002, 4294901760
    %v2412 = vsub.f32 %v1002, %v2411
    %v2413 = vand.u32 %v2412, 4294901760
    %v2414 = vsub.f32 %v2412, %v2413
    %v2415 = vand.u32 %v2414, 4294901760
    %2416 = vmatprep.subr.mxu0 %v2415
    %v2417 = vand.u32 %v1001, 4294901760
    %v2418 = vsub.f32 %v1001, %v2417
    %v2419 = vand.u32 %v2418, 4294901760
    %v2420 = vsub.f32 %v2418, %v2419
    %v2421 = vand.u32 %v2420, 4294901760
    %2422 = vmatpush1.msra.mxu0 %v2421
    %v2423 = vand.u32 %v1010, 4294901760
    %v2424 = vsub.f32 %v1010, %v2423
    %v2425 = vand.u32 %v2424, 4294901760
    %v2426 = vsub.f32 %v2424, %v2425
    %v2427 = vand.u32 %v2426, 4294901760
    %2428 = vmatprep.subr.mxu0 %v2427
    %v2429 = vand.u32 %v1009, 4294901760
    %v2430 = vsub.f32 %v1009, %v2429
    %v2431 = vand.u32 %v2430, 4294901760
    %v2432 = vsub.f32 %v2430, %v2431
    %v2433 = vand.u32 %v2432, 4294901760
    %2434 = vmatpush1.msra.mxu0 %v2433
    %v2435 = vand.u32 %v1069, 4294901760
    %v2436 = vsub.f32 %v1069, %v2435
    %v2437 = vand.u32 %v2436, 4294901760
    %v2438 = vsub.f32 %v2436, %v2437
    %v2439 = vand.u32 %v2438, 4294901760
    %2440 = vmatprep.subr.mxu0 %v2439
    %v2441 = vand.u32 %v1066, 4294901760
    %v2442 = vsub.f32 %v1066, %v2441
    %v2443 = vand.u32 %v2442, 4294901760
    %v2444 = vsub.f32 %v2442, %v2443
    %v2445 = vand.u32 %v2444, 4294901760
    %2446 = vmatpush1.msra.mxu0 %v2445
    %2447 = vmatprep.subr.mxu0 0.0
    %2448 = vmatpush1.msra.mxu0 0.0
    %2449 = vmatprep.subr.mxu0 0.0
    %2450 = vmatpush1.msra.mxu0 0.0
    %2451 = vmatprep.subr.mxu0 0.0
    %2452 = vmatpush1.msra.mxu0 0.0
    %2453 = vmatprep.subr.mxu0 0.0
    %2454 = vmatpush1.msra.mxu0 0.0
    %2455 = vmatprep.subr.mxu0 0.0
    %2456 = vmatpush1.msra.mxu0 0.0
    %2457 = vmatprep.subr.mxu0 0.0
    %2458 = vmatpush1.msra.mxu0 0.0
    %2459 = vmatprep.subr.mxu0 0.0
    %2460 = vmatpush1.msra.mxu0 0.0
    %2461 = vmatprep.subr.mxu0 0.0
    %2462 = vmatpush1.msra.mxu0 0.0
    %2463 = vmatprep.subr.mxu0 0.0
    %2464 = vmatpush1.msra.mxu0 0.0
    %2465 = vmatprep.subr.mxu0 0.0
    %2466 = vmatpush1.msra.mxu0 0.0
    %2467 = vmatprep.subr.mxu0 0.0
    %2468 = vmatpush1.msra.mxu0 0.0
    %2469 = vmatprep.subr.mxu0 0.0
    %2470 = vmatpush1.msra.mxu0 0.0
    %2471 = vmatprep.subr.mxu0 0.0
    %2472 = vmatpush1.msra.mxu0 0.0
    %2473 = vmatprep.subr.mxu0 0.0
    %2474 = vmatpush1.msra.mxu0 0.0
    %2475 = vmatprep.subr.mxu0 0.0
    %2476 = vmatpush1.msra.mxu0 0.0
    %2477 = vmatprep.subr.mxu0 0.0
    %2478 = vmatpush1.msra.mxu0 0.0
    %2479 = vmatprep.subr.mxu0 0.0
    %2480 = vmatpush1.msra.mxu0 0.0
    %2481 = vmatprep.subr.mxu0 0.0
    %2482 = vmatpush1.msra.mxu0 0.0
    %2483 = vmatprep.subr.mxu0 0.0
    %2484 = vmatpush1.msra.mxu0 0.0
    %2485 = vmatprep.subr.mxu0 0.0
    %2486 = vmatpush1.msra.mxu0 0.0
    %2487 = vmatprep.subr.mxu0 0.0
    %2488 = vmatpush1.msra.mxu0 0.0
    %2489 = vmatprep.subr.mxu0 0.0
    %2490 = vmatpush1.msra.mxu0 0.0
    %2491 = vmatprep.subr.mxu0 0.0
    %2492 = vmatpush1.msra.mxu0 0.0
    %2493 = vmatprep.subr.mxu0 0.0
    %2494 = vmatpush1.msra.mxu0 0.0
    %2495 = vmatprep.subr.mxu0 0.0
    %2496 = vmatpush1.msra.mxu0 0.0
    %2497 = vmatprep.subr.mxu0 0.0
    %2498 = vmatpush1.msra.mxu0 0.0
    %2499 = vmatprep.subr.mxu0 0.0
    %2500 = vmatpush1.msra.mxu0 0.0
    %2501 = vmatprep.subr.mxu0 0.0
    %2502 = vmatpush1.msra.mxu0 0.0
    %2503 = vmatprep.subr.mxu0 0.0
    %2504 = vmatpush1.msra.mxu0 0.0
    %2505 = vmatprep.mubr.f32.mxu0 0.0
    %v2506 = vand.u32 %v1044, 4294901760
    %2507 = vmatmul.mubr.f32.gmra.mrb[0].mxu0 %v2506
    %v2508 = vpop.f32.mrb[0].mxu0
    %v2509 = vadd.f32 %v2385, %v2508
    %v2510 = vpop.f32.mrb[0].mxu0
    %v2511 = vadd.f32 %v2387, %v2510
    %2512 = vmatprep.mubr.f32.mxu0 0.0
    %v2513 = vand.u32 %v1047, 4294901760
    %2514 = vmatmul.mubr.f32.gmra.mrb[0].mxu0 %v2513
    %v2515 = vpop.f32.mrb[0].mxu0
    %v2516 = vadd.f32 %v2396, %v2515
    %v2517 = vpop.f32.mrb[0].mxu0
    %v2518 = vadd.f32 %v2398, %v2517
    %2519 = vmatprep.mubr.f32.mxu0 0.0
    %v2520 = vand.u32 %v1050, 4294901760
    %2521 = vmatmul.mubr.f32.gmra.mrb[0].mxu0 %v2520
    %v2522 = vpop.f32.mrb[0].mxu0
    %v2523 = vadd.f32 %v2407, %v2522
    %v2524 = vpop.f32.mrb[0].mxu0
    %v2525 = vadd.f32 %v2409, %v2524
    %2526 = vdwg.mxu0
    %v2527 = vand.u32 %v1002, 4294901760
    %v2528 = vsub.f32 %v1002, %v2527
    %2529 = vmatprep.subr.mxu0 %v2528
    %v2530 = vand.u32 %v1001, 4294901760
    %v2531 = vsub.f32 %v1001, %v2530
    %2532 = vmatpush1.msra.mxu0 %v2531
    %v2533 = vand.u32 %v1010, 4294901760
    %v2534 = vsub.f32 %v1010, %v2533
    %2535 = vmatprep.subr.mxu0 %v2534
    %v2536 = vand.u32 %v1009, 4294901760
    %v2537 = vsub.f32 %v1009, %v2536
    %2538 = vmatpush1.msra.mxu0 %v2537
    %v2539 = vand.u32 %v1069, 4294901760
    %v2540 = vsub.f32 %v1069, %v2539
    %2541 = vmatprep.subr.mxu0 %v2540
    %v2542 = vand.u32 %v1066, 4294901760
    %v2543 = vsub.f32 %v1066, %v2542
    %2544 = vmatpush1.msra.mxu0 %v2543
    %2545 = vmatprep.subr.mxu0 0.0
    %2546 = vmatpush1.msra.mxu0 0.0
    %2547 = vmatprep.subr.mxu0 0.0
    %2548 = vmatpush1.msra.mxu0 0.0
    %2549 = vmatprep.subr.mxu0 0.0
    %2550 = vmatpush1.msra.mxu0 0.0
    %2551 = vmatprep.subr.mxu0 0.0
    %2552 = vmatpush1.msra.mxu0 0.0
    %2553 = vmatprep.subr.mxu0 0.0
    %2554 = vmatpush1.msra.mxu0 0.0
    %2555 = vmatprep.subr.mxu0 0.0
    %2556 = vmatpush1.msra.mxu0 0.0
    %2557 = vmatprep.subr.mxu0 0.0
    %2558 = vmatpush1.msra.mxu0 0.0
    %2559 = vmatprep.subr.mxu0 0.0
    %2560 = vmatpush1.msra.mxu0 0.0
    %2561 = vmatprep.subr.mxu0 0.0
    %2562 = vmatpush1.msra.mxu0 0.0
    %2563 = vmatprep.subr.mxu0 0.0
    %2564 = vmatpush1.msra.mxu0 0.0
    %2565 = vmatprep.subr.mxu0 0.0
    %2566 = vmatpush1.msra.mxu0 0.0
    %2567 = vmatprep.subr.mxu0 0.0
    %2568 = vmatpush1.msra.mxu0 0.0
    %2569 = vmatprep.subr.mxu0 0.0
    %2570 = vmatpush1.msra.mxu0 0.0
    %2571 = vmatprep.subr.mxu0 0.0
    %2572 = vmatpush1.msra.mxu0 0.0
    %2573 = vmatprep.subr.mxu0 0.0
    %2574 = vmatpush1.msra.mxu0 0.0
    %2575 = vmatprep.subr.mxu0 0.0
    %2576 = vmatpush1.msra.mxu0 0.0
    %2577 = vmatprep.subr.mxu0 0.0
    %2578 = vmatpush1.msra.mxu0 0.0
    %2579 = vmatprep.subr.mxu0 0.0
    %2580 = vmatpush1.msra.mxu0 0.0
    %2581 = vmatprep.subr.mxu0 0.0
    %2582 = vmatpush1.msra.mxu0 0.0
    %2583 = vmatprep.subr.mxu0 0.0
    %2584 = vmatpush1.msra.mxu0 0.0
    %2585 = vmatprep.subr.mxu0 0.0
    %2586 = vmatpush1.msra.mxu0 0.0
    %2587 = vmatprep.subr.mxu0 0.0
    %2588 = vmatpush1.msra.mxu0 0.0
    %2589 = vmatprep.subr.mxu0 0.0
    %2590 = vmatpush1.msra.mxu0 0.0
    %2591 = vmatprep.subr.mxu0 0.0
    %2592 = vmatpush1.msra.mxu0 0.0
    %2593 = vmatprep.subr.mxu0 0.0
    %2594 = vmatpush1.msra.mxu0 0.0
    %2595 = vmatprep.subr.mxu0 0.0
    %2596 = vmatpush1.msra.mxu0 0.0
    %2597 = vmatprep.subr.mxu0 0.0
    %2598 = vmatpush1.msra.mxu0 0.0
    %2599 = vmatprep.subr.mxu0 0.0
    %2600 = vmatpush1.msra.mxu0 0.0
    %2601 = vmatprep.subr.mxu0 0.0
    %2602 = vmatpush1.msra.mxu0 0.0
    %2603 = vmatprep.mubr.f32.mxu0 0.0
    %v2604 = vand.u32 %v1044, 4294901760
    %v2605 = vsub.f32 %v1044, %v2604
    %2606 = vmatmul.mubr.f32.gmra.mrb[0].mxu0 %v2605
    %v2607 = vpop.f32.mrb[0].mxu0
    %v2608 = vadd.f32 %v2509, %v2607
    %v2609 = vpop.f32.mrb[0].mxu0
    %v2610 = vadd.f32 %v2511, %v2609
    %2611 = vmatprep.mubr.f32.mxu0 0.0
    %v2612 = vand.u32 %v1047, 4294901760
    %v2613 = vsub.f32 %v1047, %v2612
    %2614 = vmatmul.mubr.f32.gmra.mrb[0].mxu0 %v2613
    %v2615 = vpop.f32.mrb[0].mxu0
    %v2616 = vadd.f32 %v2516, %v2615
    %v2617 = vpop.f32.mrb[0].mxu0
    %v2618 = vadd.f32 %v2518, %v2617
    %2619 = vmatprep.mubr.f32.mxu0 0.0
    %v2620 = vand.u32 %v1050, 4294901760
    %v2621 = vsub.f32 %v1050, %v2620
    %2622 = vmatmul.mubr.f32.gmra.mrb[0].mxu0 %v2621
    %v2623 = vpop.f32.mrb[0].mxu0
    %v2624 = vadd.f32 %v2523, %v2623
    %v2625 = vpop.f32.mrb[0].mxu0
    %v2626 = vadd.f32 %v2525, %v2625
    %2627 = vdwg.mxu0
    %v2628 = vand.u32 %v1002, 4294901760
    %2629 = vmatprep.subr.mxu0 %v2628
    %v2630 = vand.u32 %v1001, 4294901760
    %2631 = vmatpush1.msra.mxu0 %v2630
    %v2632 = vand.u32 %v1010, 4294901760
    %2633 = vmatprep.subr.mxu0 %v2632
    %v2634 = vand.u32 %v1009, 4294901760
    %2635 = vmatpush1.msra.mxu0 %v2634
    %v2636 = vand.u32 %v1069, 4294901760
    %2637 = vmatprep.subr.mxu0 %v2636
    %v2638 = vand.u32 %v1066, 4294901760
    %2639 = vmatpush1.msra.mxu0 %v2638
    %2640 = vmatprep.subr.mxu0 0.0
    %2641 = vmatpush1.msra.mxu0 0.0
    %2642 = vmatprep.subr.mxu0 0.0
    %2643 = vmatpush1.msra.mxu0 0.0
    %2644 = vmatprep.subr.mxu0 0.0
    %2645 = vmatpush1.msra.mxu0 0.0
    %2646 = vmatprep.subr.mxu0 0.0
    %2647 = vmatpush1.msra.mxu0 0.0
    %2648 = vmatprep.subr.mxu0 0.0
    %2649 = vmatpush1.msra.mxu0 0.0
    %2650 = vmatprep.subr.mxu0 0.0
    %2651 = vmatpush1.msra.mxu0 0.0
    %2652 = vmatprep.subr.mxu0 0.0
    %2653 = vmatpush1.msra.mxu0 0.0
    %2654 = vmatprep.subr.mxu0 0.0
    %2655 = vmatpush1.msra.mxu0 0.0
    %2656 = vmatprep.subr.mxu0 0.0
    %2657 = vmatpush1.msra.mxu0 0.0
    %2658 = vmatprep.subr.mxu0 0.0
    %2659 = vmatpush1.msra.mxu0 0.0
    %2660 = vmatprep.subr.mxu0 0.0
    %2661 = vmatpush1.msra.mxu0 0.0
    %2662 = vmatprep.subr.mxu0 0.0
    %2663 = vmatpush1.msra.mxu0 0.0
    %2664 = vmatprep.subr.mxu0 0.0
    %2665 = vmatpush1.msra.mxu0 0.0
    %2666 = vmatprep.subr.mxu0 0.0
    %2667 = vmatpush1.msra.mxu0 0.0
    %2668 = vmatprep.subr.mxu0 0.0
    %2669 = vmatpush1.msra.mxu0 0.0
    %2670 = vmatprep.subr.mxu0 0.0
    %2671 = vmatpush1.msra.mxu0 0.0
    %2672 = vmatprep.subr.mxu0 0.0
    %2673 = vmatpush1.msra.mxu0 0.0
    %2674 = vmatprep.subr.mxu0 0.0
    %2675 = vmatpush1.msra.mxu0 0.0
    %2676 = vmatprep.subr.mxu0 0.0
    %2677 = vmatpush1.msra.mxu0 0.0
    %2678 = vmatprep.subr.mxu0 0.0
    %2679 = vmatpush1.msra.mxu0 0.0
    %2680 = vmatprep.subr.mxu0 0.0
    %2681 = vmatpush1.msra.mxu0 0.0
    %2682 = vmatprep.subr.mxu0 0.0
    %2683 = vmatpush1.msra.mxu0 0.0
    %2684 = vmatprep.subr.mxu0 0.0
    %2685 = vmatpush1.msra.mxu0 0.0
    %2686 = vmatprep.subr.mxu0 0.0
    %2687 = vmatpush1.msra.mxu0 0.0
    %2688 = vmatprep.subr.mxu0 0.0
    %2689 = vmatpush1.msra.mxu0 0.0
    %2690 = vmatprep.subr.mxu0 0.0
    %2691 = vmatpush1.msra.mxu0 0.0
    %2692 = vmatprep.subr.mxu0 0.0
    %2693 = vmatpush1.msra.mxu0 0.0
    %2694 = vmatprep.subr.mxu0 0.0
    %2695 = vmatpush1.msra.mxu0 0.0
    %2696 = vmatprep.subr.mxu0 0.0
    %2697 = vmatpush1.msra.mxu0 0.0
    %2698 = vmatprep.mubr.f32.mxu0 0.0
    %v2699 = vand.u32 %v1044, 4294901760
    %v2700 = vsub.f32 %v1044, %v2699
    %v2701 = vand.u32 %v2700, 4294901760
    %2702 = vmatmul.mubr.f32.gmra.mrb[0].mxu0 %v2701
    %v2703 = vpop.f32.mrb[0].mxu0
    %v2704 = vadd.f32 %v2608, %v2703
    %v2705 = vpop.f32.mrb[0].mxu0
    %v2706 = vadd.f32 %v2610, %v2705
    %2707 = vmatprep.mubr.f32.mxu0 0.0
    %v2708 = vand.u32 %v1047, 4294901760
    %v2709 = vsub.f32 %v1047, %v2708
    %v2710 = vand.u32 %v2709, 4294901760
    %2711 = vmatmul.mubr.f32.gmra.mrb[0].mxu0 %v2710
    %v2712 = vpop.f32.mrb[0].mxu0
    %v2713 = vadd.f32 %v2616, %v2712
    %v2714 = vpop.f32.mrb[0].mxu0
    %v2715 = vadd.f32 %v2618, %v2714
    %2716 = vmatprep.mubr.f32.mxu0 0.0
    %v2717 = vand.u32 %v1050, 4294901760
    %v2718 = vsub.f32 %v1050, %v2717
    %v2719 = vand.u32 %v2718, 4294901760
    %2720 = vmatmul.mubr.f32.gmra.mrb[0].mxu0 %v2719
    %v2721 = vpop.f32.mrb[0].mxu0
    %v2722 = vadd.f32 %v2624, %v2721
    %v2723 = vpop.f32.mrb[0].mxu0
    %v2724 = vadd.f32 %v2626, %v2723
    %2725 = vdwg.mxu0
    %v2726 = vand.u32 %v1002, 4294901760
    %v2727 = vsub.f32 %v1002, %v2726
    %v2728 = vand.u32 %v2727, 4294901760
    %2729 = vmatprep.subr.mxu0 %v2728
    %v2730 = vand.u32 %v1001, 4294901760
    %v2731 = vsub.f32 %v1001, %v2730
    %v2732 = vand.u32 %v2731, 4294901760
    %2733 = vmatpush1.msra.mxu0 %v2732
    %v2734 = vand.u32 %v1010, 4294901760
    %v2735 = vsub.f32 %v1010, %v2734
    %v2736 = vand.u32 %v2735, 4294901760
    %2737 = vmatprep.subr.mxu0 %v2736
    %v2738 = vand.u32 %v1009, 4294901760
    %v2739 = vsub.f32 %v1009, %v2738
    %v2740 = vand.u32 %v2739, 4294901760
    %2741 = vmatpush1.msra.mxu0 %v2740
    %v2742 = vand.u32 %v1069, 4294901760
    %v2743 = vsub.f32 %v1069, %v2742
    %v2744 = vand.u32 %v2743, 4294901760
    %2745 = vmatprep.subr.mxu0 %v2744
    %v2746 = vand.u32 %v1066, 4294901760
    %v2747 = vsub.f32 %v1066, %v2746
    %v2748 = vand.u32 %v2747, 4294901760
    %2749 = vmatpush1.msra.mxu0 %v2748
    %2750 = vmatprep.subr.mxu0 0.0
    %2751 = vmatpush1.msra.mxu0 0.0
    %2752 = vmatprep.subr.mxu0 0.0
    %2753 = vmatpush1.msra.mxu0 0.0
    %2754 = vmatprep.subr.mxu0 0.0
    %2755 = vmatpush1.msra.mxu0 0.0
    %2756 = vmatprep.subr.mxu0 0.0
    %2757 = vmatpush1.msra.mxu0 0.0
    %2758 = vmatprep.subr.mxu0 0.0
    %2759 = vmatpush1.msra.mxu0 0.0
    %2760 = vmatprep.subr.mxu0 0.0
    %2761 = vmatpush1.msra.mxu0 0.0
    %2762 = vmatprep.subr.mxu0 0.0
    %2763 = vmatpush1.msra.mxu0 0.0
    %2764 = vmatprep.subr.mxu0 0.0
    %2765 = vmatpush1.msra.mxu0 0.0
    %2766 = vmatprep.subr.mxu0 0.0
    %2767 = vmatpush1.msra.mxu0 0.0
    %2768 = vmatprep.subr.mxu0 0.0
    %2769 = vmatpush1.msra.mxu0 0.0
    %2770 = vmatprep.subr.mxu0 0.0
    %2771 = vmatpush1.msra.mxu0 0.0
    %2772 = vmatprep.subr.mxu0 0.0
    %2773 = vmatpush1.msra.mxu0 0.0
    %2774 = vmatprep.subr.mxu0 0.0
    %2775 = vmatpush1.msra.mxu0 0.0
    %2776 = vmatprep.subr.mxu0 0.0
    %2777 = vmatpush1.msra.mxu0 0.0
    %2778 = vmatprep.subr.mxu0 0.0
    %2779 = vmatpush1.msra.mxu0 0.0
    %2780 = vmatprep.subr.mxu0 0.0
    %2781 = vmatpush1.msra.mxu0 0.0
    %2782 = vmatprep.subr.mxu0 0.0
    %2783 = vmatpush1.msra.mxu0 0.0
    %2784 = vmatprep.subr.mxu0 0.0
    %2785 = vmatpush1.msra.mxu0 0.0
    %2786 = vmatprep.subr.mxu0 0.0
    %2787 = vmatpush1.msra.mxu0 0.0
    %2788 = vmatprep.subr.mxu0 0.0
    %2789 = vmatpush1.msra.mxu0 0.0
    %2790 = vmatprep.subr.mxu0 0.0
    %2791 = vmatpush1.msra.mxu0 0.0
    %2792 = vmatprep.subr.mxu0 0.0
    %2793 = vmatpush1.msra.mxu0 0.0
    %2794 = vmatprep.subr.mxu0 0.0
    %2795 = vmatpush1.msra.mxu0 0.0
    %2796 = vmatprep.subr.mxu0 0.0
    %2797 = vmatpush1.msra.mxu0 0.0
    %2798 = vmatprep.subr.mxu0 0.0
    %2799 = vmatpush1.msra.mxu0 0.0
    %2800 = vmatprep.subr.mxu0 0.0
    %2801 = vmatpush1.msra.mxu0 0.0
    %2802 = vmatprep.subr.mxu0 0.0
    %2803 = vmatpush1.msra.mxu0 0.0
    %2804 = vmatprep.subr.mxu0 0.0
    %2805 = vmatpush1.msra.mxu0 0.0
    %2806 = vmatprep.subr.mxu0 0.0
    %2807 = vmatpush1.msra.mxu0 0.0
    %2808 = vmatprep.mubr.f32.mxu0 0.0
    %v2809 = vand.u32 %v1044, 4294901760
    %2810 = vmatmul.mubr.f32.gmra.mrb[0].mxu0 %v2809
    %v2811 = vpop.f32.mrb[0].mxu0
    %v2812 = vadd.f32 %v2704, %v2811
    %v2813 = vpop.f32.mrb[0].mxu0
    %v2814 = vadd.f32 %v2706, %v2813
    %2815 = vmatprep.mubr.f32.mxu0 0.0
    %v2816 = vand.u32 %v1047, 4294901760
    %2817 = vmatmul.mubr.f32.gmra.mrb[0].mxu0 %v2816
    %v2818 = vpop.f32.mrb[0].mxu0
    %v2819 = vadd.f32 %v2713, %v2818
    %v2820 = vpop.f32.mrb[0].mxu0
    %v2821 = vadd.f32 %v2715, %v2820
    %2822 = vmatprep.mubr.f32.mxu0 0.0
    %v2823 = vand.u32 %v1050, 4294901760
    %2824 = vmatmul.mubr.f32.gmra.mrb[0].mxu0 %v2823
    %v2825 = vpop.f32.mrb[0].mxu0
    %v2826 = vadd.f32 %v2722, %v2825
    %v2827 = vpop.f32.mrb[0].mxu0
    %v2828 = vadd.f32 %v2724, %v2827
    %2829 = vdwg.mxu0
    %v2830 = vand.u32 %v1002, 4294901760
    %2831 = vmatprep.subr.mxu0 %v2830
    %v2832 = vand.u32 %v1001, 4294901760
    %2833 = vmatpush1.msra.mxu0 %v2832
    %v2834 = vand.u32 %v1010, 4294901760
    %2835 = vmatprep.subr.mxu0 %v2834
    %v2836 = vand.u32 %v1009, 4294901760
    %2837 = vmatpush1.msra.mxu0 %v2836
    %v2838 = vand.u32 %v1069, 4294901760
    %2839 = vmatprep.subr.mxu0 %v2838
    %v2840 = vand.u32 %v1066, 4294901760
    %2841 = vmatpush1.msra.mxu0 %v2840
    %2842 = vmatprep.subr.mxu0 0.0
    %2843 = vmatpush1.msra.mxu0 0.0
    %2844 = vmatprep.subr.mxu0 0.0
    %2845 = vmatpush1.msra.mxu0 0.0
    %2846 = vmatprep.subr.mxu0 0.0
    %2847 = vmatpush1.msra.mxu0 0.0
    %2848 = vmatprep.subr.mxu0 0.0
    %2849 = vmatpush1.msra.mxu0 0.0
    %2850 = vmatprep.subr.mxu0 0.0
    %2851 = vmatpush1.msra.mxu0 0.0
    %2852 = vmatprep.subr.mxu0 0.0
    %2853 = vmatpush1.msra.mxu0 0.0
    %2854 = vmatprep.subr.mxu0 0.0
    %2855 = vmatpush1.msra.mxu0 0.0
    %2856 = vmatprep.subr.mxu0 0.0
    %2857 = vmatpush1.msra.mxu0 0.0
    %2858 = vmatprep.subr.mxu0 0.0
    %2859 = vmatpush1.msra.mxu0 0.0
    %2860 = vmatprep.subr.mxu0 0.0
    %2861 = vmatpush1.msra.mxu0 0.0
    %2862 = vmatprep.subr.mxu0 0.0
    %2863 = vmatpush1.msra.mxu0 0.0
    %2864 = vmatprep.subr.mxu0 0.0
    %2865 = vmatpush1.msra.mxu0 0.0
    %2866 = vmatprep.subr.mxu0 0.0
    %2867 = vmatpush1.msra.mxu0 0.0
    %2868 = vmatprep.subr.mxu0 0.0
    %2869 = vmatpush1.msra.mxu0 0.0
    %2870 = vmatprep.subr.mxu0 0.0
    %2871 = vmatpush1.msra.mxu0 0.0
    %2872 = vmatprep.subr.mxu0 0.0
    %2873 = vmatpush1.msra.mxu0 0.0
    %2874 = vmatprep.subr.mxu0 0.0
    %2875 = vmatpush1.msra.mxu0 0.0
    %2876 = vmatprep.subr.mxu0 0.0
    %2877 = vmatpush1.msra.mxu0 0.0
    %2878 = vmatprep.subr.mxu0 0.0
    %2879 = vmatpush1.msra.mxu0 0.0
    %2880 = vmatprep.subr.mxu0 0.0
    %2881 = vmatpush1.msra.mxu0 0.0
    %2882 = vmatprep.subr.mxu0 0.0
    %2883 = vmatpush1.msra.mxu0 0.0
    %2884 = vmatprep.subr.mxu0 0.0
    %2885 = vmatpush1.msra.mxu0 0.0
    %2886 = vmatprep.subr.mxu0 0.0
    %2887 = vmatpush1.msra.mxu0 0.0
    %2888 = vmatprep.subr.mxu0 0.0
    %2889 = vmatpush1.msra.mxu0 0.0
    %2890 = vmatprep.subr.mxu0 0.0
    %2891 = vmatpush1.msra.mxu0 0.0
    %2892 = vmatprep.subr.mxu0 0.0
    %2893 = vmatpush1.msra.mxu0 0.0
    %2894 = vmatprep.subr.mxu0 0.0
    %2895 = vmatpush1.msra.mxu0 0.0
    %2896 = vmatprep.subr.mxu0 0.0
    %2897 = vmatpush1.msra.mxu0 0.0
    %2898 = vmatprep.subr.mxu0 0.0
    %2899 = vmatpush1.msra.mxu0 0.0
    %2900 = vmatprep.mubr.f32.mxu0 0.0
    %v2901 = vand.u32 %v1044, 4294901760
    %2902 = vmatmul.mubr.f32.gmra.mrb[0].mxu0 %v2901
    %v2903 = vpop.f32.mrb[0].mxu0
    %v2904 = vadd.f32 %v2812, %v2903
    %v2905 = vpop.f32.mrb[0].mxu0
    %v2906 = vadd.f32 %v2814, %v2905
    %2907 = vmatprep.mubr.f32.mxu0 0.0
    %v2908 = vand.u32 %v1047, 4294901760
    %2909 = vmatmul.mubr.f32.gmra.mrb[0].mxu0 %v2908
    %v2910 = vpop.f32.mrb[0].mxu0
    %v2911 = vadd.f32 %v2819, %v2910
    %v2912 = vpop.f32.mrb[0].mxu0
    %v2913 = vadd.f32 %v2821, %v2912
    %2914 = vmatprep.mubr.f32.mxu0 0.0
    %v2915 = vand.u32 %v1050, 4294901760
    %2916 = vmatmul.mubr.f32.gmra.mrb[0].mxu0 %v2915
    %v2917 = vpop.f32.mrb[0].mxu0
    %v2918 = vadd.f32 %v2826, %v2917
    %v2919 = vpop.f32.mrb[0].mxu0
    %v2920 = vadd.f32 %v2828, %v2919
    %2921 = vdwg.mxu0
    %v2922 = vand.u32 %v1004, 4294901760
    %2923 = vmatprep.subr.mxu0 %v2922
    %v2924 = vand.u32 %v1003, 4294901760
    %2925 = vmatpush1.msra.mxu0 %v2924
    %v2926 = vand.u32 %v1012, 4294901760
    %2927 = vmatprep.subr.mxu0 %v2926
    %v2928 = vand.u32 %v1011, 4294901760
    %2929 = vmatpush1.msra.mxu0 %v2928
    %v2930 = vand.u32 %v1075, 4294901760
    %2931 = vmatprep.subr.mxu0 %v2930
    %v2932 = vand.u32 %v1072, 4294901760
    %2933 = vmatpush1.msra.mxu0 %v2932
    %2934 = vmatprep.subr.mxu0 0.0
    %2935 = vmatpush1.msra.mxu0 0.0
    %2936 = vmatprep.subr.mxu0 0.0
    %2937 = vmatpush1.msra.mxu0 0.0
    %2938 = vmatprep.subr.mxu0 0.0
    %2939 = vmatpush1.msra.mxu0 0.0
    %2940 = vmatprep.subr.mxu0 0.0
    %2941 = vmatpush1.msra.mxu0 0.0
    %2942 = vmatprep.subr.mxu0 0.0
    %2943 = vmatpush1.msra.mxu0 0.0
    %2944 = vmatprep.subr.mxu0 0.0
    %2945 = vmatpush1.msra.mxu0 0.0
    %2946 = vmatprep.subr.mxu0 0.0
    %2947 = vmatpush1.msra.mxu0 0.0
    %2948 = vmatprep.subr.mxu0 0.0
    %2949 = vmatpush1.msra.mxu0 0.0
    %2950 = vmatprep.subr.mxu0 0.0
    %2951 = vmatpush1.msra.mxu0 0.0
    %2952 = vmatprep.subr.mxu0 0.0
    %2953 = vmatpush1.msra.mxu0 0.0
    %2954 = vmatprep.subr.mxu0 0.0
    %2955 = vmatpush1.msra.mxu0 0.0
    %2956 = vmatprep.subr.mxu0 0.0
    %2957 = vmatpush1.msra.mxu0 0.0
    %2958 = vmatprep.subr.mxu0 0.0
    %2959 = vmatpush1.msra.mxu0 0.0
    %2960 = vmatprep.subr.mxu0 0.0
    %2961 = vmatpush1.msra.mxu0 0.0
    %2962 = vmatprep.subr.mxu0 0.0
    %2963 = vmatpush1.msra.mxu0 0.0
    %2964 = vmatprep.subr.mxu0 0.0
    %2965 = vmatpush1.msra.mxu0 0.0
    %2966 = vmatprep.subr.mxu0 0.0
    %2967 = vmatpush1.msra.mxu0 0.0
    %2968 = vmatprep.subr.mxu0 0.0
    %2969 = vmatpush1.msra.mxu0 0.0
    %2970 = vmatprep.subr.mxu0 0.0
    %2971 = vmatpush1.msra.mxu0 0.0
    %2972 = vmatprep.subr.mxu0 0.0
    %2973 = vmatpush1.msra.mxu0 0.0
    %2974 = vmatprep.subr.mxu0 0.0
    %2975 = vmatpush1.msra.mxu0 0.0
    %2976 = vmatprep.subr.mxu0 0.0
    %2977 = vmatpush1.msra.mxu0 0.0
    %2978 = vmatprep.subr.mxu0 0.0
    %2979 = vmatpush1.msra.mxu0 0.0
    %2980 = vmatprep.subr.mxu0 0.0
    %2981 = vmatpush1.msra.mxu0 0.0
    %2982 = vmatprep.subr.mxu0 0.0
    %2983 = vmatpush1.msra.mxu0 0.0
    %2984 = vmatprep.subr.mxu0 0.0
    %2985 = vmatpush1.msra.mxu0 0.0
    %2986 = vmatprep.subr.mxu0 0.0
    %2987 = vmatpush1.msra.mxu0 0.0
    %2988 = vmatprep.subr.mxu0 0.0
    %2989 = vmatpush1.msra.mxu0 0.0
    %2990 = vmatprep.subr.mxu0 0.0
    %2991 = vmatpush1.msra.mxu0 0.0
    %2992 = vmatprep.mubr.f32.mxu0 0.0
    %v2993 = vand.u32 %v1044, 4294901760
    %v2994 = vsub.f32 %v1044, %v2993
    %v2995 = vand.u32 %v2994, 4294901760
    %v2996 = vsub.f32 %v2994, %v2995
    %v2997 = vand.u32 %v2996, 4294901760
    %2998 = vmatmul.mubr.f32.gmra.mrb[0].mxu0 %v2997
    %v2999 = vpop.f32.mrb[0].mxu0
    %v3000 = vadd.f32 %v1030, %v2999
    %v3001 = vpop.f32.mrb[0].mxu0
    %v3002 = vadd.f32 %v1030, %v3001
    %3003 = vmatprep.mubr.f32.mxu0 0.0
    %v3004 = vand.u32 %v1047, 4294901760
    %v3005 = vsub.f32 %v1047, %v3004
    %v3006 = vand.u32 %v3005, 4294901760
    %v3007 = vsub.f32 %v3005, %v3006
    %v3008 = vand.u32 %v3007, 4294901760
    %3009 = vmatmul.mubr.f32.gmra.mrb[0].mxu0 %v3008
    %v3010 = vpop.f32.mrb[0].mxu0
    %v3011 = vadd.f32 %v1035, %v3010
    %v3012 = vpop.f32.mrb[0].mxu0
    %v3013 = vadd.f32 %v1035, %v3012
    %3014 = vmatprep.mubr.f32.mxu0 0.0
    %v3015 = vand.u32 %v1050, 4294901760
    %v3016 = vsub.f32 %v1050, %v3015
    %v3017 = vand.u32 %v3016, 4294901760
    %v3018 = vsub.f32 %v3016, %v3017
    %v3019 = vand.u32 %v3018, 4294901760
    %3020 = vmatmul.mubr.f32.gmra.mrb[0].mxu0 %v3019
    %v3021 = vpop.f32.mrb[0].mxu0
    %v3022 = vadd.f32 %v1040, %v3021
    %v3023 = vpop.f32.mrb[0].mxu0
    %v3024 = vadd.f32 %v1040, %v3023
    %3025 = vdwg.mxu0
    %v3026 = vand.u32 %v1004, 4294901760
    %v3027 = vsub.f32 %v1004, %v3026
    %v3028 = vand.u32 %v3027, 4294901760
    %v3029 = vsub.f32 %v3027, %v3028
    %v3030 = vand.u32 %v3029, 4294901760
    %3031 = vmatprep.subr.mxu0 %v3030
    %v3032 = vand.u32 %v1003, 4294901760
    %v3033 = vsub.f32 %v1003, %v3032
    %v3034 = vand.u32 %v3033, 4294901760
    %v3035 = vsub.f32 %v3033, %v3034
    %v3036 = vand.u32 %v3035, 4294901760
    %3037 = vmatpush1.msra.mxu0 %v3036
    %v3038 = vand.u32 %v1012, 4294901760
    %v3039 = vsub.f32 %v1012, %v3038
    %v3040 = vand.u32 %v3039, 4294901760
    %v3041 = vsub.f32 %v3039, %v3040
    %v3042 = vand.u32 %v3041, 4294901760
    %3043 = vmatprep.subr.mxu0 %v3042
    %v3044 = vand.u32 %v1011, 4294901760
    %v3045 = vsub.f32 %v1011, %v3044
    %v3046 = vand.u32 %v3045, 4294901760
    %v3047 = vsub.f32 %v3045, %v3046
    %v3048 = vand.u32 %v3047, 4294901760
    %3049 = vmatpush1.msra.mxu0 %v3048
    %v3050 = vand.u32 %v1075, 4294901760
    %v3051 = vsub.f32 %v1075, %v3050
    %v3052 = vand.u32 %v3051, 4294901760
    %v3053 = vsub.f32 %v3051, %v3052
    %v3054 = vand.u32 %v3053, 4294901760
    %3055 = vmatprep.subr.mxu0 %v3054
    %v3056 = vand.u32 %v1072, 4294901760
    %v3057 = vsub.f32 %v1072, %v3056
    %v3058 = vand.u32 %v3057, 4294901760
    %v3059 = vsub.f32 %v3057, %v3058
    %v3060 = vand.u32 %v3059, 4294901760
    %3061 = vmatpush1.msra.mxu0 %v3060
    %3062 = vmatprep.subr.mxu0 0.0
    %3063 = vmatpush1.msra.mxu0 0.0
    %3064 = vmatprep.subr.mxu0 0.0
    %3065 = vmatpush1.msra.mxu0 0.0
    %3066 = vmatprep.subr.mxu0 0.0
    %3067 = vmatpush1.msra.mxu0 0.0
    %3068 = vmatprep.subr.mxu0 0.0
    %3069 = vmatpush1.msra.mxu0 0.0
    %3070 = vmatprep.subr.mxu0 0.0
    %3071 = vmatpush1.msra.mxu0 0.0
    %3072 = vmatprep.subr.mxu0 0.0
    %3073 = vmatpush1.msra.mxu0 0.0
    %3074 = vmatprep.subr.mxu0 0.0
    %3075 = vmatpush1.msra.mxu0 0.0
    %3076 = vmatprep.subr.mxu0 0.0
    %3077 = vmatpush1.msra.mxu0 0.0
    %3078 = vmatprep.subr.mxu0 0.0
    %3079 = vmatpush1.msra.mxu0 0.0
    %3080 = vmatprep.subr.mxu0 0.0
    %3081 = vmatpush1.msra.mxu0 0.0
    %3082 = vmatprep.subr.mxu0 0.0
    %3083 = vmatpush1.msra.mxu0 0.0
    %3084 = vmatprep.subr.mxu0 0.0
    %3085 = vmatpush1.msra.mxu0 0.0
    %3086 = vmatprep.subr.mxu0 0.0
    %3087 = vmatpush1.msra.mxu0 0.0
    %3088 = vmatprep.subr.mxu0 0.0
    %3089 = vmatpush1.msra.mxu0 0.0
    %3090 = vmatprep.subr.mxu0 0.0
    %3091 = vmatpush1.msra.mxu0 0.0
    %3092 = vmatprep.subr.mxu0 0.0
    %3093 = vmatpush1.msra.mxu0 0.0
    %3094 = vmatprep.subr.mxu0 0.0
    %3095 = vmatpush1.msra.mxu0 0.0
    %3096 = vmatprep.subr.mxu0 0.0
    %3097 = vmatpush1.msra.mxu0 0.0
    %3098 = vmatprep.subr.mxu0 0.0
    %3099 = vmatpush1.msra.mxu0 0.0
    %3100 = vmatprep.subr.mxu0 0.0
    %3101 = vmatpush1.msra.mxu0 0.0
    %3102 = vmatprep.subr.mxu0 0.0
    %3103 = vmatpush1.msra.mxu0 0.0
    %3104 = vmatprep.subr.mxu0 0.0
    %3105 = vmatpush1.msra.mxu0 0.0
    %3106 = vmatprep.subr.mxu0 0.0
    %3107 = vmatpush1.msra.mxu0 0.0
    %3108 = vmatprep.subr.mxu0 0.0
    %3109 = vmatpush1.msra.mxu0 0.0
    %3110 = vmatprep.subr.mxu0 0.0
    %3111 = vmatpush1.msra.mxu0 0.0
    %3112 = vmatprep.subr.mxu0 0.0
    %3113 = vmatpush1.msra.mxu0 0.0
    %3114 = vmatprep.subr.mxu0 0.0
    %3115 = vmatpush1.msra.mxu0 0.0
    %3116 = vmatprep.subr.mxu0 0.0
    %3117 = vmatpush1.msra.mxu0 0.0
    %3118 = vmatprep.subr.mxu0 0.0
    %3119 = vmatpush1.msra.mxu0 0.0
    %3120 = vmatprep.mubr.f32.mxu0 0.0
    %v3121 = vand.u32 %v1044, 4294901760
    %3122 = vmatmul.mubr.f32.gmra.mrb[0].mxu0 %v3121
    %v3123 = vpop.f32.mrb[0].mxu0
    %v3124 = vadd.f32 %v3000, %v3123
    %v3125 = vpop.f32.mrb[0].mxu0
    %v3126 = vadd.f32 %v3002, %v3125
    %3127 = vmatprep.mubr.f32.mxu0 0.0
    %v3128 = vand.u32 %v1047, 4294901760
    %3129 = vmatmul.mubr.f32.gmra.mrb[0].mxu0 %v3128
    %v3130 = vpop.f32.mrb[0].mxu0
    %v3131 = vadd.f32 %v3011, %v3130
    %v3132 = vpop.f32.mrb[0].mxu0
    %v3133 = vadd.f32 %v3013, %v3132
    %3134 = vmatprep.mubr.f32.mxu0 0.0
    %v3135 = vand.u32 %v1050, 4294901760
    %3136 = vmatmul.mubr.f32.gmra.mrb[0].mxu0 %v3135
    %v3137 = vpop.f32.mrb[0].mxu0
    %v3138 = vadd.f32 %v3022, %v3137
    %v3139 = vpop.f32.mrb[0].mxu0
    %v3140 = vadd.f32 %v3024, %v3139
    %3141 = vdwg.mxu0
    %v3142 = vand.u32 %v1004, 4294901760
    %v3143 = vsub.f32 %v1004, %v3142
    %3144 = vmatprep.subr.mxu0 %v3143
    %v3145 = vand.u32 %v1003, 4294901760
    %v3146 = vsub.f32 %v1003, %v3145
    %3147 = vmatpush1.msra.mxu0 %v3146
    %v3148 = vand.u32 %v1012, 4294901760
    %v3149 = vsub.f32 %v1012, %v3148
    %3150 = vmatprep.subr.mxu0 %v3149
    %v3151 = vand.u32 %v1011, 4294901760
    %v3152 = vsub.f32 %v1011, %v3151
    %3153 = vmatpush1.msra.mxu0 %v3152
    %v3154 = vand.u32 %v1075, 4294901760
    %v3155 = vsub.f32 %v1075, %v3154
    %3156 = vmatprep.subr.mxu0 %v3155
    %v3157 = vand.u32 %v1072, 4294901760
    %v3158 = vsub.f32 %v1072, %v3157
    %3159 = vmatpush1.msra.mxu0 %v3158
    %3160 = vmatprep.subr.mxu0 0.0
    %3161 = vmatpush1.msra.mxu0 0.0
    %3162 = vmatprep.subr.mxu0 0.0
    %3163 = vmatpush1.msra.mxu0 0.0
    %3164 = vmatprep.subr.mxu0 0.0
    %3165 = vmatpush1.msra.mxu0 0.0
    %3166 = vmatprep.subr.mxu0 0.0
    %3167 = vmatpush1.msra.mxu0 0.0
    %3168 = vmatprep.subr.mxu0 0.0
    %3169 = vmatpush1.msra.mxu0 0.0
    %3170 = vmatprep.subr.mxu0 0.0
    %3171 = vmatpush1.msra.mxu0 0.0
    %3172 = vmatprep.subr.mxu0 0.0
    %3173 = vmatpush1.msra.mxu0 0.0
    %3174 = vmatprep.subr.mxu0 0.0
    %3175 = vmatpush1.msra.mxu0 0.0
    %3176 = vmatprep.subr.mxu0 0.0
    %3177 = vmatpush1.msra.mxu0 0.0
    %3178 = vmatprep.subr.mxu0 0.0
    %3179 = vmatpush1.msra.mxu0 0.0
    %3180 = vmatprep.subr.mxu0 0.0
    %3181 = vmatpush1.msra.mxu0 0.0
    %3182 = vmatprep.subr.mxu0 0.0
    %3183 = vmatpush1.msra.mxu0 0.0
    %3184 = vmatprep.subr.mxu0 0.0
    %3185 = vmatpush1.msra.mxu0 0.0
    %3186 = vmatprep.subr.mxu0 0.0
    %3187 = vmatpush1.msra.mxu0 0.0
    %3188 = vmatprep.subr.mxu0 0.0
    %3189 = vmatpush1.msra.mxu0 0.0
    %3190 = vmatprep.subr.mxu0 0.0
    %3191 = vmatpush1.msra.mxu0 0.0
    %3192 = vmatprep.subr.mxu0 0.0
    %3193 = vmatpush1.msra.mxu0 0.0
    %3194 = vmatprep.subr.mxu0 0.0
    %3195 = vmatpush1.msra.mxu0 0.0
    %3196 = vmatprep.subr.mxu0 0.0
    %3197 = vmatpush1.msra.mxu0 0.0
    %3198 = vmatprep.subr.mxu0 0.0
    %3199 = vmatpush1.msra.mxu0 0.0
    %3200 = vmatprep.subr.mxu0 0.0
    %3201 = vmatpush1.msra.mxu0 0.0
    %3202 = vmatprep.subr.mxu0 0.0
    %3203 = vmatpush1.msra.mxu0 0.0
    %3204 = vmatprep.subr.mxu0 0.0
    %3205 = vmatpush1.msra.mxu0 0.0
    %3206 = vmatprep.subr.mxu0 0.0
    %3207 = vmatpush1.msra.mxu0 0.0
    %3208 = vmatprep.subr.mxu0 0.0
    %3209 = vmatpush1.msra.mxu0 0.0
    %3210 = vmatprep.subr.mxu0 0.0
    %3211 = vmatpush1.msra.mxu0 0.0
    %3212 = vmatprep.subr.mxu0 0.0
    %3213 = vmatpush1.msra.mxu0 0.0
    %3214 = vmatprep.subr.mxu0 0.0
    %3215 = vmatpush1.msra.mxu0 0.0
    %3216 = vmatprep.subr.mxu0 0.0
    %3217 = vmatpush1.msra.mxu0 0.0
    %3218 = vmatprep.mubr.f32.mxu0 0.0
    %v3219 = vand.u32 %v1044, 4294901760
    %v3220 = vsub.f32 %v1044, %v3219
    %3221 = vmatmul.mubr.f32.gmra.mrb[0].mxu0 %v3220
    %v3222 = vpop.f32.mrb[0].mxu0
    %v3223 = vadd.f32 %v3124, %v3222
    %v3224 = vpop.f32.mrb[0].mxu0
    %v3225 = vadd.f32 %v3126, %v3224
    %3226 = vmatprep.mubr.f32.mxu0 0.0
    %v3227 = vand.u32 %v1047, 4294901760
    %v3228 = vsub.f32 %v1047, %v3227
    %3229 = vmatmul.mubr.f32.gmra.mrb[0].mxu0 %v3228
    %v3230 = vpop.f32.mrb[0].mxu0
    %v3231 = vadd.f32 %v3131, %v3230
    %v3232 = vpop.f32.mrb[0].mxu0
    %v3233 = vadd.f32 %v3133, %v3232
    %3234 = vmatprep.mubr.f32.mxu0 0.0
    %v3235 = vand.u32 %v1050, 4294901760
    %v3236 = vsub.f32 %v1050, %v3235
    %3237 = vmatmul.mubr.f32.gmra.mrb[0].mxu0 %v3236
    %v3238 = vpop.f32.mrb[0].mxu0
    %v3239 = vadd.f32 %v3138, %v3238
    %v3240 = vpop.f32.mrb[0].mxu0
    %v3241 = vadd.f32 %v3140, %v3240
    %3242 = vdwg.mxu0
    %v3243 = vand.u32 %v1004, 4294901760
    %3244 = vmatprep.subr.mxu0 %v3243
    %v3245 = vand.u32 %v1003, 4294901760
    %3246 = vmatpush1.msra.mxu0 %v3245
    %v3247 = vand.u32 %v1012, 4294901760
    %3248 = vmatprep.subr.mxu0 %v3247
    %v3249 = vand.u32 %v1011, 4294901760
    %3250 = vmatpush1.msra.mxu0 %v3249
    %v3251 = vand.u32 %v1075, 4294901760
    %3252 = vmatprep.subr.mxu0 %v3251
    %v3253 = vand.u32 %v1072, 4294901760
    %3254 = vmatpush1.msra.mxu0 %v3253
    %3255 = vmatprep.subr.mxu0 0.0
    %3256 = vmatpush1.msra.mxu0 0.0
    %3257 = vmatprep.subr.mxu0 0.0
    %3258 = vmatpush1.msra.mxu0 0.0
    %3259 = vmatprep.subr.mxu0 0.0
    %3260 = vmatpush1.msra.mxu0 0.0
    %3261 = vmatprep.subr.mxu0 0.0
    %3262 = vmatpush1.msra.mxu0 0.0
    %3263 = vmatprep.subr.mxu0 0.0
    %3264 = vmatpush1.msra.mxu0 0.0
    %3265 = vmatprep.subr.mxu0 0.0
    %3266 = vmatpush1.msra.mxu0 0.0
    %3267 = vmatprep.subr.mxu0 0.0
    %3268 = vmatpush1.msra.mxu0 0.0
    %3269 = vmatprep.subr.mxu0 0.0
    %3270 = vmatpush1.msra.mxu0 0.0
    %3271 = vmatprep.subr.mxu0 0.0
    %3272 = vmatpush1.msra.mxu0 0.0
    %3273 = vmatprep.subr.mxu0 0.0
    %3274 = vmatpush1.msra.mxu0 0.0
    %3275 = vmatprep.subr.mxu0 0.0
    %3276 = vmatpush1.msra.mxu0 0.0
    %3277 = vmatprep.subr.mxu0 0.0
    %3278 = vmatpush1.msra.mxu0 0.0
    %3279 = vmatprep.subr.mxu0 0.0
    %3280 = vmatpush1.msra.mxu0 0.0
    %3281 = vmatprep.subr.mxu0 0.0
    %3282 = vmatpush1.msra.mxu0 0.0
    %3283 = vmatprep.subr.mxu0 0.0
    %3284 = vmatpush1.msra.mxu0 0.0
    %3285 = vmatprep.subr.mxu0 0.0
    %3286 = vmatpush1.msra.mxu0 0.0
    %3287 = vmatprep.subr.mxu0 0.0
    %3288 = vmatpush1.msra.mxu0 0.0
    %3289 = vmatprep.subr.mxu0 0.0
    %3290 = vmatpush1.msra.mxu0 0.0
    %3291 = vmatprep.subr.mxu0 0.0
    %3292 = vmatpush1.msra.mxu0 0.0
    %3293 = vmatprep.subr.mxu0 0.0
    %3294 = vmatpush1.msra.mxu0 0.0
    %3295 = vmatprep.subr.mxu0 0.0
    %3296 = vmatpush1.msra.mxu0 0.0
    %3297 = vmatprep.subr.mxu0 0.0
    %3298 = vmatpush1.msra.mxu0 0.0
    %3299 = vmatprep.subr.mxu0 0.0
    %3300 = vmatpush1.msra.mxu0 0.0
    %3301 = vmatprep.subr.mxu0 0.0
    %3302 = vmatpush1.msra.mxu0 0.0
    %3303 = vmatprep.subr.mxu0 0.0
    %3304 = vmatpush1.msra.mxu0 0.0
    %3305 = vmatprep.subr.mxu0 0.0
    %3306 = vmatpush1.msra.mxu0 0.0
    %3307 = vmatprep.subr.mxu0 0.0
    %3308 = vmatpush1.msra.mxu0 0.0
    %3309 = vmatprep.subr.mxu0 0.0
    %3310 = vmatpush1.msra.mxu0 0.0
    %3311 = vmatprep.subr.mxu0 0.0
    %3312 = vmatpush1.msra.mxu0 0.0
    %3313 = vmatprep.mubr.f32.mxu0 0.0
    %v3314 = vand.u32 %v1044, 4294901760
    %v3315 = vsub.f32 %v1044, %v3314
    %v3316 = vand.u32 %v3315, 4294901760
    %3317 = vmatmul.mubr.f32.gmra.mrb[0].mxu0 %v3316
    %v3318 = vpop.f32.mrb[0].mxu0
    %v3319 = vadd.f32 %v3223, %v3318
    %v3320 = vpop.f32.mrb[0].mxu0
    %v3321 = vadd.f32 %v3225, %v3320
    %3322 = vmatprep.mubr.f32.mxu0 0.0
    %v3323 = vand.u32 %v1047, 4294901760
    %v3324 = vsub.f32 %v1047, %v3323
    %v3325 = vand.u32 %v3324, 4294901760
    %3326 = vmatmul.mubr.f32.gmra.mrb[0].mxu0 %v3325
    %v3327 = vpop.f32.mrb[0].mxu0
    %v3328 = vadd.f32 %v3231, %v3327
    %v3329 = vpop.f32.mrb[0].mxu0
    %v3330 = vadd.f32 %v3233, %v3329
    %3331 = vmatprep.mubr.f32.mxu0 0.0
    %v3332 = vand.u32 %v1050, 4294901760
    %v3333 = vsub.f32 %v1050, %v3332
    %v3334 = vand.u32 %v3333, 4294901760
    %3335 = vmatmul.mubr.f32.gmra.mrb[0].mxu0 %v3334
    %v3336 = vpop.f32.mrb[0].mxu0
    %v3337 = vadd.f32 %v3239, %v3336
    %v3338 = vpop.f32.mrb[0].mxu0
    %v3339 = vadd.f32 %v3241, %v3338
    %3340 = vdwg.mxu0
    %v3341 = vand.u32 %v1004, 4294901760
    %v3342 = vsub.f32 %v1004, %v3341
    %v3343 = vand.u32 %v3342, 4294901760
    %3344 = vmatprep.subr.mxu0 %v3343
    %v3345 = vand.u32 %v1003, 4294901760
    %v3346 = vsub.f32 %v1003, %v3345
    %v3347 = vand.u32 %v3346, 4294901760
    %3348 = vmatpush1.msra.mxu0 %v3347
    %v3349 = vand.u32 %v1012, 4294901760
    %v3350 = vsub.f32 %v1012, %v3349
    %v3351 = vand.u32 %v3350, 4294901760
    %3352 = vmatprep.subr.mxu0 %v3351
    %v3353 = vand.u32 %v1011, 4294901760
    %v3354 = vsub.f32 %v1011, %v3353
    %v3355 = vand.u32 %v3354, 4294901760
    %3356 = vmatpush1.msra.mxu0 %v3355
    %v3357 = vand.u32 %v1075, 4294901760
    %v3358 = vsub.f32 %v1075, %v3357
    %v3359 = vand.u32 %v3358, 4294901760
    %3360 = vmatprep.subr.mxu0 %v3359
    %v3361 = vand.u32 %v1072, 4294901760
    %v3362 = vsub.f32 %v1072, %v3361
    %v3363 = vand.u32 %v3362, 4294901760
    %3364 = vmatpush1.msra.mxu0 %v3363
    %3365 = vmatprep.subr.mxu0 0.0
    %3366 = vmatpush1.msra.mxu0 0.0
    %3367 = vmatprep.subr.mxu0 0.0
    %3368 = vmatpush1.msra.mxu0 0.0
    %3369 = vmatprep.subr.mxu0 0.0
    %3370 = vmatpush1.msra.mxu0 0.0
    %3371 = vmatprep.subr.mxu0 0.0
    %3372 = vmatpush1.msra.mxu0 0.0
    %3373 = vmatprep.subr.mxu0 0.0
    %3374 = vmatpush1.msra.mxu0 0.0
    %3375 = vmatprep.subr.mxu0 0.0
    %3376 = vmatpush1.msra.mxu0 0.0
    %3377 = vmatprep.subr.mxu0 0.0
    %3378 = vmatpush1.msra.mxu0 0.0
    %3379 = vmatprep.subr.mxu0 0.0
    %3380 = vmatpush1.msra.mxu0 0.0
    %3381 = vmatprep.subr.mxu0 0.0
    %3382 = vmatpush1.msra.mxu0 0.0
    %3383 = vmatprep.subr.mxu0 0.0
    %3384 = vmatpush1.msra.mxu0 0.0
    %3385 = vmatprep.subr.mxu0 0.0
    %3386 = vmatpush1.msra.mxu0 0.0
    %3387 = vmatprep.subr.mxu0 0.0
    %3388 = vmatpush1.msra.mxu0 0.0
    %3389 = vmatprep.subr.mxu0 0.0
    %3390 = vmatpush1.msra.mxu0 0.0
    %3391 = vmatprep.subr.mxu0 0.0
    %3392 = vmatpush1.msra.mxu0 0.0
    %3393 = vmatprep.subr.mxu0 0.0
    %3394 = vmatpush1.msra.mxu0 0.0
    %3395 = vmatprep.subr.mxu0 0.0
    %3396 = vmatpush1.msra.mxu0 0.0
    %3397 = vmatprep.subr.mxu0 0.0
    %3398 = vmatpush1.msra.mxu0 0.0
    %3399 = vmatprep.subr.mxu0 0.0
    %3400 = vmatpush1.msra.mxu0 0.0
    %3401 = vmatprep.subr.mxu0 0.0
    %3402 = vmatpush1.msra.mxu0 0.0
    %3403 = vmatprep.subr.mxu0 0.0
    %3404 = vmatpush1.msra.mxu0 0.0
    %3405 = vmatprep.subr.mxu0 0.0
    %3406 = vmatpush1.msra.mxu0 0.0
    %3407 = vmatprep.subr.mxu0 0.0
    %3408 = vmatpush1.msra.mxu0 0.0
    %3409 = vmatprep.subr.mxu0 0.0
    %3410 = vmatpush1.msra.mxu0 0.0
    %3411 = vmatprep.subr.mxu0 0.0
    %3412 = vmatpush1.msra.mxu0 0.0
    %3413 = vmatprep.subr.mxu0 0.0
    %3414 = vmatpush1.msra.mxu0 0.0
    %3415 = vmatprep.subr.mxu0 0.0
    %3416 = vmatpush1.msra.mxu0 0.0
    %3417 = vmatprep.subr.mxu0 0.0
    %3418 = vmatpush1.msra.mxu0 0.0
    %3419 = vmatprep.subr.mxu0 0.0
    %3420 = vmatpush1.msra.mxu0 0.0
    %3421 = vmatprep.subr.mxu0 0.0
    %3422 = vmatpush1.msra.mxu0 0.0
    %3423 = vmatprep.mubr.f32.mxu0 0.0
    %v3424 = vand.u32 %v1044, 4294901760
    %3425 = vmatmul.mubr.f32.gmra.mrb[0].mxu0 %v3424
    %v3426 = vpop.f32.mrb[0].mxu0
    %v3427 = vadd.f32 %v3319, %v3426
    %v3428 = vpop.f32.mrb[0].mxu0
    %v3429 = vadd.f32 %v3321, %v3428
    %3430 = vmatprep.mubr.f32.mxu0 0.0
    %v3431 = vand.u32 %v1047, 4294901760
    %3432 = vmatmul.mubr.f32.gmra.mrb[0].mxu0 %v3431
    %v3433 = vpop.f32.mrb[0].mxu0
    %v3434 = vadd.f32 %v3328, %v3433
    %v3435 = vpop.f32.mrb[0].mxu0
    %v3436 = vadd.f32 %v3330, %v3435
    %3437 = vmatprep.mubr.f32.mxu0 0.0
    %v3438 = vand.u32 %v1050, 4294901760
    %3439 = vmatmul.mubr.f32.gmra.mrb[0].mxu0 %v3438
    %v3440 = vpop.f32.mrb[0].mxu0
    %v3441 = vadd.f32 %v3337, %v3440
    %v3442 = vpop.f32.mrb[0].mxu0
    %v3443 = vadd.f32 %v3339, %v3442
    %3444 = vdwg.mxu0
    %v3445 = vand.u32 %v1004, 4294901760
    %3446 = vmatprep.subr.mxu0 %v3445
    %v3447 = vand.u32 %v1003, 4294901760
    %3448 = vmatpush1.msra.mxu0 %v3447
    %v3449 = vand.u32 %v1012, 4294901760
    %3450 = vmatprep.subr.mxu0 %v3449
    %v3451 = vand.u32 %v1011, 4294901760
    %3452 = vmatpush1.msra.mxu0 %v3451
    %v3453 = vand.u32 %v1075, 4294901760
    %3454 = vmatprep.subr.mxu0 %v3453
    %v3455 = vand.u32 %v1072, 4294901760
    %3456 = vmatpush1.msra.mxu0 %v3455
    %3457 = vmatprep.subr.mxu0 0.0
    %3458 = vmatpush1.msra.mxu0 0.0
    %3459 = vmatprep.subr.mxu0 0.0
    %3460 = vmatpush1.msra.mxu0 0.0
    %3461 = vmatprep.subr.mxu0 0.0
    %3462 = vmatpush1.msra.mxu0 0.0
    %3463 = vmatprep.subr.mxu0 0.0
    %3464 = vmatpush1.msra.mxu0 0.0
    %3465 = vmatprep.subr.mxu0 0.0
    %3466 = vmatpush1.msra.mxu0 0.0
    %3467 = vmatprep.subr.mxu0 0.0
    %3468 = vmatpush1.msra.mxu0 0.0
    %3469 = vmatprep.subr.mxu0 0.0
    %3470 = vmatpush1.msra.mxu0 0.0
    %3471 = vmatprep.subr.mxu0 0.0
    %3472 = vmatpush1.msra.mxu0 0.0
    %3473 = vmatprep.subr.mxu0 0.0
    %3474 = vmatpush1.msra.mxu0 0.0
    %3475 = vmatprep.subr.mxu0 0.0
    %3476 = vmatpush1.msra.mxu0 0.0
    %3477 = vmatprep.subr.mxu0 0.0
    %3478 = vmatpush1.msra.mxu0 0.0
    %3479 = vmatprep.subr.mxu0 0.0
    %3480 = vmatpush1.msra.mxu0 0.0
    %3481 = vmatprep.subr.mxu0 0.0
    %3482 = vmatpush1.msra.mxu0 0.0
    %3483 = vmatprep.subr.mxu0 0.0
    %3484 = vmatpush1.msra.mxu0 0.0
    %3485 = vmatprep.subr.mxu0 0.0
    %3486 = vmatpush1.msra.mxu0 0.0
    %3487 = vmatprep.subr.mxu0 0.0
    %3488 = vmatpush1.msra.mxu0 0.0
    %3489 = vmatprep.subr.mxu0 0.0
    %3490 = vmatpush1.msra.mxu0 0.0
    %3491 = vmatprep.subr.mxu0 0.0
    %3492 = vmatpush1.msra.mxu0 0.0
    %3493 = vmatprep.subr.mxu0 0.0
    %3494 = vmatpush1.msra.mxu0 0.0
    %3495 = vmatprep.subr.mxu0 0.0
    %3496 = vmatpush1.msra.mxu0 0.0
    %3497 = vmatprep.subr.mxu0 0.0
    %3498 = vmatpush1.msra.mxu0 0.0
    %3499 = vmatprep.subr.mxu0 0.0
    %3500 = vmatpush1.msra.mxu0 0.0
    %3501 = vmatprep.subr.mxu0 0.0
    %3502 = vmatpush1.msra.mxu0 0.0
    %3503 = vmatprep.subr.mxu0 0.0
    %3504 = vmatpush1.msra.mxu0 0.0
    %3505 = vmatprep.subr.mxu0 0.0
    %3506 = vmatpush1.msra.mxu0 0.0
    %3507 = vmatprep.subr.mxu0 0.0
    %3508 = vmatpush1.msra.mxu0 0.0
    %3509 = vmatprep.subr.mxu0 0.0
    %3510 = vmatpush1.msra.mxu0 0.0
    %3511 = vmatprep.subr.mxu0 0.0
    %3512 = vmatpush1.msra.mxu0 0.0
    %3513 = vmatprep.subr.mxu0 0.0
    %3514 = vmatpush1.msra.mxu0 0.0
    %3515 = vmatprep.mubr.f32.mxu0 0.0
    %v3516 = vand.u32 %v1044, 4294901760
    %3517 = vmatmul.mubr.f32.gmra.mrb[0].mxu0 %v3516
    %v3518 = vpop.f32.mrb[0].mxu0
    %v3519 = vadd.f32 %v3427, %v3518
    %v3520 = vpop.f32.mrb[0].mxu0
    %v3521 = vadd.f32 %v3429, %v3520
    %3522 = vmatprep.mubr.f32.mxu0 0.0
    %v3523 = vand.u32 %v1047, 4294901760
    %3524 = vmatmul.mubr.f32.gmra.mrb[0].mxu0 %v3523
    %v3525 = vpop.f32.mrb[0].mxu0
    %v3526 = vadd.f32 %v3434, %v3525
    %v3527 = vpop.f32.mrb[0].mxu0
    %v3528 = vadd.f32 %v3436, %v3527
    %3529 = vmatprep.mubr.f32.mxu0 0.0
    %v3530 = vand.u32 %v1050, 4294901760
    %3531 = vmatmul.mubr.f32.gmra.mrb[0].mxu0 %v3530
    %v3532 = vpop.f32.mrb[0].mxu0
    %v3533 = vadd.f32 %v3441, %v3532
    %v3534 = vpop.f32.mrb[0].mxu0
    %v3535 = vadd.f32 %v3443, %v3534
    %3536 = vdwg.mxu0
    %v3537 = vtanh.pop %v1674
    %v3538 = vtanh.pop %v1676
    %v3539 = vtanh.pop %v2289
    %v3540 = vtanh.pop %v2291
    %v3541 = vtanh.pop %v2904
    %v3542 = vtanh.pop %v2906
    %v3543 = vtanh.pop %v3519
    %v3544 = vtanh.pop %v3521
    %v3545 = vtanh.pop %v1681
    %v3546 = vtanh.pop %v1683
    %v3547 = vtanh.pop %v2296
    %v3548 = vtanh.pop %v2298
    %v3549 = vtanh.pop %v2911
    %v3550 = vtanh.pop %v2913
    %v3551 = vtanh.pop %v3526
    %v3552 = vtanh.pop %v3528
    %v3553 = vtanh.pop %v1688
    %v3554 = vtanh.pop %v1690
    %v3555 = vtanh.pop %v2303
    %v3556 = vtanh.pop %v2305
    %v3557 = vtanh.pop %v2918
    %v3558 = vtanh.pop %v2920
    %v3559 = vtanh.pop %v3533
    %v3560 = vtanh.pop %v3535
    %v3561 = vmul.f32 %v3537, %v721
    %v3562 = vmul.f32 %v3538, %v722
    %v3563 = vmul.f32 %v3539, %v723
    %v3564 = vmul.f32 %v3540, %v724
    %v3565 = vmul.f32 %v3541, %v725
    %v3566 = vmul.f32 %v3542, %v726
    %v3567 = vmul.f32 %v3543, %v727
    %v3568 = vmul.f32 %v3544, %v728
    %v3569 = vmul.f32 %v3545, %v729
    %v3570 = vmul.f32 %v3546, %v730
    %v3571 = vmul.f32 %v3547, %v731
    %v3572 = vmul.f32 %v3548, %v732
    %v3573 = vmul.f32 %v3549, %v733
    %v3574 = vmul.f32 %v3550, %v734
    %v3575 = vmul.f32 %v3551, %v735
    %v3576 = vmul.f32 %v3552, %v736
    %v3577 = vmul.f32 %v3553, %v737
    %v3578 = vmul.f32 %v3554, %v738
    %v3579 = vmul.f32 %v3555, %v739
    %v3580 = vmul.f32 %v3556, %v740
    %v3581 = vmul.f32 %v3557, %v741
    %v3582 = vmul.f32 %v3558, %v742
    %v3583 = vmul.f32 %v3559, %v743
    %v3584 = vmul.f32 %v3560, %v744
    %v3585 = vadd.f32 %v697, %v3561
    %v3586 = vadd.f32 %v698, %v3562
    %v3587 = vadd.f32 %v699, %v3563
    %v3588 = vadd.f32 %v700, %v3564
    %v3589 = vadd.f32 %v701, %v3565
    %v3590 = vadd.f32 %v702, %v3566
    %v3591 = vadd.f32 %v703, %v3567
    %v3592 = vadd.f32 %v704, %v3568
    %v3593 = vadd.f32 %v705, %v3569
    %v3594 = vadd.f32 %v706, %v3570
    %v3595 = vadd.f32 %v707, %v3571
    %v3596 = vadd.f32 %v708, %v3572
    %v3597 = vadd.f32 %v709, %v3573
    %v3598 = vadd.f32 %v710, %v3574
    %v3599 = vadd.f32 %v711, %v3575
    %v3600 = vadd.f32 %v712, %v3576
    %v3601 = vadd.f32 %v713, %v3577
    %v3602 = vadd.f32 %v714, %v3578
    %v3603 = vadd.f32 %v715, %v3579
    %v3604 = vadd.f32 %v716, %v3580
    %v3605 = vadd.f32 %v717, %v3581
    %v3606 = vadd.f32 %v718, %v3582
    %v3607 = vadd.f32 %v719, %v3583
    %v3608 = vadd.f32 %v720, %v3584
    %v3609 = vld [vmem:[%s9] sm:$0x1]
    %v3610 = vld [vmem:[#allocation2] sm:$0x1]
    %3612 = vset.pattern.permute.xlu0 0
    %3613 = vperm.xlu0 %3612, %v3610
    %v3614 = vpop.permute.xlu0 %3613
    %v3616 = vlaneseq
    %v3617 = vshrl.u32 %v3616, 7
    %v3618 = vsub.s32 0, %v3617
    %v3619 = vrot.slane %v3614, %v3618
    %v3621 = vsel %vm1042, %v3609, 0
    %v3624 = vsel %vm1052, %v3601, 0
    %v3627 = vsel %vm1052, %v3602, 0
    %v3630 = vsel %vm1052, %v3603, 0
    %v3633 = vsel %vm1052, %v3604, 0
    %v3636 = vsel %vm1052, %v3605, 0
    %v3639 = vsel %vm1052, %v3606, 0
    %v3642 = vsel %vm1052, %v3607, 0
    %v3645 = vsel %vm1052, %v3608, 0
    %v3647 = vand.u32 %v3586, 4294901760
    %3648 = vmatprep.subr.mxu0 %v3647
    %v3649 = vand.u32 %v3585, 4294901760
    %3650 = vmatpush1.msra.mxu0 %v3649
    %v3651 = vand.u32 %v3594, 4294901760
    %3652 = vmatprep.subr.mxu0 %v3651
    %v3653 = vand.u32 %v3593, 4294901760
    %3654 = vmatpush1.msra.mxu0 %v3653
    %v3655 = vand.u32 %v3627, 4294901760
    %3656 = vmatprep.subr.mxu0 %v3655
    %v3657 = vand.u32 %v3624, 4294901760
    %3658 = vmatpush1.msra.mxu0 %v3657
    %3659 = vmatprep.subr.mxu0 0.0
    %3660 = vmatpush1.msra.mxu0 0.0
    %3661 = vmatprep.subr.mxu0 0.0
    %3662 = vmatpush1.msra.mxu0 0.0
    %3663 = vmatprep.subr.mxu0 0.0
    %3664 = vmatpush1.msra.mxu0 0.0
    %3665 = vmatprep.subr.mxu0 0.0
    %3666 = vmatpush1.msra.mxu0 0.0
    %3667 = vmatprep.subr.mxu0 0.0
    %3668 = vmatpush1.msra.mxu0 0.0
    %3669 = vmatprep.subr.mxu0 0.0
    %3670 = vmatpush1.msra.mxu0 0.0
    %3671 = vmatprep.subr.mxu0 0.0
    %3672 = vmatpush1.msra.mxu0 0.0
    %3673 = vmatprep.subr.mxu0 0.0
    %3674 = vmatpush1.msra.mxu0 0.0
    %3675 = vmatprep.subr.mxu0 0.0
    %3676 = vmatpush1.msra.mxu0 0.0
    %3677 = vmatprep.subr.mxu0 0.0
    %3678 = vmatpush1.msra.mxu0 0.0
    %3679 = vmatprep.subr.mxu0 0.0
    %3680 = vmatpush1.msra.mxu0 0.0
    %3681 = vmatprep.subr.mxu0 0.0
    %3682 = vmatpush1.msra.mxu0 0.0
    %3683 = vmatprep.subr.mxu0 0.0
    %3684 = vmatpush1.msra.mxu0 0.0
    %3685 = vmatprep.subr.mxu0 0.0
    %3686 = vmatpush1.msra.mxu0 0.0
    %3687 = vmatprep.subr.mxu0 0.0
    %3688 = vmatpush1.msra.mxu0 0.0
    %3689 = vmatprep.subr.mxu0 0.0
    %3690 = vmatpush1.msra.mxu0 0.0
    %3691 = vmatprep.subr.mxu0 0.0
    %3692 = vmatpush1.msra.mxu0 0.0
    %3693 = vmatprep.subr.mxu0 0.0
    %3694 = vmatpush1.msra.mxu0 0.0
    %3695 = vmatprep.subr.mxu0 0.0
    %3696 = vmatpush1.msra.mxu0 0.0
    %3697 = vmatprep.subr.mxu0 0.0
    %3698 = vmatpush1.msra.mxu0 0.0
    %3699 = vmatprep.subr.mxu0 0.0
    %3700 = vmatpush1.msra.mxu0 0.0
    %3701 = vmatprep.subr.mxu0 0.0
    %3702 = vmatpush1.msra.mxu0 0.0
    %3703 = vmatprep.subr.mxu0 0.0
    %3704 = vmatpush1.msra.mxu0 0.0
    %3705 = vmatprep.subr.mxu0 0.0
    %3706 = vmatpush1.msra.mxu0 0.0
    %3707 = vmatprep.subr.mxu0 0.0
    %3708 = vmatpush1.msra.mxu0 0.0
    %3709 = vmatprep.subr.mxu0 0.0
    %3710 = vmatpush1.msra.mxu0 0.0
    %3711 = vmatprep.subr.mxu0 0.0
    %3712 = vmatpush1.msra.mxu0 0.0
    %3713 = vmatprep.subr.mxu0 0.0
    %3714 = vmatpush1.msra.mxu0 0.0
    %3715 = vmatprep.subr.mxu0 0.0
    %3716 = vmatpush1.msra.mxu0 0.0
    %3717 = vmatprep.mubr.f32.mxu0 0.0
    %v3718 = vand.u32 %v3621, 4294901760
    %v3719 = vsub.f32 %v3621, %v3718
    %v3720 = vand.u32 %v3719, 4294901760
    %v3721 = vsub.f32 %v3719, %v3720
    %v3722 = vand.u32 %v3721, 4294901760
    %3723 = vmatmul.mubr.f32.gmra.mrb[0].mxu0 %v3722
    %v3724 = vpop.f32.mrb[0].mxu0
    %v3725 = vadd.f32 %v3619, %v3724
    %v3726 = vpop.f32.mrb[0].mxu0
    %v3727 = vadd.f32 %v3619, %v3726
    %3728 = vdwg.mxu0
    %v3729 = vand.u32 %v3586, 4294901760
    %v3730 = vsub.f32 %v3586, %v3729
    %v3731 = vand.u32 %v3730, 4294901760
    %v3732 = vsub.f32 %v3730, %v3731
    %v3733 = vand.u32 %v3732, 4294901760
    %3734 = vmatprep.subr.mxu0 %v3733
    %v3735 = vand.u32 %v3585, 4294901760
    %v3736 = vsub.f32 %v3585, %v3735
    %v3737 = vand.u32 %v3736, 4294901760
    %v3738 = vsub.f32 %v3736, %v3737
    %v3739 = vand.u32 %v3738, 4294901760
    %3740 = vmatpush1.msra.mxu0 %v3739
    %v3741 = vand.u32 %v3594, 4294901760
    %v3742 = vsub.f32 %v3594, %v3741
    %v3743 = vand.u32 %v3742, 4294901760
    %v3744 = vsub.f32 %v3742, %v3743
    %v3745 = vand.u32 %v3744, 4294901760
    %3746 = vmatprep.subr.mxu0 %v3745
    %v3747 = vand.u32 %v3593, 4294901760
    %v3748 = vsub.f32 %v3593, %v3747
    %v3749 = vand.u32 %v3748, 4294901760
    %v3750 = vsub.f32 %v3748, %v3749
    %v3751 = vand.u32 %v3750, 4294901760
    %3752 = vmatpush1.msra.mxu0 %v3751
    %v3753 = vand.u32 %v3627, 4294901760
    %v3754 = vsub.f32 %v3627, %v3753
    %v3755 = vand.u32 %v3754, 4294901760
    %v3756 = vsub.f32 %v3754, %v3755
    %v3757 = vand.u32 %v3756, 4294901760
    %3758 = vmatprep.subr.mxu0 %v3757
    %v3759 = vand.u32 %v3624, 4294901760
    %v3760 = vsub.f32 %v3624, %v3759
    %v3761 = vand.u32 %v3760, 4294901760
    %v3762 = vsub.f32 %v3760, %v3761
    %v3763 = vand.u32 %v3762, 4294901760
    %3764 = vmatpush1.msra.mxu0 %v3763
    %3765 = vmatprep.subr.mxu0 0.0
    %3766 = vmatpush1.msra.mxu0 0.0
    %3767 = vmatprep.subr.mxu0 0.0
    %3768 = vmatpush1.msra.mxu0 0.0
    %3769 = vmatprep.subr.mxu0 0.0
    %3770 = vmatpush1.msra.mxu0 0.0
    %3771 = vmatprep.subr.mxu0 0.0
    %3772 = vmatpush1.msra.mxu0 0.0
    %3773 = vmatprep.subr.mxu0 0.0
    %3774 = vmatpush1.msra.mxu0 0.0
    %3775 = vmatprep.subr.mxu0 0.0
    %3776 = vmatpush1.msra.mxu0 0.0
    %3777 = vmatprep.subr.mxu0 0.0
    %3778 = vmatpush1.msra.mxu0 0.0
    %3779 = vmatprep.subr.mxu0 0.0
    %3780 = vmatpush1.msra.mxu0 0.0
    %3781 = vmatprep.subr.mxu0 0.0
    %3782 = vmatpush1.msra.mxu0 0.0
    %3783 = vmatprep.subr.mxu0 0.0
    %3784 = vmatpush1.msra.mxu0 0.0
    %3785 = vmatprep.subr.mxu0 0.0
    %3786 = vmatpush1.msra.mxu0 0.0
    %3787 = vmatprep.subr.mxu0 0.0
    %3788 = vmatpush1.msra.mxu0 0.0
    %3789 = vmatprep.subr.mxu0 0.0
    %3790 = vmatpush1.msra.mxu0 0.0
    %3791 = vmatprep.subr.mxu0 0.0
    %3792 = vmatpush1.msra.mxu0 0.0
    %3793 = vmatprep.subr.mxu0 0.0
    %3794 = vmatpush1.msra.mxu0 0.0
    %3795 = vmatprep.subr.mxu0 0.0
    %3796 = vmatpush1.msra.mxu0 0.0
    %3797 = vmatprep.subr.mxu0 0.0
    %3798 = vmatpush1.msra.mxu0 0.0
    %3799 = vmatprep.subr.mxu0 0.0
    %3800 = vmatpush1.msra.mxu0 0.0
    %3801 = vmatprep.subr.mxu0 0.0
    %3802 = vmatpush1.msra.mxu0 0.0
    %3803 = vmatprep.subr.mxu0 0.0
    %3804 = vmatpush1.msra.mxu0 0.0
    %3805 = vmatprep.subr.mxu0 0.0
    %3806 = vmatpush1.msra.mxu0 0.0
    %3807 = vmatprep.subr.mxu0 0.0
    %3808 = vmatpush1.msra.mxu0 0.0
    %3809 = vmatprep.subr.mxu0 0.0
    %3810 = vmatpush1.msra.mxu0 0.0
    %3811 = vmatprep.subr.mxu0 0.0
    %3812 = vmatpush1.msra.mxu0 0.0
    %3813 = vmatprep.subr.mxu0 0.0
    %3814 = vmatpush1.msra.mxu0 0.0
    %3815 = vmatprep.subr.mxu0 0.0
    %3816 = vmatpush1.msra.mxu0 0.0
    %3817 = vmatprep.subr.mxu0 0.0
    %3818 = vmatpush1.msra.mxu0 0.0
    %3819 = vmatprep.subr.mxu0 0.0
    %3820 = vmatpush1.msra.mxu0 0.0
    %3821 = vmatprep.subr.mxu0 0.0
    %3822 = vmatpush1.msra.mxu0 0.0
    %3823 = vmatprep.mubr.f32.mxu0 0.0
    %v3824 = vand.u32 %v3621, 4294901760
    %3825 = vmatmul.mubr.f32.gmra.mrb[0].mxu0 %v3824
    %v3826 = vpop.f32.mrb[0].mxu0
    %v3827 = vadd.f32 %v3725, %v3826
    %v3828 = vpop.f32.mrb[0].mxu0
    %v3829 = vadd.f32 %v3727, %v3828
    %3830 = vdwg.mxu0
    %v3831 = vand.u32 %v3586, 4294901760
    %v3832 = vsub.f32 %v3586, %v3831
    %3833 = vmatprep.subr.mxu0 %v3832
    %v3834 = vand.u32 %v3585, 4294901760
    %v3835 = vsub.f32 %v3585, %v3834
    %3836 = vmatpush1.msra.mxu0 %v3835
    %v3837 = vand.u32 %v3594, 4294901760
    %v3838 = vsub.f32 %v3594, %v3837
    %3839 = vmatprep.subr.mxu0 %v3838
    %v3840 = vand.u32 %v3593, 4294901760
    %v3841 = vsub.f32 %v3593, %v3840
    %3842 = vmatpush1.msra.mxu0 %v3841
    %v3843 = vand.u32 %v3627, 4294901760
    %v3844 = vsub.f32 %v3627, %v3843
    %3845 = vmatprep.subr.mxu0 %v3844
    %v3846 = vand.u32 %v3624, 4294901760
    %v3847 = vsub.f32 %v3624, %v3846
    %3848 = vmatpush1.msra.mxu0 %v3847
    %3849 = vmatprep.subr.mxu0 0.0
    %3850 = vmatpush1.msra.mxu0 0.0
    %3851 = vmatprep.subr.mxu0 0.0
    %3852 = vmatpush1.msra.mxu0 0.0
    %3853 = vmatprep.subr.mxu0 0.0
    %3854 = vmatpush1.msra.mxu0 0.0
    %3855 = vmatprep.subr.mxu0 0.0
    %3856 = vmatpush1.msra.mxu0 0.0
    %3857 = vmatprep.subr.mxu0 0.0
    %3858 = vmatpush1.msra.mxu0 0.0
    %3859 = vmatprep.subr.mxu0 0.0
    %3860 = vmatpush1.msra.mxu0 0.0
    %3861 = vmatprep.subr.mxu0 0.0
    %3862 = vmatpush1.msra.mxu0 0.0
    %3863 = vmatprep.subr.mxu0 0.0
    %3864 = vmatpush1.msra.mxu0 0.0
    %3865 = vmatprep.subr.mxu0 0.0
    %3866 = vmatpush1.msra.mxu0 0.0
    %3867 = vmatprep.subr.mxu0 0.0
    %3868 = vmatpush1.msra.mxu0 0.0
    %3869 = vmatprep.subr.mxu0 0.0
    %3870 = vmatpush1.msra.mxu0 0.0
    %3871 = vmatprep.subr.mxu0 0.0
    %3872 = vmatpush1.msra.mxu0 0.0
    %3873 = vmatprep.subr.mxu0 0.0
    %3874 = vmatpush1.msra.mxu0 0.0
    %3875 = vmatprep.subr.mxu0 0.0
    %3876 = vmatpush1.msra.mxu0 0.0
    %3877 = vmatprep.subr.mxu0 0.0
    %3878 = vmatpush1.msra.mxu0 0.0
    %3879 = vmatprep.subr.mxu0 0.0
    %3880 = vmatpush1.msra.mxu0 0.0
    %3881 = vmatprep.subr.mxu0 0.0
    %3882 = vmatpush1.msra.mxu0 0.0
    %3883 = vmatprep.subr.mxu0 0.0
    %3884 = vmatpush1.msra.mxu0 0.0
    %3885 = vmatprep.subr.mxu0 0.0
    %3886 = vmatpush1.msra.mxu0 0.0
    %3887 = vmatprep.subr.mxu0 0.0
    %3888 = vmatpush1.msra.mxu0 0.0
    %3889 = vmatprep.subr.mxu0 0.0
    %3890 = vmatpush1.msra.mxu0 0.0
    %3891 = vmatprep.subr.mxu0 0.0
    %3892 = vmatpush1.msra.mxu0 0.0
    %3893 = vmatprep.subr.mxu0 0.0
    %3894 = vmatpush1.msra.mxu0 0.0
    %3895 = vmatprep.subr.mxu0 0.0
    %3896 = vmatpush1.msra.mxu0 0.0
    %3897 = vmatprep.subr.mxu0 0.0
    %3898 = vmatpush1.msra.mxu0 0.0
    %3899 = vmatprep.subr.mxu0 0.0
    %3900 = vmatpush1.msra.mxu0 0.0
    %3901 = vmatprep.subr.mxu0 0.0
    %3902 = vmatpush1.msra.mxu0 0.0
    %3903 = vmatprep.subr.mxu0 0.0
    %3904 = vmatpush1.msra.mxu0 0.0
    %3905 = vmatprep.subr.mxu0 0.0
    %3906 = vmatpush1.msra.mxu0 0.0
    %3907 = vmatprep.mubr.f32.mxu0 0.0
    %v3908 = vand.u32 %v3621, 4294901760
    %v3909 = vsub.f32 %v3621, %v3908
    %3910 = vmatmul.mubr.f32.gmra.mrb[0].mxu0 %v3909
    %v3911 = vpop.f32.mrb[0].mxu0
    %v3912 = vadd.f32 %v3827, %v3911
    %v3913 = vpop.f32.mrb[0].mxu0
    %v3914 = vadd.f32 %v3829, %v3913
    %3915 = vdwg.mxu0
    %v3916 = vand.u32 %v3586, 4294901760
    %3917 = vmatprep.subr.mxu0 %v3916
    %v3918 = vand.u32 %v3585, 4294901760
    %3919 = vmatpush1.msra.mxu0 %v3918
    %v3920 = vand.u32 %v3594, 4294901760
    %3921 = vmatprep.subr.mxu0 %v3920
    %v3922 = vand.u32 %v3593, 4294901760
    %3923 = vmatpush1.msra.mxu0 %v3922
    %v3924 = vand.u32 %v3627, 4294901760
    %3925 = vmatprep.subr.mxu0 %v3924
    %v3926 = vand.u32 %v3624, 4294901760
    %3927 = vmatpush1.msra.mxu0 %v3926
    %3928 = vmatprep.subr.mxu0 0.0
    %3929 = vmatpush1.msra.mxu0 0.0
    %3930 = vmatprep.subr.mxu0 0.0
    %3931 = vmatpush1.msra.mxu0 0.0
    %3932 = vmatprep.subr.mxu0 0.0
    %3933 = vmatpush1.msra.mxu0 0.0
    %3934 = vmatprep.subr.mxu0 0.0
    %3935 = vmatpush1.msra.mxu0 0.0
    %3936 = vmatprep.subr.mxu0 0.0
    %3937 = vmatpush1.msra.mxu0 0.0
    %3938 = vmatprep.subr.mxu0 0.0
    %3939 = vmatpush1.msra.mxu0 0.0
    %3940 = vmatprep.subr.mxu0 0.0
    %3941 = vmatpush1.msra.mxu0 0.0
    %3942 = vmatprep.subr.mxu0 0.0
    %3943 = vmatpush1.msra.mxu0 0.0
    %3944 = vmatprep.subr.mxu0 0.0
    %3945 = vmatpush1.msra.mxu0 0.0
    %3946 = vmatprep.subr.mxu0 0.0
    %3947 = vmatpush1.msra.mxu0 0.0
    %3948 = vmatprep.subr.mxu0 0.0
    %3949 = vmatpush1.msra.mxu0 0.0
    %3950 = vmatprep.subr.mxu0 0.0
    %3951 = vmatpush1.msra.mxu0 0.0
    %3952 = vmatprep.subr.mxu0 0.0
    %3953 = vmatpush1.msra.mxu0 0.0
    %3954 = vmatprep.subr.mxu0 0.0
    %3955 = vmatpush1.msra.mxu0 0.0
    %3956 = vmatprep.subr.mxu0 0.0
    %3957 = vmatpush1.msra.mxu0 0.0
    %3958 = vmatprep.subr.mxu0 0.0
    %3959 = vmatpush1.msra.mxu0 0.0
    %3960 = vmatprep.subr.mxu0 0.0
    %3961 = vmatpush1.msra.mxu0 0.0
    %3962 = vmatprep.subr.mxu0 0.0
    %3963 = vmatpush1.msra.mxu0 0.0
    %3964 = vmatprep.subr.mxu0 0.0
    %3965 = vmatpush1.msra.mxu0 0.0
    %3966 = vmatprep.subr.mxu0 0.0
    %3967 = vmatpush1.msra.mxu0 0.0
    %3968 = vmatprep.subr.mxu0 0.0
    %3969 = vmatpush1.msra.mxu0 0.0
    %3970 = vmatprep.subr.mxu0 0.0
    %3971 = vmatpush1.msra.mxu0 0.0
    %3972 = vmatprep.subr.mxu0 0.0
    %3973 = vmatpush1.msra.mxu0 0.0
    %3974 = vmatprep.subr.mxu0 0.0
    %3975 = vmatpush1.msra.mxu0 0.0
    %3976 = vmatprep.subr.mxu0 0.0
    %3977 = vmatpush1.msra.mxu0 0.0
    %3978 = vmatprep.subr.mxu0 0.0
    %3979 = vmatpush1.msra.mxu0 0.0
    %3980 = vmatprep.subr.mxu0 0.0
    %3981 = vmatpush1.msra.mxu0 0.0
    %3982 = vmatprep.subr.mxu0 0.0
    %3983 = vmatpush1.msra.mxu0 0.0
    %3984 = vmatprep.subr.mxu0 0.0
    %3985 = vmatpush1.msra.mxu0 0.0
    %3986 = vmatprep.mubr.f32.mxu0 0.0
    %v3987 = vand.u32 %v3621, 4294901760
    %v3988 = vsub.f32 %v3621, %v3987
    %v3989 = vand.u32 %v3988, 4294901760
    %3990 = vmatmul.mubr.f32.gmra.mrb[0].mxu0 %v3989
    %v3991 = vpop.f32.mrb[0].mxu0
    %v3992 = vadd.f32 %v3912, %v3991
    %v3993 = vpop.f32.mrb[0].mxu0
    %v3994 = vadd.f32 %v3914, %v3993
    %3995 = vdwg.mxu0
    %v3996 = vand.u32 %v3586, 4294901760
    %v3997 = vsub.f32 %v3586, %v3996
    %v3998 = vand.u32 %v3997, 4294901760
    %3999 = vmatprep.subr.mxu0 %v3998
    %v4000 = vand.u32 %v3585, 4294901760
    %v4001 = vsub.f32 %v3585, %v4000
    %v4002 = vand.u32 %v4001, 4294901760
    %4003 = vmatpush1.msra.mxu0 %v4002
    %v4004 = vand.u32 %v3594, 4294901760
    %v4005 = vsub.f32 %v3594, %v4004
    %v4006 = vand.u32 %v4005, 4294901760
    %4007 = vmatprep.subr.mxu0 %v4006
    %v4008 = vand.u32 %v3593, 4294901760
    %v4009 = vsub.f32 %v3593, %v4008
    %v4010 = vand.u32 %v4009, 4294901760
    %4011 = vmatpush1.msra.mxu0 %v4010
    %v4012 = vand.u32 %v3627, 4294901760
    %v4013 = vsub.f32 %v3627, %v4012
    %v4014 = vand.u32 %v4013, 4294901760
    %4015 = vmatprep.subr.mxu0 %v4014
    %v4016 = vand.u32 %v3624, 4294901760
    %v4017 = vsub.f32 %v3624, %v4016
    %v4018 = vand.u32 %v4017, 4294901760
    %4019 = vmatpush1.msra.mxu0 %v4018
    %4020 = vmatprep.subr.mxu0 0.0
    %4021 = vmatpush1.msra.mxu0 0.0
    %4022 = vmatprep.subr.mxu0 0.0
    %4023 = vmatpush1.msra.mxu0 0.0
    %4024 = vmatprep.subr.mxu0 0.0
    %4025 = vmatpush1.msra.mxu0 0.0
    %4026 = vmatprep.subr.mxu0 0.0
    %4027 = vmatpush1.msra.mxu0 0.0
    %4028 = vmatprep.subr.mxu0 0.0
    %4029 = vmatpush1.msra.mxu0 0.0
    %4030 = vmatprep.subr.mxu0 0.0
    %4031 = vmatpush1.msra.mxu0 0.0
    %4032 = vmatprep.subr.mxu0 0.0
    %4033 = vmatpush1.msra.mxu0 0.0
    %4034 = vmatprep.subr.mxu0 0.0
    %4035 = vmatpush1.msra.mxu0 0.0
    %4036 = vmatprep.subr.mxu0 0.0
    %4037 = vmatpush1.msra.mxu0 0.0
    %4038 = vmatprep.subr.mxu0 0.0
    %4039 = vmatpush1.msra.mxu0 0.0
    %4040 = vmatprep.subr.mxu0 0.0
    %4041 = vmatpush1.msra.mxu0 0.0
    %4042 = vmatprep.subr.mxu0 0.0
    %4043 = vmatpush1.msra.mxu0 0.0
    %4044 = vmatprep.subr.mxu0 0.0
    %4045 = vmatpush1.msra.mxu0 0.0
    %4046 = vmatprep.subr.mxu0 0.0
    %4047 = vmatpush1.msra.mxu0 0.0
    %4048 = vmatprep.subr.mxu0 0.0
    %4049 = vmatpush1.msra.mxu0 0.0
    %4050 = vmatprep.subr.mxu0 0.0
    %4051 = vmatpush1.msra.mxu0 0.0
    %4052 = vmatprep.subr.mxu0 0.0
    %4053 = vmatpush1.msra.mxu0 0.0
    %4054 = vmatprep.subr.mxu0 0.0
    %4055 = vmatpush1.msra.mxu0 0.0
    %4056 = vmatprep.subr.mxu0 0.0
    %4057 = vmatpush1.msra.mxu0 0.0
    %4058 = vmatprep.subr.mxu0 0.0
    %4059 = vmatpush1.msra.mxu0 0.0
    %4060 = vmatprep.subr.mxu0 0.0
    %4061 = vmatpush1.msra.mxu0 0.0
    %4062 = vmatprep.subr.mxu0 0.0
    %4063 = vmatpush1.msra.mxu0 0.0
    %4064 = vmatprep.subr.mxu0 0.0
    %4065 = vmatpush1.msra.mxu0 0.0
    %4066 = vmatprep.subr.mxu0 0.0
    %4067 = vmatpush1.msra.mxu0 0.0
    %4068 = vmatprep.subr.mxu0 0.0
    %4069 = vmatpush1.msra.mxu0 0.0
    %4070 = vmatprep.subr.mxu0 0.0
    %4071 = vmatpush1.msra.mxu0 0.0
    %4072 = vmatprep.subr.mxu0 0.0
    %4073 = vmatpush1.msra.mxu0 0.0
    %4074 = vmatprep.subr.mxu0 0.0
    %4075 = vmatpush1.msra.mxu0 0.0
    %4076 = vmatprep.subr.mxu0 0.0
    %4077 = vmatpush1.msra.mxu0 0.0
    %4078 = vmatprep.mubr.f32.mxu0 0.0
    %v4079 = vand.u32 %v3621, 4294901760
    %4080 = vmatmul.mubr.f32.gmra.mrb[0].mxu0 %v4079
    %v4081 = vpop.f32.mrb[0].mxu0
    %v4082 = vadd.f32 %v3992, %v4081
    %v4083 = vpop.f32.mrb[0].mxu0
    %v4084 = vadd.f32 %v3994, %v4083
    %4085 = vdwg.mxu0
    %v4086 = vand.u32 %v3586, 4294901760
    %4087 = vmatprep.subr.mxu0 %v4086
    %v4088 = vand.u32 %v3585, 4294901760
    %4089 = vmatpush1.msra.mxu0 %v4088
    %v4090 = vand.u32 %v3594, 4294901760
    %4091 = vmatprep.subr.mxu0 %v4090
    %v4092 = vand.u32 %v3593, 4294901760
    %4093 = vmatpush1.msra.mxu0 %v4092
    %v4094 = vand.u32 %v3627, 4294901760
    %4095 = vmatprep.subr.mxu0 %v4094
    %v4096 = vand.u32 %v3624, 4294901760
    %4097 = vmatpush1.msra.mxu0 %v4096
    %4098 = vmatprep.subr.mxu0 0.0
    %4099 = vmatpush1.msra.mxu0 0.0
    %4100 = vmatprep.subr.mxu0 0.0
    %4101 = vmatpush1.msra.mxu0 0.0
    %4102 = vmatprep.subr.mxu0 0.0
    %4103 = vmatpush1.msra.mxu0 0.0
    %4104 = vmatprep.subr.mxu0 0.0
    %4105 = vmatpush1.msra.mxu0 0.0
    %4106 = vmatprep.subr.mxu0 0.0
    %4107 = vmatpush1.msra.mxu0 0.0
    %4108 = vmatprep.subr.mxu0 0.0
    %4109 = vmatpush1.msra.mxu0 0.0
    %4110 = vmatprep.subr.mxu0 0.0
    %4111 = vmatpush1.msra.mxu0 0.0
    %4112 = vmatprep.subr.mxu0 0.0
    %4113 = vmatpush1.msra.mxu0 0.0
    %4114 = vmatprep.subr.mxu0 0.0
    %4115 = vmatpush1.msra.mxu0 0.0
    %4116 = vmatprep.subr.mxu0 0.0
    %4117 = vmatpush1.msra.mxu0 0.0
    %4118 = vmatprep.subr.mxu0 0.0
    %4119 = vmatpush1.msra.mxu0 0.0
    %4120 = vmatprep.subr.mxu0 0.0
    %4121 = vmatpush1.msra.mxu0 0.0
    %4122 = vmatprep.subr.mxu0 0.0
    %4123 = vmatpush1.msra.mxu0 0.0
    %4124 = vmatprep.subr.mxu0 0.0
    %4125 = vmatpush1.msra.mxu0 0.0
    %4126 = vmatprep.subr.mxu0 0.0
    %4127 = vmatpush1.msra.mxu0 0.0
    %4128 = vmatprep.subr.mxu0 0.0
    %4129 = vmatpush1.msra.mxu0 0.0
    %4130 = vmatprep.subr.mxu0 0.0
    %4131 = vmatpush1.msra.mxu0 0.0
    %4132 = vmatprep.subr.mxu0 0.0
    %4133 = vmatpush1.msra.mxu0 0.0
    %4134 = vmatprep.subr.mxu0 0.0
    %4135 = vmatpush1.msra.mxu0 0.0
    %4136 = vmatprep.subr.mxu0 0.0
    %4137 = vmatpush1.msra.mxu0 0.0
    %4138 = vmatprep.subr.mxu0 0.0
    %4139 = vmatpush1.msra.mxu0 0.0
    %4140 = vmatprep.subr.mxu0 0.0
    %4141 = vmatpush1.msra.mxu0 0.0
    %4142 = vmatprep.subr.mxu0 0.0
    %4143 = vmatpush1.msra.mxu0 0.0
    %4144 = vmatprep.subr.mxu0 0.0
    %4145 = vmatpush1.msra.mxu0 0.0
    %4146 = vmatprep.subr.mxu0 0.0
    %4147 = vmatpush1.msra.mxu0 0.0
    %4148 = vmatprep.subr.mxu0 0.0
    %4149 = vmatpush1.msra.mxu0 0.0
    %4150 = vmatprep.subr.mxu0 0.0
    %4151 = vmatpush1.msra.mxu0 0.0
    %4152 = vmatprep.subr.mxu0 0.0
    %4153 = vmatpush1.msra.mxu0 0.0
    %4154 = vmatprep.subr.mxu0 0.0
    %4155 = vmatpush1.msra.mxu0 0.0
    %4156 = vmatprep.mubr.f32.mxu0 0.0
    %v4157 = vand.u32 %v3621, 4294901760
    %4158 = vmatmul.mubr.f32.gmra.mrb[0].mxu0 %v4157
    %v4159 = vpop.f32.mrb[0].mxu0
    %v4160 = vadd.f32 %v4082, %v4159
    %v4161 = vpop.f32.mrb[0].mxu0
    %v4162 = vadd.f32 %v4084, %v4161
    %4163 = vdwg.mxu0
    %v4164 = vand.u32 %v3588, 4294901760
    %4165 = vmatprep.subr.mxu0 %v4164
    %v4166 = vand.u32 %v3587, 4294901760
    %4167 = vmatpush1.msra.mxu0 %v4166
    %v4168 = vand.u32 %v3596, 4294901760
    %4169 = vmatprep.subr.mxu0 %v4168
    %v4170 = vand.u32 %v3595, 4294901760
    %4171 = vmatpush1.msra.mxu0 %v4170
    %v4172 = vand.u32 %v3633, 4294901760
    %4173 = vmatprep.subr.mxu0 %v4172
    %v4174 = vand.u32 %v3630, 4294901760
    %4175 = vmatpush1.msra.mxu0 %v4174
    %4176 = vmatprep.subr.mxu0 0.0
    %4177 = vmatpush1.msra.mxu0 0.0
    %4178 = vmatprep.subr.mxu0 0.0
    %4179 = vmatpush1.msra.mxu0 0.0
    %4180 = vmatprep.subr.mxu0 0.0
    %4181 = vmatpush1.msra.mxu0 0.0
    %4182 = vmatprep.subr.mxu0 0.0
    %4183 = vmatpush1.msra.mxu0 0.0
    %4184 = vmatprep.subr.mxu0 0.0
    %4185 = vmatpush1.msra.mxu0 0.0
    %4186 = vmatprep.subr.mxu0 0.0
    %4187 = vmatpush1.msra.mxu0 0.0
    %4188 = vmatprep.subr.mxu0 0.0
    %4189 = vmatpush1.msra.mxu0 0.0
    %4190 = vmatprep.subr.mxu0 0.0
    %4191 = vmatpush1.msra.mxu0 0.0
    %4192 = vmatprep.subr.mxu0 0.0
    %4193 = vmatpush1.msra.mxu0 0.0
    %4194 = vmatprep.subr.mxu0 0.0
    %4195 = vmatpush1.msra.mxu0 0.0
    %4196 = vmatprep.subr.mxu0 0.0
    %4197 = vmatpush1.msra.mxu0 0.0
    %4198 = vmatprep.subr.mxu0 0.0
    %4199 = vmatpush1.msra.mxu0 0.0
    %4200 = vmatprep.subr.mxu0 0.0
    %4201 = vmatpush1.msra.mxu0 0.0
    %4202 = vmatprep.subr.mxu0 0.0
    %4203 = vmatpush1.msra.mxu0 0.0
    %4204 = vmatprep.subr.mxu0 0.0
    %4205 = vmatpush1.msra.mxu0 0.0
    %4206 = vmatprep.subr.mxu0 0.0
    %4207 = vmatpush1.msra.mxu0 0.0
    %4208 = vmatprep.subr.mxu0 0.0
    %4209 = vmatpush1.msra.mxu0 0.0
    %4210 = vmatprep.subr.mxu0 0.0
    %4211 = vmatpush1.msra.mxu0 0.0
    %4212 = vmatprep.subr.mxu0 0.0
    %4213 = vmatpush1.msra.mxu0 0.0
    %4214 = vmatprep.subr.mxu0 0.0
    %4215 = vmatpush1.msra.mxu0 0.0
    %4216 = vmatprep.subr.mxu0 0.0
    %4217 = vmatpush1.msra.mxu0 0.0
    %4218 = vmatprep.subr.mxu0 0.0
    %4219 = vmatpush1.msra.mxu0 0.0
    %4220 = vmatprep.subr.mxu0 0.0
    %4221 = vmatpush1.msra.mxu0 0.0
    %4222 = vmatprep.subr.mxu0 0.0
    %4223 = vmatpush1.msra.mxu0 0.0
    %4224 = vmatprep.subr.mxu0 0.0
    %4225 = vmatpush1.msra.mxu0 0.0
    %4226 = vmatprep.subr.mxu0 0.0
    %4227 = vmatpush1.msra.mxu0 0.0
    %4228 = vmatprep.subr.mxu0 0.0
    %4229 = vmatpush1.msra.mxu0 0.0
    %4230 = vmatprep.subr.mxu0 0.0
    %4231 = vmatpush1.msra.mxu0 0.0
    %4232 = vmatprep.subr.mxu0 0.0
    %4233 = vmatpush1.msra.mxu0 0.0
    %4234 = vmatprep.mubr.f32.mxu0 0.0
    %v4235 = vand.u32 %v3621, 4294901760
    %v4236 = vsub.f32 %v3621, %v4235
    %v4237 = vand.u32 %v4236, 4294901760
    %v4238 = vsub.f32 %v4236, %v4237
    %v4239 = vand.u32 %v4238, 4294901760
    %4240 = vmatmul.mubr.f32.gmra.mrb[0].mxu0 %v4239
    %v4241 = vpop.f32.mrb[0].mxu0
    %v4242 = vadd.f32 %v3619, %v4241
    %v4243 = vpop.f32.mrb[0].mxu0
    %v4244 = vadd.f32 %v3619, %v4243
    %4245 = vdwg.mxu0
    %v4246 = vand.u32 %v3588, 4294901760
    %v4247 = vsub.f32 %v3588, %v4246
    %v4248 = vand.u32 %v4247, 4294901760
    %v4249 = vsub.f32 %v4247, %v4248
    %v4250 = vand.u32 %v4249, 4294901760
    %4251 = vmatprep.subr.mxu0 %v4250
    %v4252 = vand.u32 %v3587, 4294901760
    %v4253 = vsub.f32 %v3587, %v4252
    %v4254 = vand.u32 %v4253, 4294901760
    %v4255 = vsub.f32 %v4253, %v4254
    %v4256 = vand.u32 %v4255, 4294901760
    %4257 = vmatpush1.msra.mxu0 %v4256
    %v4258 = vand.u32 %v3596, 4294901760
    %v4259 = vsub.f32 %v3596, %v4258
    %v4260 = vand.u32 %v4259, 4294901760
    %v4261 = vsub.f32 %v4259, %v4260
    %v4262 = vand.u32 %v4261, 4294901760
    %4263 = vmatprep.subr.mxu0 %v4262
    %v4264 = vand.u32 %v3595, 4294901760
    %v4265 = vsub.f32 %v3595, %v4264
    %v4266 = vand.u32 %v4265, 4294901760
    %v4267 = vsub.f32 %v4265, %v4266
    %v4268 = vand.u32 %v4267, 4294901760
    %4269 = vmatpush1.msra.mxu0 %v4268
    %v4270 = vand.u32 %v3633, 4294901760
    %v4271 = vsub.f32 %v3633, %v4270
    %v4272 = vand.u32 %v4271, 4294901760
    %v4273 = vsub.f32 %v4271, %v4272
    %v4274 = vand.u32 %v4273, 4294901760
    %4275 = vmatprep.subr.mxu0 %v4274
    %v4276 = vand.u32 %v3630, 4294901760
    %v4277 = vsub.f32 %v3630, %v4276
    %v4278 = vand.u32 %v4277, 4294901760
    %v4279 = vsub.f32 %v4277, %v4278
    %v4280 = vand.u32 %v4279, 4294901760
    %4281 = vmatpush1.msra.mxu0 %v4280
    %4282 = vmatprep.subr.mxu0 0.0
    %4283 = vmatpush1.msra.mxu0 0.0
    %4284 = vmatprep.subr.mxu0 0.0
    %4285 = vmatpush1.msra.mxu0 0.0
    %4286 = vmatprep.subr.mxu0 0.0
    %4287 = vmatpush1.msra.mxu0 0.0
    %4288 = vmatprep.subr.mxu0 0.0
    %4289 = vmatpush1.msra.mxu0 0.0
    %4290 = vmatprep.subr.mxu0 0.0
    %4291 = vmatpush1.msra.mxu0 0.0
    %4292 = vmatprep.subr.mxu0 0.0
    %4293 = vmatpush1.msra.mxu0 0.0
    %4294 = vmatprep.subr.mxu0 0.0
    %4295 = vmatpush1.msra.mxu0 0.0
    %4296 = vmatprep.subr.mxu0 0.0
    %4297 = vmatpush1.msra.mxu0 0.0
    %4298 = vmatprep.subr.mxu0 0.0
    %4299 = vmatpush1.msra.mxu0 0.0
    %4300 = vmatprep.subr.mxu0 0.0
    %4301 = vmatpush1.msra.mxu0 0.0
    %4302 = vmatprep.subr.mxu0 0.0
    %4303 = vmatpush1.msra.mxu0 0.0
    %4304 = vmatprep.subr.mxu0 0.0
    %4305 = vmatpush1.msra.mxu0 0.0
    %4306 = vmatprep.subr.mxu0 0.0
    %4307 = vmatpush1.msra.mxu0 0.0
    %4308 = vmatprep.subr.mxu0 0.0
    %4309 = vmatpush1.msra.mxu0 0.0
    %4310 = vmatprep.subr.mxu0 0.0
    %4311 = vmatpush1.msra.mxu0 0.0
    %4312 = vmatprep.subr.mxu0 0.0
    %4313 = vmatpush1.msra.mxu0 0.0
    %4314 = vmatprep.subr.mxu0 0.0
    %4315 = vmatpush1.msra.mxu0 0.0
    %4316 = vmatprep.subr.mxu0 0.0
    %4317 = vmatpush1.msra.mxu0 0.0
    %4318 = vmatprep.subr.mxu0 0.0
    %4319 = vmatpush1.msra.mxu0 0.0
    %4320 = vmatprep.subr.mxu0 0.0
    %4321 = vmatpush1.msra.mxu0 0.0
    %4322 = vmatprep.subr.mxu0 0.0
    %4323 = vmatpush1.msra.mxu0 0.0
    %4324 = vmatprep.subr.mxu0 0.0
    %4325 = vmatpush1.msra.mxu0 0.0
    %4326 = vmatprep.subr.mxu0 0.0
    %4327 = vmatpush1.msra.mxu0 0.0
    %4328 = vmatprep.subr.mxu0 0.0
    %4329 = vmatpush1.msra.mxu0 0.0
    %4330 = vmatprep.subr.mxu0 0.0
    %4331 = vmatpush1.msra.mxu0 0.0
    %4332 = vmatprep.subr.mxu0 0.0
    %4333 = vmatpush1.msra.mxu0 0.0
    %4334 = vmatprep.subr.mxu0 0.0
    %4335 = vmatpush1.msra.mxu0 0.0
    %4336 = vmatprep.subr.mxu0 0.0
    %4337 = vmatpush1.msra.mxu0 0.0
    %4338 = vmatprep.subr.mxu0 0.0
    %4339 = vmatpush1.msra.mxu0 0.0
    %4340 = vmatprep.mubr.f32.mxu0 0.0
    %v4341 = vand.u32 %v3621, 4294901760
    %4342 = vmatmul.mubr.f32.gmra.mrb[0].mxu0 %v4341
    %v4343 = vpop.f32.mrb[0].mxu0
    %v4344 = vadd.f32 %v4242, %v4343
    %v4345 = vpop.f32.mrb[0].mxu0
    %v4346 = vadd.f32 %v4244, %v4345
    %4347 = vdwg.mxu0
    %v4348 = vand.u32 %v3588, 4294901760
    %v4349 = vsub.f32 %v3588, %v4348
    %4350 = vmatprep.subr.mxu0 %v4349
    %v4351 = vand.u32 %v3587, 4294901760
    %v4352 = vsub.f32 %v3587, %v4351
    %4353 = vmatpush1.msra.mxu0 %v4352
    %v4354 = vand.u32 %v3596, 4294901760
    %v4355 = vsub.f32 %v3596, %v4354
    %4356 = vmatprep.subr.mxu0 %v4355
    %v4357 = vand.u32 %v3595, 4294901760
    %v4358 = vsub.f32 %v3595, %v4357
    %4359 = vmatpush1.msra.mxu0 %v4358
    %v4360 = vand.u32 %v3633, 4294901760
    %v4361 = vsub.f32 %v3633, %v4360
    %4362 = vmatprep.subr.mxu0 %v4361
    %v4363 = vand.u32 %v3630, 4294901760
    %v4364 = vsub.f32 %v3630, %v4363
    %4365 = vmatpush1.msra.mxu0 %v4364
    %4366 = vmatprep.subr.mxu0 0.0
    %4367 = vmatpush1.msra.mxu0 0.0
    %4368 = vmatprep.subr.mxu0 0.0
    %4369 = vmatpush1.msra.mxu0 0.0
    %4370 = vmatprep.subr.mxu0 0.0
    %4371 = vmatpush1.msra.mxu0 0.0
    %4372 = vmatprep.subr.mxu0 0.0
    %4373 = vmatpush1.msra.mxu0 0.0
    %4374 = vmatprep.subr.mxu0 0.0
    %4375 = vmatpush1.msra.mxu0 0.0
    %4376 = vmatprep.subr.mxu0 0.0
    %4377 = vmatpush1.msra.mxu0 0.0
    %4378 = vmatprep.subr.mxu0 0.0
    %4379 = vmatpush1.msra.mxu0 0.0
    %4380 = vmatprep.subr.mxu0 0.0
    %4381 = vmatpush1.msra.mxu0 0.0
    %4382 = vmatprep.subr.mxu0 0.0
    %4383 = vmatpush1.msra.mxu0 0.0
    %4384 = vmatprep.subr.mxu0 0.0
    %4385 = vmatpush1.msra.mxu0 0.0
    %4386 = vmatprep.subr.mxu0 0.0
    %4387 = vmatpush1.msra.mxu0 0.0
    %4388 = vmatprep.subr.mxu0 0.0
    %4389 = vmatpush1.msra.mxu0 0.0
    %4390 = vmatprep.subr.mxu0 0.0
    %4391 = vmatpush1.msra.mxu0 0.0
    %4392 = vmatprep.subr.mxu0 0.0
    %4393 = vmatpush1.msra.mxu0 0.0
    %4394 = vmatprep.subr.mxu0 0.0
    %4395 = vmatpush1.msra.mxu0 0.0
    %4396 = vmatprep.subr.mxu0 0.0
    %4397 = vmatpush1.msra.mxu0 0.0
    %4398 = vmatprep.subr.mxu0 0.0
    %4399 = vmatpush1.msra.mxu0 0.0
    %4400 = vmatprep.subr.mxu0 0.0
    %4401 = vmatpush1.msra.mxu0 0.0
    %4402 = vmatprep.subr.mxu0 0.0
    %4403 = vmatpush1.msra.mxu0 0.0
    %4404 = vmatprep.subr.mxu0 0.0
    %4405 = vmatpush1.msra.mxu0 0.0
    %4406 = vmatprep.subr.mxu0 0.0
    %4407 = vmatpush1.msra.mxu0 0.0
    %4408 = vmatprep.subr.mxu0 0.0
    %4409 = vmatpush1.msra.mxu0 0.0
    %4410 = vmatprep.subr.mxu0 0.0
    %4411 = vmatpush1.msra.mxu0 0.0
    %4412 = vmatprep.subr.mxu0 0.0
    %4413 = vmatpush1.msra.mxu0 0.0
    %4414 = vmatprep.subr.mxu0 0.0
    %4415 = vmatpush1.msra.mxu0 0.0
    %4416 = vmatprep.subr.mxu0 0.0
    %4417 = vmatpush1.msra.mxu0 0.0
    %4418 = vmatprep.subr.mxu0 0.0
    %4419 = vmatpush1.msra.mxu0 0.0
    %4420 = vmatprep.subr.mxu0 0.0
    %4421 = vmatpush1.msra.mxu0 0.0
    %4422 = vmatprep.subr.mxu0 0.0
    %4423 = vmatpush1.msra.mxu0 0.0
    %4424 = vmatprep.mubr.f32.mxu0 0.0
    %v4425 = vand.u32 %v3621, 4294901760
    %v4426 = vsub.f32 %v3621, %v4425
    %4427 = vmatmul.mubr.f32.gmra.mrb[0].mxu0 %v4426
    %v4428 = vpop.f32.mrb[0].mxu0
    %v4429 = vadd.f32 %v4344, %v4428
    %v4430 = vpop.f32.mrb[0].mxu0
    %v4431 = vadd.f32 %v4346, %v4430
    %4432 = vdwg.mxu0
    %v4433 = vand.u32 %v3588, 4294901760
    %4434 = vmatprep.subr.mxu0 %v4433
    %v4435 = vand.u32 %v3587, 4294901760
    %4436 = vmatpush1.msra.mxu0 %v4435
    %v4437 = vand.u32 %v3596, 4294901760
    %4438 = vmatprep.subr.mxu0 %v4437
    %v4439 = vand.u32 %v3595, 4294901760
    %4440 = vmatpush1.msra.mxu0 %v4439
    %v4441 = vand.u32 %v3633, 4294901760
    %4442 = vmatprep.subr.mxu0 %v4441
    %v4443 = vand.u32 %v3630, 4294901760
    %4444 = vmatpush1.msra.mxu0 %v4443
    %4445 = vmatprep.subr.mxu0 0.0
    %4446 = vmatpush1.msra.mxu0 0.0
    %4447 = vmatprep.subr.mxu0 0.0
    %4448 = vmatpush1.msra.mxu0 0.0
    %4449 = vmatprep.subr.mxu0 0.0
    %4450 = vmatpush1.msra.mxu0 0.0
    %4451 = vmatprep.subr.mxu0 0.0
    %4452 = vmatpush1.msra.mxu0 0.0
    %4453 = vmatprep.subr.mxu0 0.0
    %4454 = vmatpush1.msra.mxu0 0.0
    %4455 = vmatprep.subr.mxu0 0.0
    %4456 = vmatpush1.msra.mxu0 0.0
    %4457 = vmatprep.subr.mxu0 0.0
    %4458 = vmatpush1.msra.mxu0 0.0
    %4459 = vmatprep.subr.mxu0 0.0
    %4460 = vmatpush1.msra.mxu0 0.0
    %4461 = vmatprep.subr.mxu0 0.0
    %4462 = vmatpush1.msra.mxu0 0.0
    %4463 = vmatprep.subr.mxu0 0.0
    %4464 = vmatpush1.msra.mxu0 0.0
    %4465 = vmatprep.subr.mxu0 0.0
    %4466 = vmatpush1.msra.mxu0 0.0
    %4467 = vmatprep.subr.mxu0 0.0
    %4468 = vmatpush1.msra.mxu0 0.0
    %4469 = vmatprep.subr.mxu0 0.0
    %4470 = vmatpush1.msra.mxu0 0.0
    %4471 = vmatprep.subr.mxu0 0.0
    %4472 = vmatpush1.msra.mxu0 0.0
    %4473 = vmatprep.subr.mxu0 0.0
    %4474 = vmatpush1.msra.mxu0 0.0
    %4475 = vmatprep.subr.mxu0 0.0
    %4476 = vmatpush1.msra.mxu0 0.0
    %4477 = vmatprep.subr.mxu0 0.0
    %4478 = vmatpush1.msra.mxu0 0.0
    %4479 = vmatprep.subr.mxu0 0.0
    %4480 = vmatpush1.msra.mxu0 0.0
    %4481 = vmatprep.subr.mxu0 0.0
    %4482 = vmatpush1.msra.mxu0 0.0
    %4483 = vmatprep.subr.mxu0 0.0
    %4484 = vmatpush1.msra.mxu0 0.0
    %4485 = vmatprep.subr.mxu0 0.0
    %4486 = vmatpush1.msra.mxu0 0.0
    %4487 = vmatprep.subr.mxu0 0.0
    %4488 = vmatpush1.msra.mxu0 0.0
    %4489 = vmatprep.subr.mxu0 0.0
    %4490 = vmatpush1.msra.mxu0 0.0
    %4491 = vmatprep.subr.mxu0 0.0
    %4492 = vmatpush1.msra.mxu0 0.0
    %4493 = vmatprep.subr.mxu0 0.0
    %4494 = vmatpush1.msra.mxu0 0.0
    %4495 = vmatprep.subr.mxu0 0.0
    %4496 = vmatpush1.msra.mxu0 0.0
    %4497 = vmatprep.subr.mxu0 0.0
    %4498 = vmatpush1.msra.mxu0 0.0
    %4499 = vmatprep.subr.mxu0 0.0
    %4500 = vmatpush1.msra.mxu0 0.0
    %4501 = vmatprep.subr.mxu0 0.0
    %4502 = vmatpush1.msra.mxu0 0.0
    %4503 = vmatprep.mubr.f32.mxu0 0.0
    %v4504 = vand.u32 %v3621, 4294901760
    %v4505 = vsub.f32 %v3621, %v4504
    %v4506 = vand.u32 %v4505, 4294901760
    %4507 = vmatmul.mubr.f32.gmra.mrb[0].mxu0 %v4506
    %v4508 = vpop.f32.mrb[0].mxu0
    %v4509 = vadd.f32 %v4429, %v4508
    %v4510 = vpop.f32.mrb[0].mxu0
    %v4511 = vadd.f32 %v4431, %v4510
    %4512 = vdwg.mxu0
    %v4513 = vand.u32 %v3588, 4294901760
    %v4514 = vsub.f32 %v3588, %v4513
    %v4515 = vand.u32 %v4514, 4294901760
    %4516 = vmatprep.subr.mxu0 %v4515
    %v4517 = vand.u32 %v3587, 4294901760
    %v4518 = vsub.f32 %v3587, %v4517
    %v4519 = vand.u32 %v4518, 4294901760
    %4520 = vmatpush1.msra.mxu0 %v4519
    %v4521 = vand.u32 %v3596, 4294901760
    %v4522 = vsub.f32 %v3596, %v4521
    %v4523 = vand.u32 %v4522, 4294901760
    %4524 = vmatprep.subr.mxu0 %v4523
    %v4525 = vand.u32 %v3595, 4294901760
    %v4526 = vsub.f32 %v3595, %v4525
    %v4527 = vand.u32 %v4526, 4294901760
    %4528 = vmatpush1.msra.mxu0 %v4527
    %v4529 = vand.u32 %v3633, 4294901760
    %v4530 = vsub.f32 %v3633, %v4529
    %v4531 = vand.u32 %v4530, 4294901760
    %4532 = vmatprep.subr.mxu0 %v4531
    %v4533 = vand.u32 %v3630, 4294901760
    %v4534 = vsub.f32 %v3630, %v4533
    %v4535 = vand.u32 %v4534, 4294901760
    %4536 = vmatpush1.msra.mxu0 %v4535
    %4537 = vmatprep.subr.mxu0 0.0
    %4538 = vmatpush1.msra.mxu0 0.0
    %4539 = vmatprep.subr.mxu0 0.0
    %4540 = vmatpush1.msra.mxu0 0.0
    %4541 = vmatprep.subr.mxu0 0.0
    %4542 = vmatpush1.msra.mxu0 0.0
    %4543 = vmatprep.subr.mxu0 0.0
    %4544 = vmatpush1.msra.mxu0 0.0
    %4545 = vmatprep.subr.mxu0 0.0
    %4546 = vmatpush1.msra.mxu0 0.0
    %4547 = vmatprep.subr.mxu0 0.0
    %4548 = vmatpush1.msra.mxu0 0.0
    %4549 = vmatprep.subr.mxu0 0.0
    %4550 = vmatpush1.msra.mxu0 0.0
    %4551 = vmatprep.subr.mxu0 0.0
    %4552 = vmatpush1.msra.mxu0 0.0
    %4553 = vmatprep.subr.mxu0 0.0
    %4554 = vmatpush1.msra.mxu0 0.0
    %4555 = vmatprep.subr.mxu0 0.0
    %4556 = vmatpush1.msra.mxu0 0.0
    %4557 = vmatprep.subr.mxu0 0.0
    %4558 = vmatpush1.msra.mxu0 0.0
    %4559 = vmatprep.subr.mxu0 0.0
    %4560 = vmatpush1.msra.mxu0 0.0
    %4561 = vmatprep.subr.mxu0 0.0
    %4562 = vmatpush1.msra.mxu0 0.0
    %4563 = vmatprep.subr.mxu0 0.0
    %4564 = vmatpush1.msra.mxu0 0.0
    %4565 = vmatprep.subr.mxu0 0.0
    %4566 = vmatpush1.msra.mxu0 0.0
    %4567 = vmatprep.subr.mxu0 0.0
    %4568 = vmatpush1.msra.mxu0 0.0
    %4569 = vmatprep.subr.mxu0 0.0
    %4570 = vmatpush1.msra.mxu0 0.0
    %4571 = vmatprep.subr.mxu0 0.0
    %4572 = vmatpush1.msra.mxu0 0.0
    %4573 = vmatprep.subr.mxu0 0.0
    %4574 = vmatpush1.msra.mxu0 0.0
    %4575 = vmatprep.subr.mxu0 0.0
    %4576 = vmatpush1.msra.mxu0 0.0
    %4577 = vmatprep.subr.mxu0 0.0
    %4578 = vmatpush1.msra.mxu0 0.0
    %4579 = vmatprep.subr.mxu0 0.0
    %4580 = vmatpush1.msra.mxu0 0.0
    %4581 = vmatprep.subr.mxu0 0.0
    %4582 = vmatpush1.msra.mxu0 0.0
    %4583 = vmatprep.subr.mxu0 0.0
    %4584 = vmatpush1.msra.mxu0 0.0
    %4585 = vmatprep.subr.mxu0 0.0
    %4586 = vmatpush1.msra.mxu0 0.0
    %4587 = vmatprep.subr.mxu0 0.0
    %4588 = vmatpush1.msra.mxu0 0.0
    %4589 = vmatprep.subr.mxu0 0.0
    %4590 = vmatpush1.msra.mxu0 0.0
    %4591 = vmatprep.subr.mxu0 0.0
    %4592 = vmatpush1.msra.mxu0 0.0
    %4593 = vmatprep.subr.mxu0 0.0
    %4594 = vmatpush1.msra.mxu0 0.0
    %4595 = vmatprep.mubr.f32.mxu0 0.0
    %v4596 = vand.u32 %v3621, 4294901760
    %4597 = vmatmul.mubr.f32.gmra.mrb[0].mxu0 %v4596
    %v4598 = vpop.f32.mrb[0].mxu0
    %v4599 = vadd.f32 %v4509, %v4598
    %v4600 = vpop.f32.mrb[0].mxu0
    %v4601 = vadd.f32 %v4511, %v4600
    %4602 = vdwg.mxu0
    %v4603 = vand.u32 %v3588, 4294901760
    %4604 = vmatprep.subr.mxu0 %v4603
    %v4605 = vand.u32 %v3587, 4294901760
    %4606 = vmatpush1.msra.mxu0 %v4605
    %v4607 = vand.u32 %v3596, 4294901760
    %4608 = vmatprep.subr.mxu0 %v4607
    %v4609 = vand.u32 %v3595, 4294901760
    %4610 = vmatpush1.msra.mxu0 %v4609
    %v4611 = vand.u32 %v3633, 4294901760
    %4612 = vmatprep.subr.mxu0 %v4611
    %v4613 = vand.u32 %v3630, 4294901760
    %4614 = vmatpush1.msra.mxu0 %v4613
    %4615 = vmatprep.subr.mxu0 0.0
    %4616 = vmatpush1.msra.mxu0 0.0
    %4617 = vmatprep.subr.mxu0 0.0
    %4618 = vmatpush1.msra.mxu0 0.0
    %4619 = vmatprep.subr.mxu0 0.0
    %4620 = vmatpush1.msra.mxu0 0.0
    %4621 = vmatprep.subr.mxu0 0.0
    %4622 = vmatpush1.msra.mxu0 0.0
    %4623 = vmatprep.subr.mxu0 0.0
    %4624 = vmatpush1.msra.mxu0 0.0
    %4625 = vmatprep.subr.mxu0 0.0
    %4626 = vmatpush1.msra.mxu0 0.0
    %4627 = vmatprep.subr.mxu0 0.0
    %4628 = vmatpush1.msra.mxu0 0.0
    %4629 = vmatprep.subr.mxu0 0.0
    %4630 = vmatpush1.msra.mxu0 0.0
    %4631 = vmatprep.subr.mxu0 0.0
    %4632 = vmatpush1.msra.mxu0 0.0
    %4633 = vmatprep.subr.mxu0 0.0
    %4634 = vmatpush1.msra.mxu0 0.0
    %4635 = vmatprep.subr.mxu0 0.0
    %4636 = vmatpush1.msra.mxu0 0.0
    %4637 = vmatprep.subr.mxu0 0.0
    %4638 = vmatpush1.msra.mxu0 0.0
    %4639 = vmatprep.subr.mxu0 0.0
    %4640 = vmatpush1.msra.mxu0 0.0
    %4641 = vmatprep.subr.mxu0 0.0
    %4642 = vmatpush1.msra.mxu0 0.0
    %4643 = vmatprep.subr.mxu0 0.0
    %4644 = vmatpush1.msra.mxu0 0.0
    %4645 = vmatprep.subr.mxu0 0.0
    %4646 = vmatpush1.msra.mxu0 0.0
    %4647 = vmatprep.subr.mxu0 0.0
    %4648 = vmatpush1.msra.mxu0 0.0
    %4649 = vmatprep.subr.mxu0 0.0
    %4650 = vmatpush1.msra.mxu0 0.0
    %4651 = vmatprep.subr.mxu0 0.0
    %4652 = vmatpush1.msra.mxu0 0.0
    %4653 = vmatprep.subr.mxu0 0.0
    %4654 = vmatpush1.msra.mxu0 0.0
    %4655 = vmatprep.subr.mxu0 0.0
    %4656 = vmatpush1.msra.mxu0 0.0
    %4657 = vmatprep.subr.mxu0 0.0
    %4658 = vmatpush1.msra.mxu0 0.0
    %4659 = vmatprep.subr.mxu0 0.0
    %4660 = vmatpush1.msra.mxu0 0.0
    %4661 = vmatprep.subr.mxu0 0.0
    %4662 = vmatpush1.msra.mxu0 0.0
    %4663 = vmatprep.subr.mxu0 0.0
    %4664 = vmatpush1.msra.mxu0 0.0
    %4665 = vmatprep.subr.mxu0 0.0
    %4666 = vmatpush1.msra.mxu0 0.0
    %4667 = vmatprep.subr.mxu0 0.0
    %4668 = vmatpush1.msra.mxu0 0.0
    %4669 = vmatprep.subr.mxu0 0.0
    %4670 = vmatpush1.msra.mxu0 0.0
    %4671 = vmatprep.subr.mxu0 0.0
    %4672 = vmatpush1.msra.mxu0 0.0
    %4673 = vmatprep.mubr.f32.mxu0 0.0
    %v4674 = vand.u32 %v3621, 4294901760
    %4675 = vmatmul.mubr.f32.gmra.mrb[0].mxu0 %v4674
    %v4676 = vpop.f32.mrb[0].mxu0
    %v4677 = vadd.f32 %v4599, %v4676
    %v4678 = vpop.f32.mrb[0].mxu0
    %v4679 = vadd.f32 %v4601, %v4678
    %4680 = vdwg.mxu0
    %v4681 = vand.u32 %v3590, 4294901760
    %4682 = vmatprep.subr.mxu0 %v4681
    %v4683 = vand.u32 %v3589, 4294901760
    %4684 = vmatpush1.msra.mxu0 %v4683
    %v4685 = vand.u32 %v3598, 4294901760
    %4686 = vmatprep.subr.mxu0 %v4685
    %v4687 = vand.u32 %v3597, 4294901760
    %4688 = vmatpush1.msra.mxu0 %v4687
    %v4689 = vand.u32 %v3639, 4294901760
    %4690 = vmatprep.subr.mxu0 %v4689
    %v4691 = vand.u32 %v3636, 4294901760
    %4692 = vmatpush1.msra.mxu0 %v4691
    %4693 = vmatprep.subr.mxu0 0.0
    %4694 = vmatpush1.msra.mxu0 0.0
    %4695 = vmatprep.subr.mxu0 0.0
    %4696 = vmatpush1.msra.mxu0 0.0
    %4697 = vmatprep.subr.mxu0 0.0
    %4698 = vmatpush1.msra.mxu0 0.0
    %4699 = vmatprep.subr.mxu0 0.0
    %4700 = vmatpush1.msra.mxu0 0.0
    %4701 = vmatprep.subr.mxu0 0.0
    %4702 = vmatpush1.msra.mxu0 0.0
    %4703 = vmatprep.subr.mxu0 0.0
    %4704 = vmatpush1.msra.mxu0 0.0
    %4705 = vmatprep.subr.mxu0 0.0
    %4706 = vmatpush1.msra.mxu0 0.0
    %4707 = vmatprep.subr.mxu0 0.0
    %4708 = vmatpush1.msra.mxu0 0.0
    %4709 = vmatprep.subr.mxu0 0.0
    %4710 = vmatpush1.msra.mxu0 0.0
    %4711 = vmatprep.subr.mxu0 0.0
    %4712 = vmatpush1.msra.mxu0 0.0
    %4713 = vmatprep.subr.mxu0 0.0
    %4714 = vmatpush1.msra.mxu0 0.0
    %4715 = vmatprep.subr.mxu0 0.0
    %4716 = vmatpush1.msra.mxu0 0.0
    %4717 = vmatprep.subr.mxu0 0.0
    %4718 = vmatpush1.msra.mxu0 0.0
    %4719 = vmatprep.subr.mxu0 0.0
    %4720 = vmatpush1.msra.mxu0 0.0
    %4721 = vmatprep.subr.mxu0 0.0
    %4722 = vmatpush1.msra.mxu0 0.0
    %4723 = vmatprep.subr.mxu0 0.0
    %4724 = vmatpush1.msra.mxu0 0.0
    %4725 = vmatprep.subr.mxu0 0.0
    %4726 = vmatpush1.msra.mxu0 0.0
    %4727 = vmatprep.subr.mxu0 0.0
    %4728 = vmatpush1.msra.mxu0 0.0
    %4729 = vmatprep.subr.mxu0 0.0
    %4730 = vmatpush1.msra.mxu0 0.0
    %4731 = vmatprep.subr.mxu0 0.0
    %4732 = vmatpush1.msra.mxu0 0.0
    %4733 = vmatprep.subr.mxu0 0.0
    %4734 = vmatpush1.msra.mxu0 0.0
    %4735 = vmatprep.subr.mxu0 0.0
    %4736 = vmatpush1.msra.mxu0 0.0
    %4737 = vmatprep.subr.mxu0 0.0
    %4738 = vmatpush1.msra.mxu0 0.0
    %4739 = vmatprep.subr.mxu0 0.0
    %4740 = vmatpush1.msra.mxu0 0.0
    %4741 = vmatprep.subr.mxu0 0.0
    %4742 = vmatpush1.msra.mxu0 0.0
    %4743 = vmatprep.subr.mxu0 0.0
    %4744 = vmatpush1.msra.mxu0 0.0
    %4745 = vmatprep.subr.mxu0 0.0
    %4746 = vmatpush1.msra.mxu0 0.0
    %4747 = vmatprep.subr.mxu0 0.0
    %4748 = vmatpush1.msra.mxu0 0.0
    %4749 = vmatprep.subr.mxu0 0.0
    %4750 = vmatpush1.msra.mxu0 0.0
    %4751 = vmatprep.mubr.f32.mxu0 0.0
    %v4752 = vand.u32 %v3621, 4294901760
    %v4753 = vsub.f32 %v3621, %v4752
    %v4754 = vand.u32 %v4753, 4294901760
    %v4755 = vsub.f32 %v4753, %v4754
    %v4756 = vand.u32 %v4755, 4294901760
    %4757 = vmatmul.mubr.f32.gmra.mrb[0].mxu0 %v4756
    %v4758 = vpop.f32.mrb[0].mxu0
    %v4759 = vadd.f32 %v3619, %v4758
    %v4760 = vpop.f32.mrb[0].mxu0
    %v4761 = vadd.f32 %v3619, %v4760
    %4762 = vdwg.mxu0
    %v4763 = vand.u32 %v3590, 4294901760
    %v4764 = vsub.f32 %v3590, %v4763
    %v4765 = vand.u32 %v4764, 4294901760
    %v4766 = vsub.f32 %v4764, %v4765
    %v4767 = vand.u32 %v4766, 4294901760
    %4768 = vmatprep.subr.mxu0 %v4767
    %v4769 = vand.u32 %v3589, 4294901760
    %v4770 = vsub.f32 %v3589, %v4769
    %v4771 = vand.u32 %v4770, 4294901760
    %v4772 = vsub.f32 %v4770, %v4771
    %v4773 = vand.u32 %v4772, 4294901760
    %4774 = vmatpush1.msra.mxu0 %v4773
    %v4775 = vand.u32 %v3598, 4294901760
    %v4776 = vsub.f32 %v3598, %v4775
    %v4777 = vand.u32 %v4776, 4294901760
    %v4778 = vsub.f32 %v4776, %v4777
    %v4779 = vand.u32 %v4778, 4294901760
    %4780 = vmatprep.subr.mxu0 %v4779
    %v4781 = vand.u32 %v3597, 4294901760
    %v4782 = vsub.f32 %v3597, %v4781
    %v4783 = vand.u32 %v4782, 4294901760
    %v4784 = vsub.f32 %v4782, %v4783
    %v4785 = vand.u32 %v4784, 4294901760
    %4786 = vmatpush1.msra.mxu0 %v4785
    %v4787 = vand.u32 %v3639, 4294901760
    %v4788 = vsub.f32 %v3639, %v4787
    %v4789 = vand.u32 %v4788, 4294901760
    %v4790 = vsub.f32 %v4788, %v4789
    %v4791 = vand.u32 %v4790, 4294901760
    %4792 = vmatprep.subr.mxu0 %v4791
    %v4793 = vand.u32 %v3636, 4294901760
    %v4794 = vsub.f32 %v3636, %v4793
    %v4795 = vand.u32 %v4794, 4294901760
    %v4796 = vsub.f32 %v4794, %v4795
    %v4797 = vand.u32 %v4796, 4294901760
    %4798 = vmatpush1.msra.mxu0 %v4797
    %4799 = vmatprep.subr.mxu0 0.0
    %4800 = vmatpush1.msra.mxu0 0.0
    %4801 = vmatprep.subr.mxu0 0.0
    %4802 = vmatpush1.msra.mxu0 0.0
    %4803 = vmatprep.subr.mxu0 0.0
    %4804 = vmatpush1.msra.mxu0 0.0
    %4805 = vmatprep.subr.mxu0 0.0
    %4806 = vmatpush1.msra.mxu0 0.0
    %4807 = vmatprep.subr.mxu0 0.0
    %4808 = vmatpush1.msra.mxu0 0.0
    %4809 = vmatprep.subr.mxu0 0.0
    %4810 = vmatpush1.msra.mxu0 0.0
    %4811 = vmatprep.subr.mxu0 0.0
    %4812 = vmatpush1.msra.mxu0 0.0
    %4813 = vmatprep.subr.mxu0 0.0
    %4814 = vmatpush1.msra.mxu0 0.0
    %4815 = vmatprep.subr.mxu0 0.0
    %4816 = vmatpush1.msra.mxu0 0.0
    %4817 = vmatprep.subr.mxu0 0.0
    %4818 = vmatpush1.msra.mxu0 0.0
    %4819 = vmatprep.subr.mxu0 0.0
    %4820 = vmatpush1.msra.mxu0 0.0
    %4821 = vmatprep.subr.mxu0 0.0
    %4822 = vmatpush1.msra.mxu0 0.0
    %4823 = vmatprep.subr.mxu0 0.0
    %4824 = vmatpush1.msra.mxu0 0.0
    %4825 = vmatprep.subr.mxu0 0.0
    %4826 = vmatpush1.msra.mxu0 0.0
    %4827 = vmatprep.subr.mxu0 0.0
    %4828 = vmatpush1.msra.mxu0 0.0
    %4829 = vmatprep.subr.mxu0 0.0
    %4830 = vmatpush1.msra.mxu0 0.0
    %4831 = vmatprep.subr.mxu0 0.0
    %4832 = vmatpush1.msra.mxu0 0.0
    %4833 = vmatprep.subr.mxu0 0.0
    %4834 = vmatpush1.msra.mxu0 0.0
    %4835 = vmatprep.subr.mxu0 0.0
    %4836 = vmatpush1.msra.mxu0 0.0
    %4837 = vmatprep.subr.mxu0 0.0
    %4838 = vmatpush1.msra.mxu0 0.0
    %4839 = vmatprep.subr.mxu0 0.0
    %4840 = vmatpush1.msra.mxu0 0.0
    %4841 = vmatprep.subr.mxu0 0.0
    %4842 = vmatpush1.msra.mxu0 0.0
    %4843 = vmatprep.subr.mxu0 0.0
    %4844 = vmatpush1.msra.mxu0 0.0
    %4845 = vmatprep.subr.mxu0 0.0
    %4846 = vmatpush1.msra.mxu0 0.0
    %4847 = vmatprep.subr.mxu0 0.0
    %4848 = vmatpush1.msra.mxu0 0.0
    %4849 = vmatprep.subr.mxu0 0.0
    %4850 = vmatpush1.msra.mxu0 0.0
    %4851 = vmatprep.subr.mxu0 0.0
    %4852 = vmatpush1.msra.mxu0 0.0
    %4853 = vmatprep.subr.mxu0 0.0
    %4854 = vmatpush1.msra.mxu0 0.0
    %4855 = vmatprep.subr.mxu0 0.0
    %4856 = vmatpush1.msra.mxu0 0.0
    %4857 = vmatprep.mubr.f32.mxu0 0.0
    %v4858 = vand.u32 %v3621, 4294901760
    %4859 = vmatmul.mubr.f32.gmra.mrb[0].mxu0 %v4858
    %v4860 = vpop.f32.mrb[0].mxu0
    %v4861 = vadd.f32 %v4759, %v4860
    %v4862 = vpop.f32.mrb[0].mxu0
    %v4863 = vadd.f32 %v4761, %v4862
    %4864 = vdwg.mxu0
    %v4865 = vand.u32 %v3590, 4294901760
    %v4866 = vsub.f32 %v3590, %v4865
    %4867 = vmatprep.subr.mxu0 %v4866
    %v4868 = vand.u32 %v3589, 4294901760
    %v4869 = vsub.f32 %v3589, %v4868
    %4870 = vmatpush1.msra.mxu0 %v4869
    %v4871 = vand.u32 %v3598, 4294901760
    %v4872 = vsub.f32 %v3598, %v4871
    %4873 = vmatprep.subr.mxu0 %v4872
    %v4874 = vand.u32 %v3597, 4294901760
    %v4875 = vsub.f32 %v3597, %v4874
    %4876 = vmatpush1.msra.mxu0 %v4875
    %v4877 = vand.u32 %v3639, 4294901760
    %v4878 = vsub.f32 %v3639, %v4877
    %4879 = vmatprep.subr.mxu0 %v4878
    %v4880 = vand.u32 %v3636, 4294901760
    %v4881 = vsub.f32 %v3636, %v4880
    %4882 = vmatpush1.msra.mxu0 %v4881
    %4883 = vmatprep.subr.mxu0 0.0
    %4884 = vmatpush1.msra.mxu0 0.0
    %4885 = vmatprep.subr.mxu0 0.0
    %4886 = vmatpush1.msra.mxu0 0.0
    %4887 = vmatprep.subr.mxu0 0.0
    %4888 = vmatpush1.msra.mxu0 0.0
    %4889 = vmatprep.subr.mxu0 0.0
    %4890 = vmatpush1.msra.mxu0 0.0
    %4891 = vmatprep.subr.mxu0 0.0
    %4892 = vmatpush1.msra.mxu0 0.0
    %4893 = vmatprep.subr.mxu0 0.0
    %4894 = vmatpush1.msra.mxu0 0.0
    %4895 = vmatprep.subr.mxu0 0.0
    %4896 = vmatpush1.msra.mxu0 0.0
    %4897 = vmatprep.subr.mxu0 0.0
    %4898 = vmatpush1.msra.mxu0 0.0
    %4899 = vmatprep.subr.mxu0 0.0
    %4900 = vmatpush1.msra.mxu0 0.0
    %4901 = vmatprep.subr.mxu0 0.0
    %4902 = vmatpush1.msra.mxu0 0.0
    %4903 = vmatprep.subr.mxu0 0.0
    %4904 = vmatpush1.msra.mxu0 0.0
    %4905 = vmatprep.subr.mxu0 0.0
    %4906 = vmatpush1.msra.mxu0 0.0
    %4907 = vmatprep.subr.mxu0 0.0
    %4908 = vmatpush1.msra.mxu0 0.0
    %4909 = vmatprep.subr.mxu0 0.0
    %4910 = vmatpush1.msra.mxu0 0.0
    %4911 = vmatprep.subr.mxu0 0.0
    %4912 = vmatpush1.msra.mxu0 0.0
    %4913 = vmatprep.subr.mxu0 0.0
    %4914 = vmatpush1.msra.mxu0 0.0
    %4915 = vmatprep.subr.mxu0 0.0
    %4916 = vmatpush1.msra.mxu0 0.0
    %4917 = vmatprep.subr.mxu0 0.0
    %4918 = vmatpush1.msra.mxu0 0.0
    %4919 = vmatprep.subr.mxu0 0.0
    %4920 = vmatpush1.msra.mxu0 0.0
    %4921 = vmatprep.subr.mxu0 0.0
    %4922 = vmatpush1.msra.mxu0 0.0
    %4923 = vmatprep.subr.mxu0 0.0
    %4924 = vmatpush1.msra.mxu0 0.0
    %4925 = vmatprep.subr.mxu0 0.0
    %4926 = vmatpush1.msra.mxu0 0.0
    %4927 = vmatprep.subr.mxu0 0.0
    %4928 = vmatpush1.msra.mxu0 0.0
    %4929 = vmatprep.subr.mxu0 0.0
    %4930 = vmatpush1.msra.mxu0 0.0
    %4931 = vmatprep.subr.mxu0 0.0
    %4932 = vmatpush1.msra.mxu0 0.0
    %4933 = vmatprep.subr.mxu0 0.0
    %4934 = vmatpush1.msra.mxu0 0.0
    %4935 = vmatprep.subr.mxu0 0.0
    %4936 = vmatpush1.msra.mxu0 0.0
    %4937 = vmatprep.subr.mxu0 0.0
    %4938 = vmatpush1.msra.mxu0 0.0
    %4939 = vmatprep.subr.mxu0 0.0
    %4940 = vmatpush1.msra.mxu0 0.0
    %4941 = vmatprep.mubr.f32.mxu0 0.0
    %v4942 = vand.u32 %v3621, 4294901760
    %v4943 = vsub.f32 %v3621, %v4942
    %4944 = vmatmul.mubr.f32.gmra.mrb[0].mxu0 %v4943
    %v4945 = vpop.f32.mrb[0].mxu0
    %v4946 = vadd.f32 %v4861, %v4945
    %v4947 = vpop.f32.mrb[0].mxu0
    %v4948 = vadd.f32 %v4863, %v4947
    %4949 = vdwg.mxu0
    %v4950 = vand.u32 %v3590, 4294901760
    %4951 = vmatprep.subr.mxu0 %v4950
    %v4952 = vand.u32 %v3589, 4294901760
    %4953 = vmatpush1.msra.mxu0 %v4952
    %v4954 = vand.u32 %v3598, 4294901760
    %4955 = vmatprep.subr.mxu0 %v4954
    %v4956 = vand.u32 %v3597, 4294901760
    %4957 = vmatpush1.msra.mxu0 %v4956
    %v4958 = vand.u32 %v3639, 4294901760
    %4959 = vmatprep.subr.mxu0 %v4958
    %v4960 = vand.u32 %v3636, 4294901760
    %4961 = vmatpush1.msra.mxu0 %v4960
    %4962 = vmatprep.subr.mxu0 0.0
    %4963 = vmatpush1.msra.mxu0 0.0
    %4964 = vmatprep.subr.mxu0 0.0
    %4965 = vmatpush1.msra.mxu0 0.0
    %4966 = vmatprep.subr.mxu0 0.0
    %4967 = vmatpush1.msra.mxu0 0.0
    %4968 = vmatprep.subr.mxu0 0.0
    %4969 = vmatpush1.msra.mxu0 0.0
    %4970 = vmatprep.subr.mxu0 0.0
    %4971 = vmatpush1.msra.mxu0 0.0
    %4972 = vmatprep.subr.mxu0 0.0
    %4973 = vmatpush1.msra.mxu0 0.0
    %4974 = vmatprep.subr.mxu0 0.0
    %4975 = vmatpush1.msra.mxu0 0.0
    %4976 = vmatprep.subr.mxu0 0.0
    %4977 = vmatpush1.msra.mxu0 0.0
    %4978 = vmatprep.subr.mxu0 0.0
    %4979 = vmatpush1.msra.mxu0 0.0
    %4980 = vmatprep.subr.mxu0 0.0
    %4981 = vmatpush1.msra.mxu0 0.0
    %4982 = vmatprep.subr.mxu0 0.0
    %4983 = vmatpush1.msra.mxu0 0.0
    %4984 = vmatprep.subr.mxu0 0.0
    %4985 = vmatpush1.msra.mxu0 0.0
    %4986 = vmatprep.subr.mxu0 0.0
    %4987 = vmatpush1.msra.mxu0 0.0
    %4988 = vmatprep.subr.mxu0 0.0
    %4989 = vmatpush1.msra.mxu0 0.0
    %4990 = vmatprep.subr.mxu0 0.0
    %4991 = vmatpush1.msra.mxu0 0.0
    %4992 = vmatprep.subr.mxu0 0.0
    %4993 = vmatpush1.msra.mxu0 0.0
    %4994 = vmatprep.subr.mxu0 0.0
    %4995 = vmatpush1.msra.mxu0 0.0
    %4996 = vmatprep.subr.mxu0 0.0
    %4997 = vmatpush1.msra.mxu0 0.0
    %4998 = vmatprep.subr.mxu0 0.0
    %4999 = vmatpush1.msra.mxu0 0.0
    %5000 = vmatprep.subr.mxu0 0.0
    %5001 = vmatpush1.msra.mxu0 0.0
    %5002 = vmatprep.subr.mxu0 0.0
    %5003 = vmatpush1.msra.mxu0 0.0
    %5004 = vmatprep.subr.mxu0 0.0
    %5005 = vmatpush1.msra.mxu0 0.0
    %5006 = vmatprep.subr.mxu0 0.0
    %5007 = vmatpush1.msra.mxu0 0.0
    %5008 = vmatprep.subr.mxu0 0.0
    %5009 = vmatpush1.msra.mxu0 0.0
    %5010 = vmatprep.subr.mxu0 0.0
    %5011 = vmatpush1.msra.mxu0 0.0
    %5012 = vmatprep.subr.mxu0 0.0
    %5013 = vmatpush1.msra.mxu0 0.0
    %5014 = vmatprep.subr.mxu0 0.0
    %5015 = vmatpush1.msra.mxu0 0.0
    %5016 = vmatprep.subr.mxu0 0.0
    %5017 = vmatpush1.msra.mxu0 0.0
    %5018 = vmatprep.subr.mxu0 0.0
    %5019 = vmatpush1.msra.mxu0 0.0
    %5020 = vmatprep.mubr.f32.mxu0 0.0
    %v5021 = vand.u32 %v3621, 4294901760
    %v5022 = vsub.f32 %v3621, %v5021
    %v5023 = vand.u32 %v5022, 4294901760
    %5024 = vmatmul.mubr.f32.gmra.mrb[0].mxu0 %v5023
    %v5025 = vpop.f32.mrb[0].mxu0
    %v5026 = vadd.f32 %v4946, %v5025
    %v5027 = vpop.f32.mrb[0].mxu0
    %v5028 = vadd.f32 %v4948, %v5027
    %5029 = vdwg.mxu0
    %v5030 = vand.u32 %v3590, 4294901760
    %v5031 = vsub.f32 %v3590, %v5030
    %v5032 = vand.u32 %v5031, 4294901760
    %5033 = vmatprep.subr.mxu0 %v5032
    %v5034 = vand.u32 %v3589, 4294901760
    %v5035 = vsub.f32 %v3589, %v5034
    %v5036 = vand.u32 %v5035, 4294901760
    %5037 = vmatpush1.msra.mxu0 %v5036
    %v5038 = vand.u32 %v3598, 4294901760
    %v5039 = vsub.f32 %v3598, %v5038
    %v5040 = vand.u32 %v5039, 4294901760
    %5041 = vmatprep.subr.mxu0 %v5040
    %v5042 = vand.u32 %v3597, 4294901760
    %v5043 = vsub.f32 %v3597, %v5042
    %v5044 = vand.u32 %v5043, 4294901760
    %5045 = vmatpush1.msra.mxu0 %v5044
    %v5046 = vand.u32 %v3639, 4294901760
    %v5047 = vsub.f32 %v3639, %v5046
    %v5048 = vand.u32 %v5047, 4294901760
    %5049 = vmatprep.subr.mxu0 %v5048
    %v5050 = vand.u32 %v3636, 4294901760
    %v5051 = vsub.f32 %v3636, %v5050
    %v5052 = vand.u32 %v5051, 4294901760
    %5053 = vmatpush1.msra.mxu0 %v5052
    %5054 = vmatprep.subr.mxu0 0.0
    %5055 = vmatpush1.msra.mxu0 0.0
    %5056 = vmatprep.subr.mxu0 0.0
    %5057 = vmatpush1.msra.mxu0 0.0
    %5058 = vmatprep.subr.mxu0 0.0
    %5059 = vmatpush1.msra.mxu0 0.0
    %5060 = vmatprep.subr.mxu0 0.0
    %5061 = vmatpush1.msra.mxu0 0.0
    %5062 = vmatprep.subr.mxu0 0.0
    %5063 = vmatpush1.msra.mxu0 0.0
    %5064 = vmatprep.subr.mxu0 0.0
    %5065 = vmatpush1.msra.mxu0 0.0
    %5066 = vmatprep.subr.mxu0 0.0
    %5067 = vmatpush1.msra.mxu0 0.0
    %5068 = vmatprep.subr.mxu0 0.0
    %5069 = vmatpush1.msra.mxu0 0.0
    %5070 = vmatprep.subr.mxu0 0.0
    %5071 = vmatpush1.msra.mxu0 0.0
    %5072 = vmatprep.subr.mxu0 0.0
    %5073 = vmatpush1.msra.mxu0 0.0
    %5074 = vmatprep.subr.mxu0 0.0
    %5075 = vmatpush1.msra.mxu0 0.0
    %5076 = vmatprep.subr.mxu0 0.0
    %5077 = vmatpush1.msra.mxu0 0.0
    %5078 = vmatprep.subr.mxu0 0.0
    %5079 = vmatpush1.msra.mxu0 0.0
    %5080 = vmatprep.subr.mxu0 0.0
    %5081 = vmatpush1.msra.mxu0 0.0
    %5082 = vmatprep.subr.mxu0 0.0
    %5083 = vmatpush1.msra.mxu0 0.0
    %5084 = vmatprep.subr.mxu0 0.0
    %5085 = vmatpush1.msra.mxu0 0.0
    %5086 = vmatprep.subr.mxu0 0.0
    %5087 = vmatpush1.msra.mxu0 0.0
    %5088 = vmatprep.subr.mxu0 0.0
    %5089 = vmatpush1.msra.mxu0 0.0
    %5090 = vmatprep.subr.mxu0 0.0
    %5091 = vmatpush1.msra.mxu0 0.0
    %5092 = vmatprep.subr.mxu0 0.0
    %5093 = vmatpush1.msra.mxu0 0.0
    %5094 = vmatprep.subr.mxu0 0.0
    %5095 = vmatpush1.msra.mxu0 0.0
    %5096 = vmatprep.subr.mxu0 0.0
    %5097 = vmatpush1.msra.mxu0 0.0
    %5098 = vmatprep.subr.mxu0 0.0
    %5099 = vmatpush1.msra.mxu0 0.0
    %5100 = vmatprep.subr.mxu0 0.0
    %5101 = vmatpush1.msra.mxu0 0.0
    %5102 = vmatprep.subr.mxu0 0.0
    %5103 = vmatpush1.msra.mxu0 0.0
    %5104 = vmatprep.subr.mxu0 0.0
    %5105 = vmatpush1.msra.mxu0 0.0
    %5106 = vmatprep.subr.mxu0 0.0
    %5107 = vmatpush1.msra.mxu0 0.0
    %5108 = vmatprep.subr.mxu0 0.0
    %5109 = vmatpush1.msra.mxu0 0.0
    %5110 = vmatprep.subr.mxu0 0.0
    %5111 = vmatpush1.msra.mxu0 0.0
    %5112 = vmatprep.mubr.f32.mxu0 0.0
    %v5113 = vand.u32 %v3621, 4294901760
    %5114 = vmatmul.mubr.f32.gmra.mrb[0].mxu0 %v5113
    %v5115 = vpop.f32.mrb[0].mxu0
    %v5116 = vadd.f32 %v5026, %v5115
    %v5117 = vpop.f32.mrb[0].mxu0
    %v5118 = vadd.f32 %v5028, %v5117
    %5119 = vdwg.mxu0
    %v5120 = vand.u32 %v3590, 4294901760
    %5121 = vmatprep.subr.mxu0 %v5120
    %v5122 = vand.u32 %v3589, 4294901760
    %5123 = vmatpush1.msra.mxu0 %v5122
    %v5124 = vand.u32 %v3598, 4294901760
    %5125 = vmatprep.subr.mxu0 %v5124
    %v5126 = vand.u32 %v3597, 4294901760
    %5127 = vmatpush1.msra.mxu0 %v5126
    %v5128 = vand.u32 %v3639, 4294901760
    %5129 = vmatprep.subr.mxu0 %v5128
    %v5130 = vand.u32 %v3636, 4294901760
    %5131 = vmatpush1.msra.mxu0 %v5130
    %5132 = vmatprep.subr.mxu0 0.0
    %5133 = vmatpush1.msra.mxu0 0.0
    %5134 = vmatprep.subr.mxu0 0.0
    %5135 = vmatpush1.msra.mxu0 0.0
    %5136 = vmatprep.subr.mxu0 0.0
    %5137 = vmatpush1.msra.mxu0 0.0
    %5138 = vmatprep.subr.mxu0 0.0
    %5139 = vmatpush1.msra.mxu0 0.0
    %5140 = vmatprep.subr.mxu0 0.0
    %5141 = vmatpush1.msra.mxu0 0.0
    %5142 = vmatprep.subr.mxu0 0.0
    %5143 = vmatpush1.msra.mxu0 0.0
    %5144 = vmatprep.subr.mxu0 0.0
    %5145 = vmatpush1.msra.mxu0 0.0
    %5146 = vmatprep.subr.mxu0 0.0
    %5147 = vmatpush1.msra.mxu0 0.0
    %5148 = vmatprep.subr.mxu0 0.0
    %5149 = vmatpush1.msra.mxu0 0.0
    %5150 = vmatprep.subr.mxu0 0.0
    %5151 = vmatpush1.msra.mxu0 0.0
    %5152 = vmatprep.subr.mxu0 0.0
    %5153 = vmatpush1.msra.mxu0 0.0
    %5154 = vmatprep.subr.mxu0 0.0
    %5155 = vmatpush1.msra.mxu0 0.0
    %5156 = vmatprep.subr.mxu0 0.0
    %5157 = vmatpush1.msra.mxu0 0.0
    %5158 = vmatprep.subr.mxu0 0.0
    %5159 = vmatpush1.msra.mxu0 0.0
    %5160 = vmatprep.subr.mxu0 0.0
    %5161 = vmatpush1.msra.mxu0 0.0
    %5162 = vmatprep.subr.mxu0 0.0
    %5163 = vmatpush1.msra.mxu0 0.0
    %5164 = vmatprep.subr.mxu0 0.0
    %5165 = vmatpush1.msra.mxu0 0.0
    %5166 = vmatprep.subr.mxu0 0.0
    %5167 = vmatpush1.msra.mxu0 0.0
    %5168 = vmatprep.subr.mxu0 0.0
    %5169 = vmatpush1.msra.mxu0 0.0
    %5170 = vmatprep.subr.mxu0 0.0
    %5171 = vmatpush1.msra.mxu0 0.0
    %5172 = vmatprep.subr.mxu0 0.0
    %5173 = vmatpush1.msra.mxu0 0.0
    %5174 = vmatprep.subr.mxu0 0.0
    %5175 = vmatpush1.msra.mxu0 0.0
    %5176 = vmatprep.subr.mxu0 0.0
    %5177 = vmatpush1.msra.mxu0 0.0
    %5178 = vmatprep.subr.mxu0 0.0
    %5179 = vmatpush1.msra.mxu0 0.0
    %5180 = vmatprep.subr.mxu0 0.0
    %5181 = vmatpush1.msra.mxu0 0.0
    %5182 = vmatprep.subr.mxu0 0.0
    %5183 = vmatpush1.msra.mxu0 0.0
    %5184 = vmatprep.subr.mxu0 0.0
    %5185 = vmatpush1.msra.mxu0 0.0
    %5186 = vmatprep.subr.mxu0 0.0
    %5187 = vmatpush1.msra.mxu0 0.0
    %5188 = vmatprep.subr.mxu0 0.0
    %5189 = vmatpush1.msra.mxu0 0.0
    %5190 = vmatprep.mubr.f32.mxu0 0.0
    %v5191 = vand.u32 %v3621, 4294901760
    %5192 = vmatmul.mubr.f32.gmra.mrb[0].mxu0 %v5191
    %v5193 = vpop.f32.mrb[0].mxu0
    %v5194 = vadd.f32 %v5116, %v5193
    %v5195 = vpop.f32.mrb[0].mxu0
    %v5196 = vadd.f32 %v5118, %v5195
    %5197 = vdwg.mxu0
    %v5198 = vand.u32 %v3592, 4294901760
    %5199 = vmatprep.subr.mxu0 %v5198
    %v5200 = vand.u32 %v3591, 4294901760
    %5201 = vmatpush1.msra.mxu0 %v5200
    %v5202 = vand.u32 %v3600, 4294901760
    %5203 = vmatprep.subr.mxu0 %v5202
    %v5204 = vand.u32 %v3599, 4294901760
    %5205 = vmatpush1.msra.mxu0 %v5204
    %v5206 = vand.u32 %v3645, 4294901760
    %5207 = vmatprep.subr.mxu0 %v5206
    %v5208 = vand.u32 %v3642, 4294901760
    %5209 = vmatpush1.msra.mxu0 %v5208
    %5210 = vmatprep.subr.mxu0 0.0
    %5211 = vmatpush1.msra.mxu0 0.0
    %5212 = vmatprep.subr.mxu0 0.0
    %5213 = vmatpush1.msra.mxu0 0.0
    %5214 = vmatprep.subr.mxu0 0.0
    %5215 = vmatpush1.msra.mxu0 0.0
    %5216 = vmatprep.subr.mxu0 0.0
    %5217 = vmatpush1.msra.mxu0 0.0
    %5218 = vmatprep.subr.mxu0 0.0
    %5219 = vmatpush1.msra.mxu0 0.0
    %5220 = vmatprep.subr.mxu0 0.0
    %5221 = vmatpush1.msra.mxu0 0.0
    %5222 = vmatprep.subr.mxu0 0.0
    %5223 = vmatpush1.msra.mxu0 0.0
    %5224 = vmatprep.subr.mxu0 0.0
    %5225 = vmatpush1.msra.mxu0 0.0
    %5226 = vmatprep.subr.mxu0 0.0
    %5227 = vmatpush1.msra.mxu0 0.0
    %5228 = vmatprep.subr.mxu0 0.0
    %5229 = vmatpush1.msra.mxu0 0.0
    %5230 = vmatprep.subr.mxu0 0.0
    %5231 = vmatpush1.msra.mxu0 0.0
    %5232 = vmatprep.subr.mxu0 0.0
    %5233 = vmatpush1.msra.mxu0 0.0
    %5234 = vmatprep.subr.mxu0 0.0
    %5235 = vmatpush1.msra.mxu0 0.0
    %5236 = vmatprep.subr.mxu0 0.0
    %5237 = vmatpush1.msra.mxu0 0.0
    %5238 = vmatprep.subr.mxu0 0.0
    %5239 = vmatpush1.msra.mxu0 0.0
    %5240 = vmatprep.subr.mxu0 0.0
    %5241 = vmatpush1.msra.mxu0 0.0
    %5242 = vmatprep.subr.mxu0 0.0
    %5243 = vmatpush1.msra.mxu0 0.0
    %5244 = vmatprep.subr.mxu0 0.0
    %5245 = vmatpush1.msra.mxu0 0.0
    %5246 = vmatprep.subr.mxu0 0.0
    %5247 = vmatpush1.msra.mxu0 0.0
    %5248 = vmatprep.subr.mxu0 0.0
    %5249 = vmatpush1.msra.mxu0 0.0
    %5250 = vmatprep.subr.mxu0 0.0
    %5251 = vmatpush1.msra.mxu0 0.0
    %5252 = vmatprep.subr.mxu0 0.0
    %5253 = vmatpush1.msra.mxu0 0.0
    %5254 = vmatprep.subr.mxu0 0.0
    %5255 = vmatpush1.msra.mxu0 0.0
    %5256 = vmatprep.subr.mxu0 0.0
    %5257 = vmatpush1.msra.mxu0 0.0
    %5258 = vmatprep.subr.mxu0 0.0
    %5259 = vmatpush1.msra.mxu0 0.0
    %5260 = vmatprep.subr.mxu0 0.0
    %5261 = vmatpush1.msra.mxu0 0.0
    %5262 = vmatprep.subr.mxu0 0.0
    %5263 = vmatpush1.msra.mxu0 0.0
    %5264 = vmatprep.subr.mxu0 0.0
    %5265 = vmatpush1.msra.mxu0 0.0
    %5266 = vmatprep.subr.mxu0 0.0
    %5267 = vmatpush1.msra.mxu0 0.0
    %5268 = vmatprep.mubr.f32.mxu0 0.0
    %v5269 = vand.u32 %v3621, 4294901760
    %v5270 = vsub.f32 %v3621, %v5269
    %v5271 = vand.u32 %v5270, 4294901760
    %v5272 = vsub.f32 %v5270, %v5271
    %v5273 = vand.u32 %v5272, 4294901760
    %5274 = vmatmul.mubr.f32.gmra.mrb[0].mxu0 %v5273
    %v5275 = vpop.f32.mrb[0].mxu0
    %v5276 = vadd.f32 %v3619, %v5275
    %v5277 = vpop.f32.mrb[0].mxu0
    %v5278 = vadd.f32 %v3619, %v5277
    %5279 = vdwg.mxu0
    %v5280 = vand.u32 %v3592, 4294901760
    %v5281 = vsub.f32 %v3592, %v5280
    %v5282 = vand.u32 %v5281, 4294901760
    %v5283 = vsub.f32 %v5281, %v5282
    %v5284 = vand.u32 %v5283, 4294901760
    %5285 = vmatprep.subr.mxu0 %v5284
    %v5286 = vand.u32 %v3591, 4294901760
    %v5287 = vsub.f32 %v3591, %v5286
    %v5288 = vand.u32 %v5287, 4294901760
    %v5289 = vsub.f32 %v5287, %v5288
    %v5290 = vand.u32 %v5289, 4294901760
    %5291 = vmatpush1.msra.mxu0 %v5290
    %v5292 = vand.u32 %v3600, 4294901760
    %v5293 = vsub.f32 %v3600, %v5292
    %v5294 = vand.u32 %v5293, 4294901760
    %v5295 = vsub.f32 %v5293, %v5294
    %v5296 = vand.u32 %v5295, 4294901760
    %5297 = vmatprep.subr.mxu0 %v5296
    %v5298 = vand.u32 %v3599, 4294901760
    %v5299 = vsub.f32 %v3599, %v5298
    %v5300 = vand.u32 %v5299, 4294901760
    %v5301 = vsub.f32 %v5299, %v5300
    %v5302 = vand.u32 %v5301, 4294901760
    %5303 = vmatpush1.msra.mxu0 %v5302
    %v5304 = vand.u32 %v3645, 4294901760
    %v5305 = vsub.f32 %v3645, %v5304
    %v5306 = vand.u32 %v5305, 4294901760
    %v5307 = vsub.f32 %v5305, %v5306
    %v5308 = vand.u32 %v5307, 4294901760
    %5309 = vmatprep.subr.mxu0 %v5308
    %v5310 = vand.u32 %v3642, 4294901760
    %v5311 = vsub.f32 %v3642, %v5310
    %v5312 = vand.u32 %v5311, 4294901760
    %v5313 = vsub.f32 %v5311, %v5312
    %v5314 = vand.u32 %v5313, 4294901760
    %5315 = vmatpush1.msra.mxu0 %v5314
    %5316 = vmatprep.subr.mxu0 0.0
    %5317 = vmatpush1.msra.mxu0 0.0
    %5318 = vmatprep.subr.mxu0 0.0
    %5319 = vmatpush1.msra.mxu0 0.0
    %5320 = vmatprep.subr.mxu0 0.0
    %5321 = vmatpush1.msra.mxu0 0.0
    %5322 = vmatprep.subr.mxu0 0.0
    %5323 = vmatpush1.msra.mxu0 0.0
    %5324 = vmatprep.subr.mxu0 0.0
    %5325 = vmatpush1.msra.mxu0 0.0
    %5326 = vmatprep.subr.mxu0 0.0
    %5327 = vmatpush1.msra.mxu0 0.0
    %5328 = vmatprep.subr.mxu0 0.0
    %5329 = vmatpush1.msra.mxu0 0.0
    %5330 = vmatprep.subr.mxu0 0.0
    %5331 = vmatpush1.msra.mxu0 0.0
    %5332 = vmatprep.subr.mxu0 0.0
    %5333 = vmatpush1.msra.mxu0 0.0
    %5334 = vmatprep.subr.mxu0 0.0
    %5335 = vmatpush1.msra.mxu0 0.0
    %5336 = vmatprep.subr.mxu0 0.0
    %5337 = vmatpush1.msra.mxu0 0.0
    %5338 = vmatprep.subr.mxu0 0.0
    %5339 = vmatpush1.msra.mxu0 0.0
    %5340 = vmatprep.subr.mxu0 0.0
    %5341 = vmatpush1.msra.mxu0 0.0
    %5342 = vmatprep.subr.mxu0 0.0
    %5343 = vmatpush1.msra.mxu0 0.0
    %5344 = vmatprep.subr.mxu0 0.0
    %5345 = vmatpush1.msra.mxu0 0.0
    %5346 = vmatprep.subr.mxu0 0.0
    %5347 = vmatpush1.msra.mxu0 0.0
    %5348 = vmatprep.subr.mxu0 0.0
    %5349 = vmatpush1.msra.mxu0 0.0
    %5350 = vmatprep.subr.mxu0 0.0
    %5351 = vmatpush1.msra.mxu0 0.0
    %5352 = vmatprep.subr.mxu0 0.0
    %5353 = vmatpush1.msra.mxu0 0.0
    %5354 = vmatprep.subr.mxu0 0.0
    %5355 = vmatpush1.msra.mxu0 0.0
    %5356 = vmatprep.subr.mxu0 0.0
    %5357 = vmatpush1.msra.mxu0 0.0
    %5358 = vmatprep.subr.mxu0 0.0
    %5359 = vmatpush1.msra.mxu0 0.0
    %5360 = vmatprep.subr.mxu0 0.0
    %5361 = vmatpush1.msra.mxu0 0.0
    %5362 = vmatprep.subr.mxu0 0.0
    %5363 = vmatpush1.msra.mxu0 0.0
    %5364 = vmatprep.subr.mxu0 0.0
    %5365 = vmatpush1.msra.mxu0 0.0
    %5366 = vmatprep.subr.mxu0 0.0
    %5367 = vmatpush1.msra.mxu0 0.0
    %5368 = vmatprep.subr.mxu0 0.0
    %5369 = vmatpush1.msra.mxu0 0.0
    %5370 = vmatprep.subr.mxu0 0.0
    %5371 = vmatpush1.msra.mxu0 0.0
    %5372 = vmatprep.subr.mxu0 0.0
    %5373 = vmatpush1.msra.mxu0 0.0
    %5374 = vmatprep.mubr.f32.mxu0 0.0
    %v5375 = vand.u32 %v3621, 4294901760
    %5376 = vmatmul.mubr.f32.gmra.mrb[0].mxu0 %v5375
    %v5377 = vpop.f32.mrb[0].mxu0
    %v5378 = vadd.f32 %v5276, %v5377
    %v5379 = vpop.f32.mrb[0].mxu0
    %v5380 = vadd.f32 %v5278, %v5379
    %5381 = vdwg.mxu0
    %v5382 = vand.u32 %v3592, 4294901760
    %v5383 = vsub.f32 %v3592, %v5382
    %5384 = vmatprep.subr.mxu0 %v5383
    %v5385 = vand.u32 %v3591, 4294901760
    %v5386 = vsub.f32 %v3591, %v5385
    %5387 = vmatpush1.msra.mxu0 %v5386
    %v5388 = vand.u32 %v3600, 4294901760
    %v5389 = vsub.f32 %v3600, %v5388
    %5390 = vmatprep.subr.mxu0 %v5389
    %v5391 = vand.u32 %v3599, 4294901760
    %v5392 = vsub.f32 %v3599, %v5391
    %5393 = vmatpush1.msra.mxu0 %v5392
    %v5394 = vand.u32 %v3645, 4294901760
    %v5395 = vsub.f32 %v3645, %v5394
    %5396 = vmatprep.subr.mxu0 %v5395
    %v5397 = vand.u32 %v3642, 4294901760
    %v5398 = vsub.f32 %v3642, %v5397
    %5399 = vmatpush1.msra.mxu0 %v5398
    %5400 = vmatprep.subr.mxu0 0.0
    %5401 = vmatpush1.msra.mxu0 0.0
    %5402 = vmatprep.subr.mxu0 0.0
    %5403 = vmatpush1.msra.mxu0 0.0
    %5404 = vmatprep.subr.mxu0 0.0
    %5405 = vmatpush1.msra.mxu0 0.0
    %5406 = vmatprep.subr.mxu0 0.0
    %5407 = vmatpush1.msra.mxu0 0.0
    %5408 = vmatprep.subr.mxu0 0.0
    %5409 = vmatpush1.msra.mxu0 0.0
    %5410 = vmatprep.subr.mxu0 0.0
    %5411 = vmatpush1.msra.mxu0 0.0
    %5412 = vmatprep.subr.mxu0 0.0
    %5413 = vmatpush1.msra.mxu0 0.0
    %5414 = vmatprep.subr.mxu0 0.0
    %5415 = vmatpush1.msra.mxu0 0.0
    %5416 = vmatprep.subr.mxu0 0.0
    %5417 = vmatpush1.msra.mxu0 0.0
    %5418 = vmatprep.subr.mxu0 0.0
    %5419 = vmatpush1.msra.mxu0 0.0
    %5420 = vmatprep.subr.mxu0 0.0
    %5421 = vmatpush1.msra.mxu0 0.0
    %5422 = vmatprep.subr.mxu0 0.0
    %5423 = vmatpush1.msra.mxu0 0.0
    %5424 = vmatprep.subr.mxu0 0.0
    %5425 = vmatpush1.msra.mxu0 0.0
    %5426 = vmatprep.subr.mxu0 0.0
    %5427 = vmatpush1.msra.mxu0 0.0
    %5428 = vmatprep.subr.mxu0 0.0
    %5429 = vmatpush1.msra.mxu0 0.0
    %5430 = vmatprep.subr.mxu0 0.0
    %5431 = vmatpush1.msra.mxu0 0.0
    %5432 = vmatprep.subr.mxu0 0.0
    %5433 = vmatpush1.msra.mxu0 0.0
    %5434 = vmatprep.subr.mxu0 0.0
    %5435 = vmatpush1.msra.mxu0 0.0
    %5436 = vmatprep.subr.mxu0 0.0
    %5437 = vmatpush1.msra.mxu0 0.0
    %5438 = vmatprep.subr.mxu0 0.0
    %5439 = vmatpush1.msra.mxu0 0.0
    %5440 = vmatprep.subr.mxu0 0.0
    %5441 = vmatpush1.msra.mxu0 0.0
    %5442 = vmatprep.subr.mxu0 0.0
    %5443 = vmatpush1.msra.mxu0 0.0
    %5444 = vmatprep.subr.mxu0 0.0
    %5445 = vmatpush1.msra.mxu0 0.0
    %5446 = vmatprep.subr.mxu0 0.0
    %5447 = vmatpush1.msra.mxu0 0.0
    %5448 = vmatprep.subr.mxu0 0.0
    %5449 = vmatpush1.msra.mxu0 0.0
    %5450 = vmatprep.subr.mxu0 0.0
    %5451 = vmatpush1.msra.mxu0 0.0
    %5452 = vmatprep.subr.mxu0 0.0
    %5453 = vmatpush1.msra.mxu0 0.0
    %5454 = vmatprep.subr.mxu0 0.0
    %5455 = vmatpush1.msra.mxu0 0.0
    %5456 = vmatprep.subr.mxu0 0.0
    %5457 = vmatpush1.msra.mxu0 0.0
    %5458 = vmatprep.mubr.f32.mxu0 0.0
    %v5459 = vand.u32 %v3621, 4294901760
    %v5460 = vsub.f32 %v3621, %v5459
    %5461 = vmatmul.mubr.f32.gmra.mrb[0].mxu0 %v5460
    %v5462 = vpop.f32.mrb[0].mxu0
    %v5463 = vadd.f32 %v5378, %v5462
    %v5464 = vpop.f32.mrb[0].mxu0
    %v5465 = vadd.f32 %v5380, %v5464
    %5466 = vdwg.mxu0
    %v5467 = vand.u32 %v3592, 4294901760
    %5468 = vmatprep.subr.mxu0 %v5467
    %v5469 = vand.u32 %v3591, 4294901760
    %5470 = vmatpush1.msra.mxu0 %v5469
    %v5471 = vand.u32 %v3600, 4294901760
    %5472 = vmatprep.subr.mxu0 %v5471
    %v5473 = vand.u32 %v3599, 4294901760
    %5474 = vmatpush1.msra.mxu0 %v5473
    %v5475 = vand.u32 %v3645, 4294901760
    %5476 = vmatprep.subr.mxu0 %v5475
    %v5477 = vand.u32 %v3642, 4294901760
    %5478 = vmatpush1.msra.mxu0 %v5477
    %5479 = vmatprep.subr.mxu0 0.0
    %5480 = vmatpush1.msra.mxu0 0.0
    %5481 = vmatprep.subr.mxu0 0.0
    %5482 = vmatpush1.msra.mxu0 0.0
    %5483 = vmatprep.subr.mxu0 0.0
    %5484 = vmatpush1.msra.mxu0 0.0
    %5485 = vmatprep.subr.mxu0 0.0
    %5486 = vmatpush1.msra.mxu0 0.0
    %5487 = vmatprep.subr.mxu0 0.0
    %5488 = vmatpush1.msra.mxu0 0.0
    %5489 = vmatprep.subr.mxu0 0.0
    %5490 = vmatpush1.msra.mxu0 0.0
    %5491 = vmatprep.subr.mxu0 0.0
    %5492 = vmatpush1.msra.mxu0 0.0
    %5493 = vmatprep.subr.mxu0 0.0
    %5494 = vmatpush1.msra.mxu0 0.0
    %5495 = vmatprep.subr.mxu0 0.0
    %5496 = vmatpush1.msra.mxu0 0.0
    %5497 = vmatprep.subr.mxu0 0.0
    %5498 = vmatpush1.msra.mxu0 0.0
    %5499 = vmatprep.subr.mxu0 0.0
    %5500 = vmatpush1.msra.mxu0 0.0
    %5501 = vmatprep.subr.mxu0 0.0
    %5502 = vmatpush1.msra.mxu0 0.0
    %5503 = vmatprep.subr.mxu0 0.0
    %5504 = vmatpush1.msra.mxu0 0.0
    %5505 = vmatprep.subr.mxu0 0.0
    %5506 = vmatpush1.msra.mxu0 0.0
    %5507 = vmatprep.subr.mxu0 0.0
    %5508 = vmatpush1.msra.mxu0 0.0
    %5509 = vmatprep.subr.mxu0 0.0
    %5510 = vmatpush1.msra.mxu0 0.0
    %5511 = vmatprep.subr.mxu0 0.0
    %5512 = vmatpush1.msra.mxu0 0.0
    %5513 = vmatprep.subr.mxu0 0.0
    %5514 = vmatpush1.msra.mxu0 0.0
    %5515 = vmatprep.subr.mxu0 0.0
    %5516 = vmatpush1.msra.mxu0 0.0
    %5517 = vmatprep.subr.mxu0 0.0
    %5518 = vmatpush1.msra.mxu0 0.0
    %5519 = vmatprep.subr.mxu0 0.0
    %5520 = vmatpush1.msra.mxu0 0.0
    %5521 = vmatprep.subr.mxu0 0.0
    %5522 = vmatpush1.msra.mxu0 0.0
    %5523 = vmatprep.subr.mxu0 0.0
    %5524 = vmatpush1.msra.mxu0 0.0
    %5525 = vmatprep.subr.mxu0 0.0
    %5526 = vmatpush1.msra.mxu0 0.0
    %5527 = vmatprep.subr.mxu0 0.0
    %5528 = vmatpush1.msra.mxu0 0.0
    %5529 = vmatprep.subr.mxu0 0.0
    %5530 = vmatpush1.msra.mxu0 0.0
    %5531 = vmatprep.subr.mxu0 0.0
    %5532 = vmatpush1.msra.mxu0 0.0
    %5533 = vmatprep.subr.mxu0 0.0
    %5534 = vmatpush1.msra.mxu0 0.0
    %5535 = vmatprep.subr.mxu0 0.0
    %5536 = vmatpush1.msra.mxu0 0.0
    %5537 = vmatprep.mubr.f32.mxu0 0.0
    %v5538 = vand.u32 %v3621, 4294901760
    %v5539 = vsub.f32 %v3621, %v5538
    %v5540 = vand.u32 %v5539, 4294901760
    %5541 = vmatmul.mubr.f32.gmra.mrb[0].mxu0 %v5540
    %v5542 = vpop.f32.mrb[0].mxu0
    %v5543 = vadd.f32 %v5463, %v5542
    %v5544 = vpop.f32.mrb[0].mxu0
    %v5545 = vadd.f32 %v5465, %v5544
    %5546 = vdwg.mxu0
    %v5547 = vand.u32 %v3592, 4294901760
    %v5548 = vsub.f32 %v3592, %v5547
    %v5549 = vand.u32 %v5548, 4294901760
    %5550 = vmatprep.subr.mxu0 %v5549
    %v5551 = vand.u32 %v3591, 4294901760
    %v5552 = vsub.f32 %v3591, %v5551
    %v5553 = vand.u32 %v5552, 4294901760
    %5554 = vmatpush1.msra.mxu0 %v5553
    %v5555 = vand.u32 %v3600, 4294901760
    %v5556 = vsub.f32 %v3600, %v5555
    %v5557 = vand.u32 %v5556, 4294901760
    %5558 = vmatprep.subr.mxu0 %v5557
    %v5559 = vand.u32 %v3599, 4294901760
    %v5560 = vsub.f32 %v3599, %v5559
    %v5561 = vand.u32 %v5560, 4294901760
    %5562 = vmatpush1.msra.mxu0 %v5561
    %v5563 = vand.u32 %v3645, 4294901760
    %v5564 = vsub.f32 %v3645, %v5563
    %v5565 = vand.u32 %v5564, 4294901760
    %5566 = vmatprep.subr.mxu0 %v5565
    %v5567 = vand.u32 %v3642, 4294901760
    %v5568 = vsub.f32 %v3642, %v5567
    %v5569 = vand.u32 %v5568, 4294901760
    %5570 = vmatpush1.msra.mxu0 %v5569
    %5571 = vmatprep.subr.mxu0 0.0
    %5572 = vmatpush1.msra.mxu0 0.0
    %5573 = vmatprep.subr.mxu0 0.0
    %5574 = vmatpush1.msra.mxu0 0.0
    %5575 = vmatprep.subr.mxu0 0.0
    %5576 = vmatpush1.msra.mxu0 0.0
    %5577 = vmatprep.subr.mxu0 0.0
    %5578 = vmatpush1.msra.mxu0 0.0
    %5579 = vmatprep.subr.mxu0 0.0
    %5580 = vmatpush1.msra.mxu0 0.0
    %5581 = vmatprep.subr.mxu0 0.0
    %5582 = vmatpush1.msra.mxu0 0.0
    %5583 = vmatprep.subr.mxu0 0.0
    %5584 = vmatpush1.msra.mxu0 0.0
    %5585 = vmatprep.subr.mxu0 0.0
    %5586 = vmatpush1.msra.mxu0 0.0
    %5587 = vmatprep.subr.mxu0 0.0
    %5588 = vmatpush1.msra.mxu0 0.0
    %5589 = vmatprep.subr.mxu0 0.0
    %5590 = vmatpush1.msra.mxu0 0.0
    %5591 = vmatprep.subr.mxu0 0.0
    %5592 = vmatpush1.msra.mxu0 0.0
    %5593 = vmatprep.subr.mxu0 0.0
    %5594 = vmatpush1.msra.mxu0 0.0
    %5595 = vmatprep.subr.mxu0 0.0
    %5596 = vmatpush1.msra.mxu0 0.0
    %5597 = vmatprep.subr.mxu0 0.0
    %5598 = vmatpush1.msra.mxu0 0.0
    %5599 = vmatprep.subr.mxu0 0.0
    %5600 = vmatpush1.msra.mxu0 0.0
    %5601 = vmatprep.subr.mxu0 0.0
    %5602 = vmatpush1.msra.mxu0 0.0
    %5603 = vmatprep.subr.mxu0 0.0
    %5604 = vmatpush1.msra.mxu0 0.0
    %5605 = vmatprep.subr.mxu0 0.0
    %5606 = vmatpush1.msra.mxu0 0.0
    %5607 = vmatprep.subr.mxu0 0.0
    %5608 = vmatpush1.msra.mxu0 0.0
    %5609 = vmatprep.subr.mxu0 0.0
    %5610 = vmatpush1.msra.mxu0 0.0
    %5611 = vmatprep.subr.mxu0 0.0
    %5612 = vmatpush1.msra.mxu0 0.0
    %5613 = vmatprep.subr.mxu0 0.0
    %5614 = vmatpush1.msra.mxu0 0.0
    %5615 = vmatprep.subr.mxu0 0.0
    %5616 = vmatpush1.msra.mxu0 0.0
    %5617 = vmatprep.subr.mxu0 0.0
    %5618 = vmatpush1.msra.mxu0 0.0
    %5619 = vmatprep.subr.mxu0 0.0
    %5620 = vmatpush1.msra.mxu0 0.0
    %5621 = vmatprep.subr.mxu0 0.0
    %5622 = vmatpush1.msra.mxu0 0.0
    %5623 = vmatprep.subr.mxu0 0.0
    %5624 = vmatpush1.msra.mxu0 0.0
    %5625 = vmatprep.subr.mxu0 0.0
    %5626 = vmatpush1.msra.mxu0 0.0
    %5627 = vmatprep.subr.mxu0 0.0
    %5628 = vmatpush1.msra.mxu0 0.0
    %5629 = vmatprep.mubr.f32.mxu0 0.0
    %v5630 = vand.u32 %v3621, 4294901760
    %5631 = vmatmul.mubr.f32.gmra.mrb[0].mxu0 %v5630
    %v5632 = vpop.f32.mrb[0].mxu0
    %v5633 = vadd.f32 %v5543, %v5632
    %v5634 = vpop.f32.mrb[0].mxu0
    %v5635 = vadd.f32 %v5545, %v5634
    %5636 = vdwg.mxu0
    %v5637 = vand.u32 %v3592, 4294901760
    %5638 = vmatprep.subr.mxu0 %v5637
    %v5639 = vand.u32 %v3591, 4294901760
    %5640 = vmatpush1.msra.mxu0 %v5639
    %v5641 = vand.u32 %v3600, 4294901760
    %5642 = vmatprep.subr.mxu0 %v5641
    %v5643 = vand.u32 %v3599, 4294901760
    %5644 = vmatpush1.msra.mxu0 %v5643
    %v5645 = vand.u32 %v3645, 4294901760
    %5646 = vmatprep.subr.mxu0 %v5645
    %v5647 = vand.u32 %v3642, 4294901760
    %5648 = vmatpush1.msra.mxu0 %v5647
    %5649 = vmatprep.subr.mxu0 0.0
    %5650 = vmatpush1.msra.mxu0 0.0
    %5651 = vmatprep.subr.mxu0 0.0
    %5652 = vmatpush1.msra.mxu0 0.0
    %5653 = vmatprep.subr.mxu0 0.0
    %5654 = vmatpush1.msra.mxu0 0.0
    %5655 = vmatprep.subr.mxu0 0.0
    %5656 = vmatpush1.msra.mxu0 0.0
    %5657 = vmatprep.subr.mxu0 0.0
    %5658 = vmatpush1.msra.mxu0 0.0
    %5659 = vmatprep.subr.mxu0 0.0
    %5660 = vmatpush1.msra.mxu0 0.0
    %5661 = vmatprep.subr.mxu0 0.0
    %5662 = vmatpush1.msra.mxu0 0.0
    %5663 = vmatprep.subr.mxu0 0.0
    %5664 = vmatpush1.msra.mxu0 0.0
    %5665 = vmatprep.subr.mxu0 0.0
    %5666 = vmatpush1.msra.mxu0 0.0
    %5667 = vmatprep.subr.mxu0 0.0
    %5668 = vmatpush1.msra.mxu0 0.0
    %5669 = vmatprep.subr.mxu0 0.0
    %5670 = vmatpush1.msra.mxu0 0.0
    %5671 = vmatprep.subr.mxu0 0.0
    %5672 = vmatpush1.msra.mxu0 0.0
    %5673 = vmatprep.subr.mxu0 0.0
    %5674 = vmatpush1.msra.mxu0 0.0
    %5675 = vmatprep.subr.mxu0 0.0
    %5676 = vmatpush1.msra.mxu0 0.0
    %5677 = vmatprep.subr.mxu0 0.0
    %5678 = vmatpush1.msra.mxu0 0.0
    %5679 = vmatprep.subr.mxu0 0.0
    %5680 = vmatpush1.msra.mxu0 0.0
    %5681 = vmatprep.subr.mxu0 0.0
    %5682 = vmatpush1.msra.mxu0 0.0
    %5683 = vmatprep.subr.mxu0 0.0
    %5684 = vmatpush1.msra.mxu0 0.0
    %5685 = vmatprep.subr.mxu0 0.0
    %5686 = vmatpush1.msra.mxu0 0.0
    %5687 = vmatprep.subr.mxu0 0.0
    %5688 = vmatpush1.msra.mxu0 0.0
    %5689 = vmatprep.subr.mxu0 0.0
    %5690 = vmatpush1.msra.mxu0 0.0
    %5691 = vmatprep.subr.mxu0 0.0
    %5692 = vmatpush1.msra.mxu0 0.0
    %5693 = vmatprep.subr.mxu0 0.0
    %5694 = vmatpush1.msra.mxu0 0.0
    %5695 = vmatprep.subr.mxu0 0.0
    %5696 = vmatpush1.msra.mxu0 0.0
    %5697 = vmatprep.subr.mxu0 0.0
    %5698 = vmatpush1.msra.mxu0 0.0
    %5699 = vmatprep.subr.mxu0 0.0
    %5700 = vmatpush1.msra.mxu0 0.0
    %5701 = vmatprep.subr.mxu0 0.0
    %5702 = vmatpush1.msra.mxu0 0.0
    %5703 = vmatprep.subr.mxu0 0.0
    %5704 = vmatpush1.msra.mxu0 0.0
    %5705 = vmatprep.subr.mxu0 0.0
    %5706 = vmatpush1.msra.mxu0 0.0
    %5707 = vmatprep.mubr.f32.mxu0 0.0
    %v5708 = vand.u32 %v3621, 4294901760
    %5709 = vmatmul.mubr.f32.gmra.mrb[0].mxu0 %v5708
    %v5710 = vpop.f32.mrb[0].mxu0
    %v5711 = vadd.f32 %v5633, %v5710
    %v5712 = vpop.f32.mrb[0].mxu0
    %v5713 = vadd.f32 %v5635, %v5712
    %5714 = vdwg.mxu0
    %v5723 = vcombine.low %v4160, %v4162
    %v5724 = vcombine.low %v4677, %v4679
    %v5725 = vcombine.low %v5194, %v5196
    %v5726 = vcombine.low %v5711, %v5713
    %v5728 = vunpack.c.l.s4 1966171168
    %v5729 = vunpack.c.0.s8 %v5728
    %v5730 = vlaneseq
    %v5731 = vshrl.u32 %v5730, 7
    %v5732 = vsub.s32 %v5729, %v5731
    %v5733 = vrot.slane %v5723, %v5732
    %v5735 = vunpack.c.l.s4 1966171168
    %v5736 = vunpack.c.0.s8 %v5735
    %v5737 = vlaneseq
    %v5738 = vshrl.u32 %v5737, 7
    %v5739 = vsub.s32 %v5736, %v5738
    %v5740 = vrot.slane %v5724, %v5739
    %v5742 = vunpack.c.l.s4 1966171168
    %v5743 = vunpack.c.0.s8 %v5742
    %v5744 = vlaneseq
    %v5745 = vshrl.u32 %v5744, 7
    %v5746 = vsub.s32 %v5743, %v5745
    %v5747 = vrot.slane %v5725, %v5746
    %v5749 = vunpack.c.l.s4 1966171168
    %v5750 = vunpack.c.0.s8 %v5749
    %v5751 = vlaneseq
    %v5752 = vshrl.u32 %v5751, 7
    %v5753 = vsub.s32 %v5750, %v5752
    %v5754 = vrot.slane %v5726, %v5753
    %v5755 = vcombine.low %v5733, %v5740
    %v5756 = vcombine.low %v5747, %v5754
    %v5758 = vunpack.c.l.s4 1966171168
    %v5759 = vunpack.c.0.s8 %v5758
    %v5760 = vlaneseq
    %v5761 = vshrl.u32 %v5760, 7
    %v5762 = vsub.s32 %v5759, %v5761
    %v5763 = vrot.slane %v5755, %v5762
    %v5765 = vunpack.c.l.s4 1966171168
    %v5766 = vunpack.c.0.s8 %v5765
    %v5767 = vlaneseq
    %v5768 = vshrl.u32 %v5767, 7
    %v5769 = vsub.s32 %v5766, %v5768
    %v5770 = vrot.slane %v5756, %v5769
    %v5771 = vcombine.low %v5763, %v5770
    %5773 = vst [vmem:[#allocation3] sm:$0xff] %v5771
    // Predicated region
    $region46: #{tpu_custom_call.1} parent=1 // pred_check
      _
    $region47: #{tpu_custom_call.1} parent=1 // pred_check_branch
      %5775 = sbr.rel (0) target = $region49
    $region48: #{tpu_custom_call.1} parent=1 // pred_region
      %s5777 = ssub.s32 128, 128
      %5778 = vsyncadd [#allocation4], %s5777
      %s5780 = sshll.u32 [#allocation3], 4
      %s5781 = int_to_ptr.vmem [resolvable:$true] %s5780
      %5783 = dma.vmem_to_hbm [thread:$0]  %s5781, 128, %s11, [#allocation4]
    $region49: #{tpu_custom_call.1} parent=1 // pred_fallthru
      _
    // Predicated region
    $region50: #{tpu_custom_call.1} parent=1 // pred_check
      _
    $region51: #{tpu_custom_call.1} parent=1 // pred_check_branch
      %5785 = sbr.rel (0) target = $region53
    $region52: #{tpu_custom_call.1} parent=1 // pred_region
      %5786 = dma.done [#allocation4], 128
    $region53: #{tpu_custom_call.1} parent=1 // pred_fallthru
      _
    %5787 = vsyncpa [#allocation4], 1

</llo_original>
